<compile_context>
chip_gen: v7x
topology: tpu7x:2x2x1
jax: 0.10.0
libtpu: 0.0.40
codegen_flags: <defaults>
</compile_context>

<pallas_src>
import functools

import numpy as np
import jax
import jax.numpy as jnp
from jax import lax
from jax.experimental import pallas as pl
from jax.experimental.pallas import tpu as pltpu

SCALE = float(np.sqrt(0.5))
BN_EPS = 1e-5
LANE = 128


# ----------------------------------------------------------------- fused kernel

def tabnet_kernel(act_ref, p_ref, out_ref, *, offs, B, F, H,
                  n_shared, n_ind, n_steps):
    """Whole TabNet forward in one invocation; params carved from one VMEM slab."""

    def vrow(name, width=LANE):                      # one bias / BN vector row
        o = offs[name]
        return p_ref[o:o + 1, :width]

    def wmat(name, rows):                            # one weight block (rows, 128)
        o = offs[name]
        return p_ref[o:o + rows, :]

    def bn(y, gname, bname):
        # Training-mode BatchNorm1d: batch mean / biased variance (eps=1e-5).
        w = y.shape[1]
        mean = jnp.mean(y, axis=0, keepdims=True)
        var = jnp.mean(jnp.square(y - mean), axis=0, keepdims=True)
        return (y - mean) * lax.rsqrt(var + BN_EPS) * vrow(gname, w) + vrow(bname, w)

    def glu(x, wname, k, bname, gname, bename):
        # Fused (k, 2H=128) matmul + single 128-lane BN.  Gate half realigned onto
        # the value half with an XLU roll; exact sigmoid via one tanh EUP push.
        y = jnp.dot(x, wmat(wname, k), preferred_element_type=jnp.float32) + vrow(bname)
        y = bn(y, gname, bename)
        gate = 0.5 * jnp.tanh(0.5 * pltpu.roll(y, shift=H, axis=1)) + 0.5
        return (y * gate)[:, :H]                     # offset-0 lane slice (cheap)

    def feature_transformer(x, k_in, t):
        h = glu(x, "w_sh0", k_in, "b_sh0", f"g_sh{t}_0", f"be_sh{t}_0")
        for i in range(1, n_shared):
            h = (h + glu(h, f"w_sh{i}", H, f"b_sh{i}",
                         f"g_sh{t}_{i}", f"be_sh{t}_{i}")) * SCALE
        for j in range(n_ind):
            h = (h + glu(h, f"w_ind{t}_{j}", H, f"b_ind{t}_{j}",
                         f"g_ind{t}_{j}", f"be_ind{t}_{j}")) * SCALE
        return h

    def sparsemax(z):
        # Sort-free pairwise support computation, statically unrolled (F=6 is tiny).
        # TODO(synk): a sorted-cumsum path would be needed for large F.
        z = z - jnp.max(z, axis=-1, keepdims=True)
        k = jnp.zeros_like(z)                        # k_j = #{i : z_i >= z_j}
        s = jnp.zeros_like(z)                        # s_j = sum_{i : z_i >= z_j} z_i
        for i in range(F):
            zi = z[:, i:i + 1]
            ge = (zi >= z).astype(z.dtype)
            k = k + ge
            s = s + ge * zi
        support = (k * z > s - 1.0).astype(z.dtype)
        supp_size = jnp.sum(support, axis=-1, keepdims=True)
        supp_sum = jnp.sum(support * z, axis=-1, keepdims=True)
        tau = (supp_sum - 1.0) / supp_size           # exact divide (small-int denom)
        return jnp.maximum(z - tau, 0.0)

    x = act_ref[0:B, :]                              # (B, F)
    priors = act_ref[B:2 * B, :]                     # (B, F)

    # TODO(synk): `assert not torch.isnan(x).any()` has no in-kernel equivalent.
    xb = bn(x, "bn_in_g", "bn_in_b")                 # input BatchNorm (training mode)

    h = feature_transformer(xb, F, 0)                # first FeatureTransformer, (B, H)
    a_full = h                                       # attention input kept full-width;
                                                     # zero rows [0,n_d) of w_att absorb [:, n_d:]
    out_h = jnp.zeros((B, H), jnp.float32)           # full-width ReLU accumulator; zero rows
                                                     # [n_d,H) of w_fc absorb [:, :n_d]
    total_loss = jnp.zeros((1, 1), jnp.float32)

    for st in range(n_steps - 1):
        y = jnp.dot(a_full, wmat(f"w_att{st}", H),
                    preferred_element_type=jnp.float32)
        y = y[:, :F] + vrow(f"b_att{st}", F)
        y = bn(y, f"g_att{st}", f"be_att{st}")
        mask = sparsemax(y * priors)
        # Note: the reference's `priors = priors * (r - mask)` is a local re-bind and
        # never propagates, so priors stay constant across steps.
        ent = -mask * jnp.log(mask + 1e-10)
        step_loss = jnp.sum(jnp.sum(ent, axis=1, keepdims=True), axis=0, keepdims=True)
        total_loss = total_loss + step_loss * (1.0 / float(B * F))

        x_te = feature_transformer(xb * mask, F, st + 1)
        out_h = out_h + jnp.maximum(x_te, 0.0)
        a_full = x_te

    logits = jnp.dot(out_h, wmat("w_fc", H),
                     preferred_element_type=jnp.float32) + vrow("b_fc")
    out_ref[0:B, :] = logits                                        # lane-dense store
    out_ref[B:B + 8, :] = jnp.broadcast_to(total_loss, (8, LANE))   # loss packed in slab


# ----------------------------------------------------------------- param packing

def pack_params(params, *, n_d, hid):
    """Pack every weight / bias / BN vector into one f32 (R, 128) slab + offsets."""
    H = hid
    blocks, offs = [], {}
    cur = 0

    def add(name, arr, align8):
        nonlocal cur
        a = jnp.asarray(arr, jnp.float32)
        if a.ndim == 1:
            a = a.reshape(1, -1)
        r, c = a.shape
        rp = (-(-r // 8)) * 8 if align8 else r
        a = jnp.pad(a, ((0, rp - r), (0, LANE - c)))
        offs[name] = cur
        blocks.append(a)
        cur += rp

    # --- matmul weights: 8-row-aligned blocks, 128-lane padded columns ---
    for i, (Wt, _b) in enumerate(params["shared"]):
        add(f"w_sh{i}", Wt, True)                             # (F,128) / (H,128)
    for t, ft in enumerate(params["fts"]):
        for j, (Wt, _b, _g, _be) in enumerate(ft["ind"]):
            add(f"w_ind{t}_{j}", Wt, True)                    # (H,128)
    for s, (Wt, _b, _g, _be) in enumerate(params["attn"]):
        # zero rows [0, n_d) absorb the x_te[:, n_d:] lane split (K = hid)
        wa = jnp.concatenate(
            [jnp.zeros((n_d, Wt.shape[1]), jnp.float32), Wt], axis=0)
        add(f"w_att{s}", wa, True)                            # (H, F) -> (H,128)
    Wfc, bfc = params["fc"]
    # zero rows [n_d, H) absorb the x_te[:, :n_d] lane split (K = hid)
    wf = jnp.concatenate(
        [Wfc, jnp.zeros((H - n_d, Wfc.shape[1]), jnp.float32)], axis=0)
    add("w_fc", wf, True)                                     # (H, out) -> (H,128)

    # --- bias / BN vectors, one row each ---
    add("bn_in_g", params["bn_in"][0], False)
    add("bn_in_b", params["bn_in"][1], False)
    for i, (_Wt, b) in enumerate(params["shared"]):
        add(f"b_sh{i}", b, False)
    for t, ft in enumerate(params["fts"]):
        for k, (g, be) in enumerate(ft["shared_bn"]):
            add(f"g_sh{t}_{k}", g, False)
            add(f"be_sh{t}_{k}", be, False)
        for j, (_Wt, b, g, be) in enumerate(ft["ind"]):
            add(f"b_ind{t}_{j}", b, False)
            add(f"g_ind{t}_{j}", g, False)
            add(f"be_ind{t}_{j}", be, False)
    for s, (_Wt, b, g, be) in enumerate(params["attn"]):
        add(f"b_att{s}", b, False)
        add(f"g_att{s}", g, False)
        add(f"be_att{s}", be, False)
    add("b_fc", bfc, False)

    slab = jnp.concatenate(blocks, axis=0)
    pad = (-(-slab.shape[0] // 8)) * 8 - slab.shape[0]
    if pad:
        slab = jnp.pad(slab, ((0, pad), (0, 0)))
    return slab, offs


# ----------------------------------------------------------------- pallas wrapper

def tabnet_pallas(params, x, priors, *, n_d, hid, out_dim):
    B, F = x.shape
    H = hid
    assert 2 * H == LANE, "fused-GLU layout assumes 2*(n_d+n_a) == 128"
    n_shared = len(params["shared"])
    n_steps = len(params["fts"])
    n_ind = len(params["fts"][0]["ind"])

    # In production the parameter slab would be packed once, outside the step fn.
    slab, offs = pack_params(params, n_d=n_d, hid=H)
    act = jnp.concatenate([x, priors], axis=0)                # (2B, F): one input DMA

    # Advisory scheduling hint for XLA around the custom call.
    n_glu = n_steps * (n_shared + n_ind)
    mm_k = (n_steps * F + n_steps * (n_shared - 1 + n_ind) * H
            + (n_steps - 1) * H + H)
    flops = 2 * B * LANE * mm_k
    trans = B * LANE * n_glu + 2 * B * F * (n_steps - 1)
    bytes_accessed = 4 * (slab.size + act.size + (B + 8) * LANE)

    kern = functools.partial(
        tabnet_kernel, offs=offs, B=B, F=F, H=H,
        n_shared=n_shared, n_ind=n_ind, n_steps=n_steps)

    out = pl.pallas_call(
        kern,
        out_shape=jax.ShapeDtypeStruct((B + 8, LANE), jnp.float32),
        cost_estimate=pl.CostEstimate(flops=int(flops),
                                      transcendentals=int(trans),
                                      bytes_accessed=int(bytes_accessed)),
        # No grid: all weights + activations (<0.5 MiB) stay resident in VMEM for
        # the whole forward; prologue is exactly 2 HBM->VMEM DMAs, epilogue 1.
        # TODO(synk): add a leading batch grid axis (block == vbs, "parallel") for
        # production batches so v7x's two TensorCores are used.
    )(act, slab)

    return out[:B, :out_dim], out[B, 0]


# ----------------------------------------------------------------- pure-JAX reference

HIGHEST = jax.lax.Precision.HIGHEST


def _bn_ref(y, g, b):
    mean = jnp.mean(y, axis=0, keepdims=True)
    var = jnp.mean(jnp.square(y - mean), axis=0, keepdims=True)
    return (y - mean) * lax.rsqrt(var + BN_EPS) * g + b


def _glu_ref(x, Wt, b, g, be, od):
    y = _bn_ref(jnp.dot(x, Wt, precision=HIGHEST) + b[None, :],
                g[None, :], be[None, :])
    return y[:, :od] * jax.nn.sigmoid(y[:, od:])


def _ft_ref(x, shared, ft, hid):
    Wt, b = shared[0]
    g, be = ft["shared_bn"][0]
    h = _glu_ref(x, Wt, b, g, be, hid)
    for i in range(1, len(shared)):
        Wt, b = shared[i]
        g, be = ft["shared_bn"][i]
        h = (h + _glu_ref(h, Wt, b, g, be, hid)) * SCALE
    for (Wt, b, g, be) in ft["ind"]:
        h = (h + _glu_ref(h, Wt, b, g, be, hid)) * SCALE
    return h


def _sparsemax_ref(z):
    z = z - jnp.max(z, axis=-1, keepdims=True)
    z_srt = -jnp.sort(-z, axis=-1)
    z_cum = jnp.cumsum(z_srt, axis=-1) - 1.0
    rhos = jnp.arange(1, z.shape[-1] + 1, dtype=z.dtype)
    support = rhos * z_srt > z_cum
    ss = jnp.sum(support, axis=-1, keepdims=True)
    tau = jnp.take_along_axis(z_cum, ss - 1, axis=-1) / ss.astype(z.dtype)
    return jnp.maximum(z - tau, 0.0)


def tabnet_reference(params, x, priors, *, n_d, hid):
    g, b = params["bn_in"]
    xb = _bn_ref(x, g[None, :], b[None, :])
    h = _ft_ref(xb, params["shared"], params["fts"][0], hid)
    x_a = h[:, n_d:]
    out = jnp.zeros((x.shape[0], n_d), jnp.float32)
    total = jnp.float32(0.0)
    for i, (Wt, bb, gg, be) in enumerate(params["attn"]):
        y = _bn_ref(jnp.dot(x_a, Wt, precision=HIGHEST) + bb[None, :],
                    gg[None, :], be[None, :])
        mask = _sparsemax_ref(y * priors)
        total = total + jnp.mean(-mask * jnp.log(mask + 1e-10))
        x_te = _ft_ref(xb * mask, params["shared"], params["fts"][i + 1], hid)
        out = out + jax.nn.relu(x_te[:, :n_d])
        x_a = x_te[:, n_d:]
    Wfc, bfc = params["fc"]
    return jnp.dot(out, Wfc, precision=HIGHEST) + bfc[None, :], total


# ----------------------------------------------------------------- param init

def init_params(key, inp_dim, out_dim, n_d, n_a, n_shared, n_ind, n_steps):
    hid = n_d + n_a
    keys = iter(jax.random.split(key, 256))

    def lin(in_d, out_d):
        bound = 1.0 / np.sqrt(in_d)
        W = jax.random.uniform(next(keys), (out_d, in_d), jnp.float32, -bound, bound)
        b = jax.random.uniform(next(keys), (out_d,), jnp.float32, -bound, bound)
        return W.T, b  # store transposed: (in, out)

    params = {}
    params["bn_in"] = (jnp.ones((inp_dim,), jnp.float32),
                       jnp.zeros((inp_dim,), jnp.float32))

    shared = [lin(inp_dim, 2 * hid)]
    for _ in range(n_shared - 1):
        shared.append(lin(hid, 2 * hid))
    params["shared"] = shared

    fts = []
    for _ in range(n_steps):  # first_step + (n_steps - 1) decision steps
        shared_bn = [(jnp.ones((2 * hid,), jnp.float32),
                      jnp.zeros((2 * hid,), jnp.float32))
                     for _ in range(n_shared)]
        ind = []
        for _ in range(n_ind):
            Wt, b = lin(hid, 2 * hid)
            ind.append((Wt, b, jnp.ones((2 * hid,), jnp.float32),
                        jnp.zeros((2 * hid,), jnp.float32)))
        fts.append({"shared_bn": shared_bn, "ind": ind})
    params["fts"] = fts

    attn = []
    for _ in range(n_steps - 1):
        Wt, b = lin(n_a, inp_dim)
        attn.append((Wt, b, jnp.ones((inp_dim,), jnp.float32),
                     jnp.zeros((inp_dim,), jnp.float32)))
    params["attn"] = attn

    params["fc"] = lin(n_d, out_dim)
    return params


# ----------------------------------------------------------------------- main

if __name__ == "__main__":
    B = 16
    INP_DIM, OUT_DIM = 6, 6
    N_D = N_A = 32
    N_SHARED, N_IND, N_STEPS = 2, 2, 3
    HID = N_D + N_A

    key = jax.random.PRNGKey(0)
    kparam, kx = jax.random.split(key)
    params = init_params(kparam, INP_DIM, OUT_DIM, N_D, N_A, N_SHARED, N_IND, N_STEPS)
    x = jax.random.normal(kx, (B, INP_DIM), jnp.float32)
    priors = jnp.ones((B, INP_DIM), jnp.float32)

    fwd_pallas = jax.jit(functools.partial(
        tabnet_pallas, n_d=N_D, hid=HID, out_dim=OUT_DIM))

    y, sparse_loss = jax.block_until_ready(fwd_pallas(params, x, priors))

    # All-f32 kernel (exact sigmoid / exact tau divide) vs a HIGHEST-precision
    # pure-JAX reference: tolerance tightened from 6e-2 to 2e-3.
    y_ref, loss_ref = tabnet_reference(params, x, priors, n_d=N_D, hid=HID)
    np.testing.assert_allclose(np.asarray(y), np.asarray(y_ref), rtol=2e-3, atol=2e-3)
    np.testing.assert_allclose(np.asarray(sparse_loss), np.asarray(loss_ref),
                               rtol=2e-3, atol=2e-3)

    print("KERNEL_OK")
</pallas_src>

<mosaic_0001>
module attributes {stable_mosaic.version = 11 : i64} {
  func.func @tabnet_kernel(%arg0: memref<32x6xf32, #tpu.memory_space<vmem>>, %arg1: memref<696x128xf32, #tpu.memory_space<vmem>>, %arg2: memref<24x128xf32, #tpu.memory_space<vmem>>) attributes {dimension_semantics = [], scalar_prefetch = 0 : i64, scratch_operands = 0 : i64, tpu.core_type = #tpu.core_type<tc>} {
    %c0 = arith.constant 0 : index
    %c0_0 = arith.constant 0 : index
    %0 = vector.load %arg0[%c0, %c0_0] : memref<32x6xf32, #tpu.memory_space<vmem>>, vector<16x6xf32>
    %c16 = arith.constant 16 : index
    %c0_1 = arith.constant 0 : index
    %1 = vector.load %arg0[%c16, %c0_1] : memref<32x6xf32, #tpu.memory_space<vmem>>, vector<16x6xf32>
    %cst = arith.constant dense<0.000000e+00> : vector<6xf32>
    %2 = vector.multi_reduction <add>, %0, %cst [0] : vector<16x6xf32> to vector<6xf32>
    %3 = vector.shape_cast %2 : vector<6xf32> to vector<1x6xf32>
    %cst_2 = arith.constant 1.600000e+01 : f32
    %4 = vector.broadcast %cst_2 : f32 to vector<1x6xf32>
    %5 = arith.divf %3, %4 : vector<1x6xf32>
    %6 = vector.broadcast %5 : vector<1x6xf32> to vector<16x6xf32>
    %7 = arith.subf %0, %6 : vector<16x6xf32>
    %8 = arith.mulf %7, %7 : vector<16x6xf32>
    %cst_3 = arith.constant dense<0.000000e+00> : vector<6xf32>
    %9 = vector.multi_reduction <add>, %8, %cst_3 [0] : vector<16x6xf32> to vector<6xf32>
    %10 = vector.shape_cast %9 : vector<6xf32> to vector<1x6xf32>
    %cst_4 = arith.constant 1.600000e+01 : f32
    %11 = vector.broadcast %cst_4 : f32 to vector<1x6xf32>
    %12 = arith.divf %10, %11 : vector<1x6xf32>
    %13 = vector.broadcast %5 : vector<1x6xf32> to vector<16x6xf32>
    %14 = arith.subf %0, %13 : vector<16x6xf32>
    %cst_5 = arith.constant 9.99999974E-6 : f32
    %15 = vector.broadcast %cst_5 : f32 to vector<1x6xf32>
    %16 = arith.addf %12, %15 : vector<1x6xf32>
    %17 = math.rsqrt %16 : vector<1x6xf32>
    %18 = vector.broadcast %17 : vector<1x6xf32> to vector<16x6xf32>
    %19 = arith.mulf %14, %18 : vector<16x6xf32>
    %c648 = arith.constant 648 : index
    %c0_6 = arith.constant 0 : index
    %20 = vector.load %arg1[%c648, %c0_6] : memref<696x128xf32, #tpu.memory_space<vmem>>, vector<1x6xf32>
    %21 = vector.broadcast %20 : vector<1x6xf32> to vector<16x6xf32>
    %22 = arith.mulf %19, %21 : vector<16x6xf32>
    %c649 = arith.constant 649 : index
    %c0_7 = arith.constant 0 : index
    %23 = vector.load %arg1[%c649, %c0_7] : memref<696x128xf32, #tpu.memory_space<vmem>>, vector<1x6xf32>
    %24 = vector.broadcast %23 : vector<1x6xf32> to vector<16x6xf32>
    %25 = arith.addf %22, %24 : vector<16x6xf32>
    %c0_8 = arith.constant 0 : index
    %c0_9 = arith.constant 0 : index
    %26 = vector.load %arg1[%c0_8, %c0_9] : memref<696x128xf32, #tpu.memory_space<vmem>>, vector<6x128xf32>
    %cst_10 = arith.constant dense<0.000000e+00> : vector<16x128xf32>
    %27 = tpu.matmul %25, %26, %cst_10 {dimension_numbers = #tpu.dot_dimension_numbers<[1], [0], [0], [1], [0, 0, 1, 1], [], []>} : vector<16x6xf32>, vector<6x128xf32>, vector<16x128xf32> -> vector<16x128xf32>
    %c650 = arith.constant 650 : index
    %c0_11 = arith.constant 0 : index
    %28 = vector.load %arg1[%c650, %c0_11] : memref<696x128xf32, #tpu.memory_space<vmem>>, vector<1x128xf32>
    %29 = vector.broadcast %28 : vector<1x128xf32> to vector<16x128xf32>
    %30 = arith.addf %27, %29 : vector<16x128xf32>
    %cst_12 = arith.constant dense<0.000000e+00> : vector<128xf32>
    %31 = vector.multi_reduction <add>, %30, %cst_12 [0] : vector<16x128xf32> to vector<128xf32>
    %32 = vector.shape_cast %31 : vector<128xf32> to vector<1x128xf32>
    %cst_13 = arith.constant 1.600000e+01 : f32
    %33 = vector.broadcast %cst_13 : f32 to vector<1x128xf32>
    %34 = arith.divf %32, %33 : vector<1x128xf32>
    %35 = vector.broadcast %34 : vector<1x128xf32> to vector<16x128xf32>
    %36 = arith.subf %30, %35 : vector<16x128xf32>
    %37 = arith.mulf %36, %36 : vector<16x128xf32>
    %cst_14 = arith.constant dense<0.000000e+00> : vector<128xf32>
    %38 = vector.multi_reduction <add>, %37, %cst_14 [0] : vector<16x128xf32> to vector<128xf32>
    %39 = vector.shape_cast %38 : vector<128xf32> to vector<1x128xf32>
    %cst_15 = arith.constant 1.600000e+01 : f32
    %40 = vector.broadcast %cst_15 : f32 to vector<1x128xf32>
    %41 = arith.divf %39, %40 : vector<1x128xf32>
    %42 = vector.broadcast %34 : vector<1x128xf32> to vector<16x128xf32>
    %43 = arith.subf %30, %42 : vector<16x128xf32>
    %cst_16 = arith.constant 9.99999974E-6 : f32
    %44 = vector.broadcast %cst_16 : f32 to vector<1x128xf32>
    %45 = arith.addf %41, %44 : vector<1x128xf32>
    %46 = math.rsqrt %45 : vector<1x128xf32>
    %47 = vector.broadcast %46 : vector<1x128xf32> to vector<16x128xf32>
    %48 = arith.mulf %43, %47 : vector<16x128xf32>
    %c652 = arith.constant 652 : index
    %c0_17 = arith.constant 0 : index
    %49 = vector.load %arg1[%c652, %c0_17] : memref<696x128xf32, #tpu.memory_space<vmem>>, vector<1x128xf32>
    %50 = vector.broadcast %49 : vector<1x128xf32> to vector<16x128xf32>
    %51 = arith.mulf %48, %50 : vector<16x128xf32>
    %c653 = arith.constant 653 : index
    %c0_18 = arith.constant 0 : index
    %52 = vector.load %arg1[%c653, %c0_18] : memref<696x128xf32, #tpu.memory_space<vmem>>, vector<1x128xf32>
    %53 = vector.broadcast %52 : vector<1x128xf32> to vector<16x128xf32>
    %54 = arith.addf %51, %53 : vector<16x128xf32>
    %c64_i32 = arith.constant 64 : i32
    %55 = tpu.dynamic_rotate %54 by %c64_i32 dim 1 : vector<16x128xf32>, i32 -> vector<16x128xf32>
    %cst_19 = arith.constant 5.000000e-01 : f32
    %56 = vector.broadcast %cst_19 : f32 to vector<16x128xf32>
    %57 = arith.mulf %56, %55 : vector<16x128xf32>
    %58 = math.tanh %57 : vector<16x128xf32>
    %cst_20 = arith.constant 5.000000e-01 : f32
    %59 = vector.broadcast %cst_20 : f32 to vector<16x128xf32>
    %60 = arith.mulf %59, %58 : vector<16x128xf32>
    %cst_21 = arith.constant 5.000000e-01 : f32
    %61 = vector.broadcast %cst_21 : f32 to vector<16x128xf32>
    %62 = arith.addf %60, %61 : vector<16x128xf32>
    %63 = arith.mulf %54, %62 : vector<16x128xf32>
    %64 = vector.extract_strided_slice %63 {offsets = [0, 0], sizes = [16, 64], strides = [1, 1]} : vector<16x128xf32> to vector<16x64xf32>
    %c8 = arith.constant 8 : index
    %c0_22 = arith.constant 0 : index
    %65 = vector.load %arg1[%c8, %c0_22] : memref<696x128xf32, #tpu.memory_space<vmem>>, vector<64x128xf32>
    %cst_23 = arith.constant dense<0.000000e+00> : vector<16x128xf32>
    %66 = tpu.matmul %64, %65, %cst_23 {dimension_numbers = #tpu.dot_dimension_numbers<[1], [0], [0], [1], [0, 0, 1, 1], [], []>} : vector<16x64xf32>, vector<64x128xf32>, vector<16x128xf32> -> vector<16x128xf32>
    %c651 = arith.constant 651 : index
    %c0_24 = arith.constant 0 : index
    %67 = vector.load %arg1[%c651, %c0_24] : memref<696x128xf32, #tpu.memory_space<vmem>>, vector<1x128xf32>
    %68 = vector.broadcast %67 : vector<1x128xf32> to vector<16x128xf32>
    %69 = arith.addf %66, %68 : vector<16x128xf32>
    %cst_25 = arith.constant dense<0.000000e+00> : vector<128xf32>
    %70 = vector.multi_reduction <add>, %69, %cst_25 [0] : vector<16x128xf32> to vector<128xf32>
    %71 = vector.shape_cast %70 : vector<128xf32> to vector<1x128xf32>
    %cst_26 = arith.constant 1.600000e+01 : f32
    %72 = vector.broadcast %cst_26 : f32 to vector<1x128xf32>
    %73 = arith.divf %71, %72 : vector<1x128xf32>
    %74 = vector.broadcast %73 : vector<1x128xf32> to vector<16x128xf32>
    %75 = arith.subf %69, %74 : vector<16x128xf32>
    %76 = arith.mulf %75, %75 : vector<16x128xf32>
    %cst_27 = arith.constant dense<0.000000e+00> : vector<128xf32>
    %77 = vector.multi_reduction <add>, %76, %cst_27 [0] : vector<16x128xf32> to vector<128xf32>
    %78 = vector.shape_cast %77 : vector<128xf32> to vector<1x128xf32>
    %cst_28 = arith.constant 1.600000e+01 : f32
    %79 = vector.broadcast %cst_28 : f32 to vector<1x128xf32>
    %80 = arith.divf %78, %79 : vector<1x128xf32>
    %81 = vector.broadcast %73 : vector<1x128xf32> to vector<16x128xf32>
    %82 = arith.subf %69, %81 : vector<16x128xf32>
    %cst_29 = arith.constant 9.99999974E-6 : f32
    %83 = vector.broadcast %cst_29 : f32 to vector<1x128xf32>
    %84 = arith.addf %80, %83 : vector<1x128xf32>
    %85 = math.rsqrt %84 : vector<1x128xf32>
    %86 = vector.broadcast %85 : vector<1x128xf32> to vector<16x128xf32>
    %87 = arith.mulf %82, %86 : vector<16x128xf32>
    %c654 = arith.constant 654 : index
    %c0_30 = arith.constant 0 : index
    %88 = vector.load %arg1[%c654, %c0_30] : memref<696x128xf32, #tpu.memory_space<vmem>>, vector<1x128xf32>
    %89 = vector.broadcast %88 : vector<1x128xf32> to vector<16x128xf32>
    %90 = arith.mulf %87, %89 : vector<16x128xf32>
    %c655 = arith.constant 655 : index
    %c0_31 = arith.constant 0 : index
    %91 = vector.load %arg1[%c655, %c0_31] : memref<696x128xf32, #tpu.memory_space<vmem>>, vector<1x128xf32>
    %92 = vector.broadcast %91 : vector<1x128xf32> to vector<16x128xf32>
    %93 = arith.addf %90, %92 : vector<16x128xf32>
    %c64_i32_32 = arith.constant 64 : i32
    %94 = tpu.dynamic_rotate %93 by %c64_i32_32 dim 1 : vector<16x128xf32>, i32 -> vector<16x128xf32>
    %cst_33 = arith.constant 5.000000e-01 : f32
    %95 = vector.broadcast %cst_33 : f32 to vector<16x128xf32>
    %96 = arith.mulf %95, %94 : vector<16x128xf32>
    %97 = math.tanh %96 : vector<16x128xf32>
    %cst_34 = arith.constant 5.000000e-01 : f32
    %98 = vector.broadcast %cst_34 : f32 to vector<16x128xf32>
    %99 = arith.mulf %98, %97 : vector<16x128xf32>
    %cst_35 = arith.constant 5.000000e-01 : f32
    %100 = vector.broadcast %cst_35 : f32 to vector<16x128xf32>
    %101 = arith.addf %99, %100 : vector<16x128xf32>
    %102 = arith.mulf %93, %101 : vector<16x128xf32>
    %103 = vector.extract_strided_slice %102 {offsets = [0, 0], sizes = [16, 64], strides = [1, 1]} : vector<16x128xf32> to vector<16x64xf32>
    %104 = arith.addf %64, %103 : vector<16x64xf32>
    %cst_36 = arith.constant 0.707106769 : f32
    %105 = vector.broadcast %cst_36 : f32 to vector<16x64xf32>
    %106 = arith.mulf %104, %105 : vector<16x64xf32>
    %c72 = arith.constant 72 : index
    %c0_37 = arith.constant 0 : index
    %107 = vector.load %arg1[%c72, %c0_37] : memref<696x128xf32, #tpu.memory_space<vmem>>, vector<64x128xf32>
    %cst_38 = arith.constant dense<0.000000e+00> : vector<16x128xf32>
    %108 = tpu.matmul %106, %107, %cst_38 {dimension_numbers = #tpu.dot_dimension_numbers<[1], [0], [0], [1], [0, 0, 1, 1], [], []>} : vector<16x64xf32>, vector<64x128xf32>, vector<16x128xf32> -> vector<16x128xf32>
    %c656 = arith.constant 656 : index
    %c0_39 = arith.constant 0 : index
    %109 = vector.load %arg1[%c656, %c0_39] : memref<696x128xf32, #tpu.memory_space<vmem>>, vector<1x128xf32>
    %110 = vector.broadcast %109 : vector<1x128xf32> to vector<16x128xf32>
    %111 = arith.addf %108, %110 : vector<16x128xf32>
    %cst_40 = arith.constant dense<0.000000e+00> : vector<128xf32>
    %112 = vector.multi_reduction <add>, %111, %cst_40 [0] : vector<16x128xf32> to vector<128xf32>
    %113 = vector.shape_cast %112 : vector<128xf32> to vector<1x128xf32>
    %cst_41 = arith.constant 1.600000e+01 : f32
    %114 = vector.broadcast %cst_41 : f32 to vector<1x128xf32>
    %115 = arith.divf %113, %114 : vector<1x128xf32>
    %116 = vector.broadcast %115 : vector<1x128xf32> to vector<16x128xf32>
    %117 = arith.subf %111, %116 : vector<16x128xf32>
    %118 = arith.mulf %117, %117 : vector<16x128xf32>
    %cst_42 = arith.constant dense<0.000000e+00> : vector<128xf32>
    %119 = vector.multi_reduction <add>, %118, %cst_42 [0] : vector<16x128xf32> to vector<128xf32>
    %120 = vector.shape_cast %119 : vector<128xf32> to vector<1x128xf32>
    %cst_43 = arith.constant 1.600000e+01 : f32
    %121 = vector.broadcast %cst_43 : f32 to vector<1x128xf32>
    %122 = arith.divf %120, %121 : vector<1x128xf32>
    %123 = vector.broadcast %115 : vector<1x128xf32> to vector<16x128xf32>
    %124 = arith.subf %111, %123 : vector<16x128xf32>
    %cst_44 = arith.constant 9.99999974E-6 : f32
    %125 = vector.broadcast %cst_44 : f32 to vector<1x128xf32>
    %126 = arith.addf %122, %125 : vector<1x128xf32>
    %127 = math.rsqrt %126 : vector<1x128xf32>
    %128 = vector.broadcast %127 : vector<1x128xf32> to vector<16x128xf32>
    %129 = arith.mulf %124, %128 : vector<16x128xf32>
    %c657 = arith.constant 657 : index
    %c0_45 = arith.constant 0 : index
    %130 = vector.load %arg1[%c657, %c0_45] : memref<696x128xf32, #tpu.memory_space<vmem>>, vector<1x128xf32>
    %131 = vector.broadcast %130 : vector<1x128xf32> to vector<16x128xf32>
    %132 = arith.mulf %129, %131 : vector<16x128xf32>
    %c658 = arith.constant 658 : index
    %c0_46 = arith.constant 0 : index
    %133 = vector.load %arg1[%c658, %c0_46] : memref<696x128xf32, #tpu.memory_space<vmem>>, vector<1x128xf32>
    %134 = vector.broadcast %133 : vector<1x128xf32> to vector<16x128xf32>
    %135 = arith.addf %132, %134 : vector<16x128xf32>
    %c64_i32_47 = arith.constant 64 : i32
    %136 = tpu.dynamic_rotate %135 by %c64_i32_47 dim 1 : vector<16x128xf32>, i32 -> vector<16x128xf32>
    %cst_48 = arith.constant 5.000000e-01 : f32
    %137 = vector.broadcast %cst_48 : f32 to vector<16x128xf32>
    %138 = arith.mulf %137, %136 : vector<16x128xf32>
    %139 = math.tanh %138 : vector<16x128xf32>
    %cst_49 = arith.constant 5.000000e-01 : f32
    %140 = vector.broadcast %cst_49 : f32 to vector<16x128xf32>
    %141 = arith.mulf %140, %139 : vector<16x128xf32>
    %cst_50 = arith.constant 5.000000e-01 : f32
    %142 = vector.broadcast %cst_50 : f32 to vector<16x128xf32>
    %143 = arith.addf %141, %142 : vector<16x128xf32>
    %144 = arith.mulf %135, %143 : vector<16x128xf32>
    %145 = vector.extract_strided_slice %144 {offsets = [0, 0], sizes = [16, 64], strides = [1, 1]} : vector<16x128xf32> to vector<16x64xf32>
    %146 = arith.addf %106, %145 : vector<16x64xf32>
    %cst_51 = arith.constant 0.707106769 : f32
    %147 = vector.broadcast %cst_51 : f32 to vector<16x64xf32>
    %148 = arith.mulf %146, %147 : vector<16x64xf32>
    %c136 = arith.constant 136 : index
    %c0_52 = arith.constant 0 : index
    %149 = vector.load %arg1[%c136, %c0_52] : memref<696x128xf32, #tpu.memory_space<vmem>>, vector<64x128xf32>
    %cst_53 = arith.constant dense<0.000000e+00> : vector<16x128xf32>
    %150 = tpu.matmul %148, %149, %cst_53 {dimension_numbers = #tpu.dot_dimension_numbers<[1], [0], [0], [1], [0, 0, 1, 1], [], []>} : vector<16x64xf32>, vector<64x128xf32>, vector<16x128xf32> -> vector<16x128xf32>
    %c659 = arith.constant 659 : index
    %c0_54 = arith.constant 0 : index
    %151 = vector.load %arg1[%c659, %c0_54] : memref<696x128xf32, #tpu.memory_space<vmem>>, vector<1x128xf32>
    %152 = vector.broadcast %151 : vector<1x128xf32> to vector<16x128xf32>
    %153 = arith.addf %150, %152 : vector<16x128xf32>
    %cst_55 = arith.constant dense<0.000000e+00> : vector<128xf32>
    %154 = vector.multi_reduction <add>, %153, %cst_55 [0] : vector<16x128xf32> to vector<128xf32>
    %155 = vector.shape_cast %154 : vector<128xf32> to vector<1x128xf32>
    %cst_56 = arith.constant 1.600000e+01 : f32
    %156 = vector.broadcast %cst_56 : f32 to vector<1x128xf32>
    %157 = arith.divf %155, %156 : vector<1x128xf32>
    %158 = vector.broadcast %157 : vector<1x128xf32> to vector<16x128xf32>
    %159 = arith.subf %153, %158 : vector<16x128xf32>
    %160 = arith.mulf %159, %159 : vector<16x128xf32>
    %cst_57 = arith.constant dense<0.000000e+00> : vector<128xf32>
    %161 = vector.multi_reduction <add>, %160, %cst_57 [0] : vector<16x128xf32> to vector<128xf32>
    %162 = vector.shape_cast %161 : vector<128xf32> to vector<1x128xf32>
    %cst_58 = arith.constant 1.600000e+01 : f32
    %163 = vector.broadcast %cst_58 : f32 to vector<1x128xf32>
    %164 = arith.divf %162, %163 : vector<1x128xf32>
    %165 = vector.broadcast %157 : vector<1x128xf32> to vector<16x128xf32>
    %166 = arith.subf %153, %165 : vector<16x128xf32>
    %cst_59 = arith.constant 9.99999974E-6 : f32
    %167 = vector.broadcast %cst_59 : f32 to vector<1x128xf32>
    %168 = arith.addf %164, %167 : vector<1x128xf32>
    %169 = math.rsqrt %168 : vector<1x128xf32>
    %170 = vector.broadcast %169 : vector<1x128xf32> to vector<16x128xf32>
    %171 = arith.mulf %166, %170 : vector<16x128xf32>
    %c660 = arith.constant 660 : index
    %c0_60 = arith.constant 0 : index
    %172 = vector.load %arg1[%c660, %c0_60] : memref<696x128xf32, #tpu.memory_space<vmem>>, vector<1x128xf32>
    %173 = vector.broadcast %172 : vector<1x128xf32> to vector<16x128xf32>
    %174 = arith.mulf %171, %173 : vector<16x128xf32>
    %c661 = arith.constant 661 : index
    %c0_61 = arith.constant 0 : index
    %175 = vector.load %arg1[%c661, %c0_61] : memref<696x128xf32, #tpu.memory_space<vmem>>, vector<1x128xf32>
    %176 = vector.broadcast %175 : vector<1x128xf32> to vector<16x128xf32>
    %177 = arith.addf %174, %176 : vector<16x128xf32>
    %c64_i32_62 = arith.constant 64 : i32
    %178 = tpu.dynamic_rotate %177 by %c64_i32_62 dim 1 : vector<16x128xf32>, i32 -> vector<16x128xf32>
    %cst_63 = arith.constant 5.000000e-01 : f32
    %179 = vector.broadcast %cst_63 : f32 to vector<16x128xf32>
    %180 = arith.mulf %179, %178 : vector<16x128xf32>
    %181 = math.tanh %180 : vector<16x128xf32>
    %cst_64 = arith.constant 5.000000e-01 : f32
    %182 = vector.broadcast %cst_64 : f32 to vector<16x128xf32>
    %183 = arith.mulf %182, %181 : vector<16x128xf32>
    %cst_65 = arith.constant 5.000000e-01 : f32
    %184 = vector.broadcast %cst_65 : f32 to vector<16x128xf32>
    %185 = arith.addf %183, %184 : vector<16x128xf32>
    %186 = arith.mulf %177, %185 : vector<16x128xf32>
    %187 = vector.extract_strided_slice %186 {offsets = [0, 0], sizes = [16, 64], strides = [1, 1]} : vector<16x128xf32> to vector<16x64xf32>
    %188 = arith.addf %148, %187 : vector<16x64xf32>
    %cst_66 = arith.constant 0.707106769 : f32
    %189 = vector.broadcast %cst_66 : f32 to vector<16x64xf32>
    %190 = arith.mulf %188, %189 : vector<16x64xf32>
    %cst_67 = arith.constant 0.000000e+00 : f32
    %191 = vector.broadcast %cst_67 : f32 to vector<16x64xf32>
    %cst_68 = arith.constant 0.000000e+00 : f32
    %192 = vector.broadcast %cst_68 : f32 to vector<1x1xf32>
    %c456 = arith.constant 456 : index
    %c0_69 = arith.constant 0 : index
    %193 = vector.load %arg1[%c456, %c0_69] : memref<696x128xf32, #tpu.memory_space<vmem>>, vector<64x128xf32>
    %cst_70 = arith.constant dense<0.000000e+00> : vector<16x128xf32>
    %194 = tpu.matmul %190, %193, %cst_70 {dimension_numbers = #tpu.dot_dimension_numbers<[1], [0], [0], [1], [0, 0, 1, 1], [], []>} : vector<16x64xf32>, vector<64x128xf32>, vector<16x128xf32> -> vector<16x128xf32>
    %195 = vector.extract_strided_slice %194 {offsets = [0, 0], sizes = [16, 6], strides = [1, 1]} : vector<16x128xf32> to vector<16x6xf32>
    %c682 = arith.constant 682 : index
    %c0_71 = arith.constant 0 : index
    %196 = vector.load %arg1[%c682, %c0_71] : memref<696x128xf32, #tpu.memory_space<vmem>>, vector<1x6xf32>
    %197 = vector.broadcast %196 : vector<1x6xf32> to vector<16x6xf32>
    %198 = arith.addf %195, %197 : vector<16x6xf32>
    %cst_72 = arith.constant dense<0.000000e+00> : vector<6xf32>
    %199 = vector.multi_reduction <add>, %198, %cst_72 [0] : vector<16x6xf32> to vector<6xf32>
    %200 = vector.shape_cast %199 : vector<6xf32> to vector<1x6xf32>
    %cst_73 = arith.constant 1.600000e+01 : f32
    %201 = vector.broadcast %cst_73 : f32 to vector<1x6xf32>
    %202 = arith.divf %200, %201 : vector<1x6xf32>
    %203 = vector.broadcast %202 : vector<1x6xf32> to vector<16x6xf32>
    %204 = arith.subf %198, %203 : vector<16x6xf32>
    %205 = arith.mulf %204, %204 : vector<16x6xf32>
    %cst_74 = arith.constant dense<0.000000e+00> : vector<6xf32>
    %206 = vector.multi_reduction <add>, %205, %cst_74 [0] : vector<16x6xf32> to vector<6xf32>
    %207 = vector.shape_cast %206 : vector<6xf32> to vector<1x6xf32>
    %cst_75 = arith.constant 1.600000e+01 : f32
    %208 = vector.broadcast %cst_75 : f32 to vector<1x6xf32>
    %209 = arith.divf %207, %208 : vector<1x6xf32>
    %210 = vector.broadcast %202 : vector<1x6xf32> to vector<16x6xf32>
    %211 = arith.subf %198, %210 : vector<16x6xf32>
    %cst_76 = arith.constant 9.99999974E-6 : f32
    %212 = vector.broadcast %cst_76 : f32 to vector<1x6xf32>
    %213 = arith.addf %209, %212 : vector<1x6xf32>
    %214 = math.rsqrt %213 : vector<1x6xf32>
    %215 = vector.broadcast %214 : vector<1x6xf32> to vector<16x6xf32>
    %216 = arith.mulf %211, %215 : vector<16x6xf32>
    %c683 = arith.constant 683 : index
    %c0_77 = arith.constant 0 : index
    %217 = vector.load %arg1[%c683, %c0_77] : memref<696x128xf32, #tpu.memory_space<vmem>>, vector<1x6xf32>
    %218 = vector.broadcast %217 : vector<1x6xf32> to vector<16x6xf32>
    %219 = arith.mulf %216, %218 : vector<16x6xf32>
    %c684 = arith.constant 684 : index
    %c0_78 = arith.constant 0 : index
    %220 = vector.load %arg1[%c684, %c0_78] : memref<696x128xf32, #tpu.memory_space<vmem>>, vector<1x6xf32>
    %221 = vector.broadcast %220 : vector<1x6xf32> to vector<16x6xf32>
    %222 = arith.addf %219, %221 : vector<16x6xf32>
    %223 = arith.mulf %222, %1 : vector<16x6xf32>
    %cst_79 = arith.constant dense<0xFF800000> : vector<16xf32>
    %224 = vector.multi_reduction <maximumf>, %223, %cst_79 [1] : vector<16x6xf32> to vector<16xf32>
    %225 = vector.shape_cast %224 : vector<16xf32> to vector<16x1xf32>
    %226 = vector.broadcast %225 : vector<16x1xf32> to vector<16x6xf32>
    %227 = arith.subf %223, %226 : vector<16x6xf32>
    %cst_80 = arith.constant 0.000000e+00 : f32
    %228 = vector.broadcast %cst_80 : f32 to vector<16x6xf32>
    %cst_81 = arith.constant 0.000000e+00 : f32
    %229 = vector.broadcast %cst_81 : f32 to vector<16x6xf32>
    %230 = vector.extract_strided_slice %227 {offsets = [0, 0], sizes = [16, 1], strides = [1, 1]} : vector<16x6xf32> to vector<16x1xf32>
    %231 = vector.broadcast %230 : vector<16x1xf32> to vector<16x6xf32>
    %232 = arith.cmpf oge, %231, %227 : vector<16x6xf32>
    %233 = arith.extui %232 : vector<16x6xi1> to vector<16x6xi32>
    %234 = arith.sitofp %233 : vector<16x6xi32> to vector<16x6xf32>
    %235 = arith.addf %228, %234 : vector<16x6xf32>
    %236 = vector.broadcast %230 : vector<16x1xf32> to vector<16x6xf32>
    %237 = arith.mulf %234, %236 : vector<16x6xf32>
    %238 = arith.addf %229, %237 : vector<16x6xf32>
    %239 = vector.extract_strided_slice %227 {offsets = [0, 1], sizes = [16, 1], strides = [1, 1]} : vector<16x6xf32> to vector<16x1xf32>
    %240 = vector.broadcast %239 : vector<16x1xf32> to vector<16x6xf32>
    %241 = arith.cmpf oge, %240, %227 : vector<16x6xf32>
    %242 = arith.extui %241 : vector<16x6xi1> to vector<16x6xi32>
    %243 = arith.sitofp %242 : vector<16x6xi32> to vector<16x6xf32>
    %244 = arith.addf %235, %243 : vector<16x6xf32>
    %245 = vector.broadcast %239 : vector<16x1xf32> to vector<16x6xf32>
    %246 = arith.mulf %243, %245 : vector<16x6xf32>
    %247 = arith.addf %238, %246 : vector<16x6xf32>
    %248 = vector.extract_strided_slice %227 {offsets = [0, 2], sizes = [16, 1], strides = [1, 1]} : vector<16x6xf32> to vector<16x1xf32>
    %249 = vector.broadcast %248 : vector<16x1xf32> to vector<16x6xf32>
    %250 = arith.cmpf oge, %249, %227 : vector<16x6xf32>
    %251 = arith.extui %250 : vector<16x6xi1> to vector<16x6xi32>
    %252 = arith.sitofp %251 : vector<16x6xi32> to vector<16x6xf32>
    %253 = arith.addf %244, %252 : vector<16x6xf32>
    %254 = vector.broadcast %248 : vector<16x1xf32> to vector<16x6xf32>
    %255 = arith.mulf %252, %254 : vector<16x6xf32>
    %256 = arith.addf %247, %255 : vector<16x6xf32>
    %257 = vector.extract_strided_slice %227 {offsets = [0, 3], sizes = [16, 1], strides = [1, 1]} : vector<16x6xf32> to vector<16x1xf32>
    %258 = vector.broadcast %257 : vector<16x1xf32> to vector<16x6xf32>
    %259 = arith.cmpf oge, %258, %227 : vector<16x6xf32>
    %260 = arith.extui %259 : vector<16x6xi1> to vector<16x6xi32>
    %261 = arith.sitofp %260 : vector<16x6xi32> to vector<16x6xf32>
    %262 = arith.addf %253, %261 : vector<16x6xf32>
    %263 = vector.broadcast %257 : vector<16x1xf32> to vector<16x6xf32>
    %264 = arith.mulf %261, %263 : vector<16x6xf32>
    %265 = arith.addf %256, %264 : vector<16x6xf32>
    %266 = vector.extract_strided_slice %227 {offsets = [0, 4], sizes = [16, 1], strides = [1, 1]} : vector<16x6xf32> to vector<16x1xf32>
    %267 = vector.broadcast %266 : vector<16x1xf32> to vector<16x6xf32>
    %268 = arith.cmpf oge, %267, %227 : vector<16x6xf32>
    %269 = arith.extui %268 : vector<16x6xi1> to vector<16x6xi32>
    %270 = arith.sitofp %269 : vector<16x6xi32> to vector<16x6xf32>
    %271 = arith.addf %262, %270 : vector<16x6xf32>
    %272 = vector.broadcast %266 : vector<16x1xf32> to vector<16x6xf32>
    %273 = arith.mulf %270, %272 : vector<16x6xf32>
    %274 = arith.addf %265, %273 : vector<16x6xf32>
    %275 = vector.extract_strided_slice %227 {offsets = [0, 5], sizes = [16, 1], strides = [1, 1]} : vector<16x6xf32> to vector<16x1xf32>
    %276 = vector.broadcast %275 : vector<16x1xf32> to vector<16x6xf32>
    %277 = arith.cmpf oge, %276, %227 : vector<16x6xf32>
    %278 = arith.extui %277 : vector<16x6xi1> to vector<16x6xi32>
    %279 = arith.sitofp %278 : vector<16x6xi32> to vector<16x6xf32>
    %280 = arith.addf %271, %279 : vector<16x6xf32>
    %281 = vector.broadcast %275 : vector<16x1xf32> to vector<16x6xf32>
    %282 = arith.mulf %279, %281 : vector<16x6xf32>
    %283 = arith.addf %274, %282 : vector<16x6xf32>
    %284 = arith.mulf %280, %227 : vector<16x6xf32>
    %cst_82 = arith.constant 1.000000e+00 : f32
    %285 = vector.broadcast %cst_82 : f32 to vector<16x6xf32>
    %286 = arith.subf %283, %285 : vector<16x6xf32>
    %287 = arith.cmpf ogt, %284, %286 : vector<16x6xf32>
    %288 = arith.extui %287 : vector<16x6xi1> to vector<16x6xi32>
    %289 = arith.sitofp %288 : vector<16x6xi32> to vector<16x6xf32>
    %cst_83 = arith.constant dense<0.000000e+00> : vector<16xf32>
    %290 = vector.multi_reduction <add>, %289, %cst_83 [1] : vector<16x6xf32> to vector<16xf32>
    %291 = vector.shape_cast %290 : vector<16xf32> to vector<16x1xf32>
    %292 = arith.mulf %289, %227 : vector<16x6xf32>
    %cst_84 = arith.constant dense<0.000000e+00> : vector<16xf32>
    %293 = vector.multi_reduction <add>, %292, %cst_84 [1] : vector<16x6xf32> to vector<16xf32>
    %294 = vector.shape_cast %293 : vector<16xf32> to vector<16x1xf32>
    %cst_85 = arith.constant 1.000000e+00 : f32
    %295 = vector.broadcast %cst_85 : f32 to vector<16x1xf32>
    %296 = arith.subf %294, %295 : vector<16x1xf32>
    %297 = arith.divf %296, %291 : vector<16x1xf32>
    %298 = vector.broadcast %297 : vector<16x1xf32> to vector<16x6xf32>
    %299 = arith.subf %227, %298 : vector<16x6xf32>
    %cst_86 = arith.constant 0.000000e+00 : f32
    %300 = vector.broadcast %cst_86 : f32 to vector<16x6xf32>
    %301 = arith.maximumf %299, %300 : vector<16x6xf32>
    %cst_87 = arith.constant 0.000000e+00 : f32
    %302 = vector.broadcast %cst_87 : f32 to vector<16x6xf32>
    %303 = arith.subf %302, %301 : vector<16x6xf32>
    %cst_88 = arith.constant 1.000000e-10 : f32
    %304 = vector.broadcast %cst_88 : f32 to vector<16x6xf32>
    %305 = arith.addf %301, %304 : vector<16x6xf32>
    %306 = math.log %305 : vector<16x6xf32>
    %307 = arith.mulf %303, %306 : vector<16x6xf32>
    %cst_89 = arith.constant dense<0.000000e+00> : vector<16xf32>
    %308 = vector.multi_reduction <add>, %307, %cst_89 [1] : vector<16x6xf32> to vector<16xf32>
    %309 = vector.shape_cast %308 : vector<16xf32> to vector<16x1xf32>
    %cst_90 = arith.constant dense<0.000000e+00> : vector<1xf32>
    %310 = vector.multi_reduction <add>, %309, %cst_90 [0] : vector<16x1xf32> to vector<1xf32>
    %311 = vector.shape_cast %310 : vector<1xf32> to vector<1x1xf32>
    %cst_91 = arith.constant 0.010416667 : f32
    %312 = vector.broadcast %cst_91 : f32 to vector<1x1xf32>
    %313 = arith.mulf %311, %312 : vector<1x1xf32>
    %314 = arith.addf %192, %313 : vector<1x1xf32>
    %315 = arith.mulf %25, %301 : vector<16x6xf32>
    %c0_92 = arith.constant 0 : index
    %c0_93 = arith.constant 0 : index
    %316 = vector.load %arg1[%c0_92, %c0_93] : memref<696x128xf32, #tpu.memory_space<vmem>>, vector<6x128xf32>
    %cst_94 = arith.constant dense<0.000000e+00> : vector<16x128xf32>
    %317 = tpu.matmul %315, %316, %cst_94 {dimension_numbers = #tpu.dot_dimension_numbers<[1], [0], [0], [1], [0, 0, 1, 1], [], []>} : vector<16x6xf32>, vector<6x128xf32>, vector<16x128xf32> -> vector<16x128xf32>
    %c650_95 = arith.constant 650 : index
    %c0_96 = arith.constant 0 : index
    %318 = vector.load %arg1[%c650_95, %c0_96] : memref<696x128xf32, #tpu.memory_space<vmem>>, vector<1x128xf32>
    %319 = vector.broadcast %318 : vector<1x128xf32> to vector<16x128xf32>
    %320 = arith.addf %317, %319 : vector<16x128xf32>
    %cst_97 = arith.constant dense<0.000000e+00> : vector<128xf32>
    %321 = vector.multi_reduction <add>, %320, %cst_97 [0] : vector<16x128xf32> to vector<128xf32>
    %322 = vector.shape_cast %321 : vector<128xf32> to vector<1x128xf32>
    %cst_98 = arith.constant 1.600000e+01 : f32
    %323 = vector.broadcast %cst_98 : f32 to vector<1x128xf32>
    %324 = arith.divf %322, %323 : vector<1x128xf32>
    %325 = vector.broadcast %324 : vector<1x128xf32> to vector<16x128xf32>
    %326 = arith.subf %320, %325 : vector<16x128xf32>
    %327 = arith.mulf %326, %326 : vector<16x128xf32>
    %cst_99 = arith.constant dense<0.000000e+00> : vector<128xf32>
    %328 = vector.multi_reduction <add>, %327, %cst_99 [0] : vector<16x128xf32> to vector<128xf32>
    %329 = vector.shape_cast %328 : vector<128xf32> to vector<1x128xf32>
    %cst_100 = arith.constant 1.600000e+01 : f32
    %330 = vector.broadcast %cst_100 : f32 to vector<1x128xf32>
    %331 = arith.divf %329, %330 : vector<1x128xf32>
    %332 = vector.broadcast %324 : vector<1x128xf32> to vector<16x128xf32>
    %333 = arith.subf %320, %332 : vector<16x128xf32>
    %cst_101 = arith.constant 9.99999974E-6 : f32
    %334 = vector.broadcast %cst_101 : f32 to vector<1x128xf32>
    %335 = arith.addf %331, %334 : vector<1x128xf32>
    %336 = math.rsqrt %335 : vector<1x128xf32>
    %337 = vector.broadcast %336 : vector<1x128xf32> to vector<16x128xf32>
    %338 = arith.mulf %333, %337 : vector<16x128xf32>
    %c662 = arith.constant 662 : index
    %c0_102 = arith.constant 0 : index
    %339 = vector.load %arg1[%c662, %c0_102] : memref<696x128xf32, #tpu.memory_space<vmem>>, vector<1x128xf32>
    %340 = vector.broadcast %339 : vector<1x128xf32> to vector<16x128xf32>
    %341 = arith.mulf %338, %340 : vector<16x128xf32>
    %c663 = arith.constant 663 : index
    %c0_103 = arith.constant 0 : index
    %342 = vector.load %arg1[%c663, %c0_103] : memref<696x128xf32, #tpu.memory_space<vmem>>, vector<1x128xf32>
    %343 = vector.broadcast %342 : vector<1x128xf32> to vector<16x128xf32>
    %344 = arith.addf %341, %343 : vector<16x128xf32>
    %c64_i32_104 = arith.constant 64 : i32
    %345 = tpu.dynamic_rotate %344 by %c64_i32_104 dim 1 : vector<16x128xf32>, i32 -> vector<16x128xf32>
    %cst_105 = arith.constant 5.000000e-01 : f32
    %346 = vector.broadcast %cst_105 : f32 to vector<16x128xf32>
    %347 = arith.mulf %346, %345 : vector<16x128xf32>
    %348 = math.tanh %347 : vector<16x128xf32>
    %cst_106 = arith.constant 5.000000e-01 : f32
    %349 = vector.broadcast %cst_106 : f32 to vector<16x128xf32>
    %350 = arith.mulf %349, %348 : vector<16x128xf32>
    %cst_107 = arith.constant 5.000000e-01 : f32
    %351 = vector.broadcast %cst_107 : f32 to vector<16x128xf32>
    %352 = arith.addf %350, %351 : vector<16x128xf32>
    %353 = arith.mulf %344, %352 : vector<16x128xf32>
    %354 = vector.extract_strided_slice %353 {offsets = [0, 0], sizes = [16, 64], strides = [1, 1]} : vector<16x128xf32> to vector<16x64xf32>
    %c8_108 = arith.constant 8 : index
    %c0_109 = arith.constant 0 : index
    %355 = vector.load %arg1[%c8_108, %c0_109] : memref<696x128xf32, #tpu.memory_space<vmem>>, vector<64x128xf32>
    %cst_110 = arith.constant dense<0.000000e+00> : vector<16x128xf32>
    %356 = tpu.matmul %354, %355, %cst_110 {dimension_numbers = #tpu.dot_dimension_numbers<[1], [0], [0], [1], [0, 0, 1, 1], [], []>} : vector<16x64xf32>, vector<64x128xf32>, vector<16x128xf32> -> vector<16x128xf32>
    %c651_111 = arith.constant 651 : index
    %c0_112 = arith.constant 0 : index
    %357 = vector.load %arg1[%c651_111, %c0_112] : memref<696x128xf32, #tpu.memory_space<vmem>>, vector<1x128xf32>
    %358 = vector.broadcast %357 : vector<1x128xf32> to vector<16x128xf32>
    %359 = arith.addf %356, %358 : vector<16x128xf32>
    %cst_113 = arith.constant dense<0.000000e+00> : vector<128xf32>
    %360 = vector.multi_reduction <add>, %359, %cst_113 [0] : vector<16x128xf32> to vector<128xf32>
    %361 = vector.shape_cast %360 : vector<128xf32> to vector<1x128xf32>
    %cst_114 = arith.constant 1.600000e+01 : f32
    %362 = vector.broadcast %cst_114 : f32 to vector<1x128xf32>
    %363 = arith.divf %361, %362 : vector<1x128xf32>
    %364 = vector.broadcast %363 : vector<1x128xf32> to vector<16x128xf32>
    %365 = arith.subf %359, %364 : vector<16x128xf32>
    %366 = arith.mulf %365, %365 : vector<16x128xf32>
    %cst_115 = arith.constant dense<0.000000e+00> : vector<128xf32>
    %367 = vector.multi_reduction <add>, %366, %cst_115 [0] : vector<16x128xf32> to vector<128xf32>
    %368 = vector.shape_cast %367 : vector<128xf32> to vector<1x128xf32>
    %cst_116 = arith.constant 1.600000e+01 : f32
    %369 = vector.broadcast %cst_116 : f32 to vector<1x128xf32>
    %370 = arith.divf %368, %369 : vector<1x128xf32>
    %371 = vector.broadcast %363 : vector<1x128xf32> to vector<16x128xf32>
    %372 = arith.subf %359, %371 : vector<16x128xf32>
    %cst_117 = arith.constant 9.99999974E-6 : f32
    %373 = vector.broadcast %cst_117 : f32 to vector<1x128xf32>
    %374 = arith.addf %370, %373 : vector<1x128xf32>
    %375 = math.rsqrt %374 : vector<1x128xf32>
    %376 = vector.broadcast %375 : vector<1x128xf32> to vector<16x128xf32>
    %377 = arith.mulf %372, %376 : vector<16x128xf32>
    %c664 = arith.constant 664 : index
    %c0_118 = arith.constant 0 : index
    %378 = vector.load %arg1[%c664, %c0_118] : memref<696x128xf32, #tpu.memory_space<vmem>>, vector<1x128xf32>
    %379 = vector.broadcast %378 : vector<1x128xf32> to vector<16x128xf32>
    %380 = arith.mulf %377, %379 : vector<16x128xf32>
    %c665 = arith.constant 665 : index
    %c0_119 = arith.constant 0 : index
    %381 = vector.load %arg1[%c665, %c0_119] : memref<696x128xf32, #tpu.memory_space<vmem>>, vector<1x128xf32>
    %382 = vector.broadcast %381 : vector<1x128xf32> to vector<16x128xf32>
    %383 = arith.addf %380, %382 : vector<16x128xf32>
    %c64_i32_120 = arith.constant 64 : i32
    %384 = tpu.dynamic_rotate %383 by %c64_i32_120 dim 1 : vector<16x128xf32>, i32 -> vector<16x128xf32>
    %cst_121 = arith.constant 5.000000e-01 : f32
    %385 = vector.broadcast %cst_121 : f32 to vector<16x128xf32>
    %386 = arith.mulf %385, %384 : vector<16x128xf32>
    %387 = math.tanh %386 : vector<16x128xf32>
    %cst_122 = arith.constant 5.000000e-01 : f32
    %388 = vector.broadcast %cst_122 : f32 to vector<16x128xf32>
    %389 = arith.mulf %388, %387 : vector<16x128xf32>
    %cst_123 = arith.constant 5.000000e-01 : f32
    %390 = vector.broadcast %cst_123 : f32 to vector<16x128xf32>
    %391 = arith.addf %389, %390 : vector<16x128xf32>
    %392 = arith.mulf %383, %391 : vector<16x128xf32>
    %393 = vector.extract_strided_slice %392 {offsets = [0, 0], sizes = [16, 64], strides = [1, 1]} : vector<16x128xf32> to vector<16x64xf32>
    %394 = arith.addf %354, %393 : vector<16x64xf32>
    %cst_124 = arith.constant 0.707106769 : f32
    %395 = vector.broadcast %cst_124 : f32 to vector<16x64xf32>
    %396 = arith.mulf %394, %395 : vector<16x64xf32>
    %c200 = arith.constant 200 : index
    %c0_125 = arith.constant 0 : index
    %397 = vector.load %arg1[%c200, %c0_125] : memref<696x128xf32, #tpu.memory_space<vmem>>, vector<64x128xf32>
    %cst_126 = arith.constant dense<0.000000e+00> : vector<16x128xf32>
    %398 = tpu.matmul %396, %397, %cst_126 {dimension_numbers = #tpu.dot_dimension_numbers<[1], [0], [0], [1], [0, 0, 1, 1], [], []>} : vector<16x64xf32>, vector<64x128xf32>, vector<16x128xf32> -> vector<16x128xf32>
    %c666 = arith.constant 666 : index
    %c0_127 = arith.constant 0 : index
    %399 = vector.load %arg1[%c666, %c0_127] : memref<696x128xf32, #tpu.memory_space<vmem>>, vector<1x128xf32>
    %400 = vector.broadcast %399 : vector<1x128xf32> to vector<16x128xf32>
    %401 = arith.addf %398, %400 : vector<16x128xf32>
    %cst_128 = arith.constant dense<0.000000e+00> : vector<128xf32>
    %402 = vector.multi_reduction <add>, %401, %cst_128 [0] : vector<16x128xf32> to vector<128xf32>
    %403 = vector.shape_cast %402 : vector<128xf32> to vector<1x128xf32>
    %cst_129 = arith.constant 1.600000e+01 : f32
    %404 = vector.broadcast %cst_129 : f32 to vector<1x128xf32>
    %405 = arith.divf %403, %404 : vector<1x128xf32>
    %406 = vector.broadcast %405 : vector<1x128xf32> to vector<16x128xf32>
    %407 = arith.subf %401, %406 : vector<16x128xf32>
    %408 = arith.mulf %407, %407 : vector<16x128xf32>
    %cst_130 = arith.constant dense<0.000000e+00> : vector<128xf32>
    %409 = vector.multi_reduction <add>, %408, %cst_130 [0] : vector<16x128xf32> to vector<128xf32>
    %410 = vector.shape_cast %409 : vector<128xf32> to vector<1x128xf32>
    %cst_131 = arith.constant 1.600000e+01 : f32
    %411 = vector.broadcast %cst_131 : f32 to vector<1x128xf32>
    %412 = arith.divf %410, %411 : vector<1x128xf32>
    %413 = vector.broadcast %405 : vector<1x128xf32> to vector<16x128xf32>
    %414 = arith.subf %401, %413 : vector<16x128xf32>
    %cst_132 = arith.constant 9.99999974E-6 : f32
    %415 = vector.broadcast %cst_132 : f32 to vector<1x128xf32>
    %416 = arith.addf %412, %415 : vector<1x128xf32>
    %417 = math.rsqrt %416 : vector<1x128xf32>
    %418 = vector.broadcast %417 : vector<1x128xf32> to vector<16x128xf32>
    %419 = arith.mulf %414, %418 : vector<16x128xf32>
    %c667 = arith.constant 667 : index
    %c0_133 = arith.constant 0 : index
    %420 = vector.load %arg1[%c667, %c0_133] : memref<696x128xf32, #tpu.memory_space<vmem>>, vector<1x128xf32>
    %421 = vector.broadcast %420 : vector<1x128xf32> to vector<16x128xf32>
    %422 = arith.mulf %419, %421 : vector<16x128xf32>
    %c668 = arith.constant 668 : index
    %c0_134 = arith.constant 0 : index
    %423 = vector.load %arg1[%c668, %c0_134] : memref<696x128xf32, #tpu.memory_space<vmem>>, vector<1x128xf32>
    %424 = vector.broadcast %423 : vector<1x128xf32> to vector<16x128xf32>
    %425 = arith.addf %422, %424 : vector<16x128xf32>
    %c64_i32_135 = arith.constant 64 : i32
    %426 = tpu.dynamic_rotate %425 by %c64_i32_135 dim 1 : vector<16x128xf32>, i32 -> vector<16x128xf32>
    %cst_136 = arith.constant 5.000000e-01 : f32
    %427 = vector.broadcast %cst_136 : f32 to vector<16x128xf32>
    %428 = arith.mulf %427, %426 : vector<16x128xf32>
    %429 = math.tanh %428 : vector<16x128xf32>
    %cst_137 = arith.constant 5.000000e-01 : f32
    %430 = vector.broadcast %cst_137 : f32 to vector<16x128xf32>
    %431 = arith.mulf %430, %429 : vector<16x128xf32>
    %cst_138 = arith.constant 5.000000e-01 : f32
    %432 = vector.broadcast %cst_138 : f32 to vector<16x128xf32>
    %433 = arith.addf %431, %432 : vector<16x128xf32>
    %434 = arith.mulf %425, %433 : vector<16x128xf32>
    %435 = vector.extract_strided_slice %434 {offsets = [0, 0], sizes = [16, 64], strides = [1, 1]} : vector<16x128xf32> to vector<16x64xf32>
    %436 = arith.addf %396, %435 : vector<16x64xf32>
    %cst_139 = arith.constant 0.707106769 : f32
    %437 = vector.broadcast %cst_139 : f32 to vector<16x64xf32>
    %438 = arith.mulf %436, %437 : vector<16x64xf32>
    %c264 = arith.constant 264 : index
    %c0_140 = arith.constant 0 : index
    %439 = vector.load %arg1[%c264, %c0_140] : memref<696x128xf32, #tpu.memory_space<vmem>>, vector<64x128xf32>
    %cst_141 = arith.constant dense<0.000000e+00> : vector<16x128xf32>
    %440 = tpu.matmul %438, %439, %cst_141 {dimension_numbers = #tpu.dot_dimension_numbers<[1], [0], [0], [1], [0, 0, 1, 1], [], []>} : vector<16x64xf32>, vector<64x128xf32>, vector<16x128xf32> -> vector<16x128xf32>
    %c669 = arith.constant 669 : index
    %c0_142 = arith.constant 0 : index
    %441 = vector.load %arg1[%c669, %c0_142] : memref<696x128xf32, #tpu.memory_space<vmem>>, vector<1x128xf32>
    %442 = vector.broadcast %441 : vector<1x128xf32> to vector<16x128xf32>
    %443 = arith.addf %440, %442 : vector<16x128xf32>
    %cst_143 = arith.constant dense<0.000000e+00> : vector<128xf32>
    %444 = vector.multi_reduction <add>, %443, %cst_143 [0] : vector<16x128xf32> to vector<128xf32>
    %445 = vector.shape_cast %444 : vector<128xf32> to vector<1x128xf32>
    %cst_144 = arith.constant 1.600000e+01 : f32
    %446 = vector.broadcast %cst_144 : f32 to vector<1x128xf32>
    %447 = arith.divf %445, %446 : vector<1x128xf32>
    %448 = vector.broadcast %447 : vector<1x128xf32> to vector<16x128xf32>
    %449 = arith.subf %443, %448 : vector<16x128xf32>
    %450 = arith.mulf %449, %449 : vector<16x128xf32>
    %cst_145 = arith.constant dense<0.000000e+00> : vector<128xf32>
    %451 = vector.multi_reduction <add>, %450, %cst_145 [0] : vector<16x128xf32> to vector<128xf32>
    %452 = vector.shape_cast %451 : vector<128xf32> to vector<1x128xf32>
    %cst_146 = arith.constant 1.600000e+01 : f32
    %453 = vector.broadcast %cst_146 : f32 to vector<1x128xf32>
    %454 = arith.divf %452, %453 : vector<1x128xf32>
    %455 = vector.broadcast %447 : vector<1x128xf32> to vector<16x128xf32>
    %456 = arith.subf %443, %455 : vector<16x128xf32>
    %cst_147 = arith.constant 9.99999974E-6 : f32
    %457 = vector.broadcast %cst_147 : f32 to vector<1x128xf32>
    %458 = arith.addf %454, %457 : vector<1x128xf32>
    %459 = math.rsqrt %458 : vector<1x128xf32>
    %460 = vector.broadcast %459 : vector<1x128xf32> to vector<16x128xf32>
    %461 = arith.mulf %456, %460 : vector<16x128xf32>
    %c670 = arith.constant 670 : index
    %c0_148 = arith.constant 0 : index
    %462 = vector.load %arg1[%c670, %c0_148] : memref<696x128xf32, #tpu.memory_space<vmem>>, vector<1x128xf32>
    %463 = vector.broadcast %462 : vector<1x128xf32> to vector<16x128xf32>
    %464 = arith.mulf %461, %463 : vector<16x128xf32>
    %c671 = arith.constant 671 : index
    %c0_149 = arith.constant 0 : index
    %465 = vector.load %arg1[%c671, %c0_149] : memref<696x128xf32, #tpu.memory_space<vmem>>, vector<1x128xf32>
    %466 = vector.broadcast %465 : vector<1x128xf32> to vector<16x128xf32>
    %467 = arith.addf %464, %466 : vector<16x128xf32>
    %c64_i32_150 = arith.constant 64 : i32
    %468 = tpu.dynamic_rotate %467 by %c64_i32_150 dim 1 : vector<16x128xf32>, i32 -> vector<16x128xf32>
    %cst_151 = arith.constant 5.000000e-01 : f32
    %469 = vector.broadcast %cst_151 : f32 to vector<16x128xf32>
    %470 = arith.mulf %469, %468 : vector<16x128xf32>
    %471 = math.tanh %470 : vector<16x128xf32>
    %cst_152 = arith.constant 5.000000e-01 : f32
    %472 = vector.broadcast %cst_152 : f32 to vector<16x128xf32>
    %473 = arith.mulf %472, %471 : vector<16x128xf32>
    %cst_153 = arith.constant 5.000000e-01 : f32
    %474 = vector.broadcast %cst_153 : f32 to vector<16x128xf32>
    %475 = arith.addf %473, %474 : vector<16x128xf32>
    %476 = arith.mulf %467, %475 : vector<16x128xf32>
    %477 = vector.extract_strided_slice %476 {offsets = [0, 0], sizes = [16, 64], strides = [1, 1]} : vector<16x128xf32> to vector<16x64xf32>
    %478 = arith.addf %438, %477 : vector<16x64xf32>
    %cst_154 = arith.constant 0.707106769 : f32
    %479 = vector.broadcast %cst_154 : f32 to vector<16x64xf32>
    %480 = arith.mulf %478, %479 : vector<16x64xf32>
    %cst_155 = arith.constant 0.000000e+00 : f32
    %481 = vector.broadcast %cst_155 : f32 to vector<16x64xf32>
    %482 = arith.maximumf %480, %481 : vector<16x64xf32>
    %483 = arith.addf %191, %482 : vector<16x64xf32>
    %c520 = arith.constant 520 : index
    %c0_156 = arith.constant 0 : index
    %484 = vector.load %arg1[%c520, %c0_156] : memref<696x128xf32, #tpu.memory_space<vmem>>, vector<64x128xf32>
    %cst_157 = arith.constant dense<0.000000e+00> : vector<16x128xf32>
    %485 = tpu.matmul %480, %484, %cst_157 {dimension_numbers = #tpu.dot_dimension_numbers<[1], [0], [0], [1], [0, 0, 1, 1], [], []>} : vector<16x64xf32>, vector<64x128xf32>, vector<16x128xf32> -> vector<16x128xf32>
    %486 = vector.extract_strided_slice %485 {offsets = [0, 0], sizes = [16, 6], strides = [1, 1]} : vector<16x128xf32> to vector<16x6xf32>
    %c685 = arith.constant 685 : index
    %c0_158 = arith.constant 0 : index
    %487 = vector.load %arg1[%c685, %c0_158] : memref<696x128xf32, #tpu.memory_space<vmem>>, vector<1x6xf32>
    %488 = vector.broadcast %487 : vector<1x6xf32> to vector<16x6xf32>
    %489 = arith.addf %486, %488 : vector<16x6xf32>
    %cst_159 = arith.constant dense<0.000000e+00> : vector<6xf32>
    %490 = vector.multi_reduction <add>, %489, %cst_159 [0] : vector<16x6xf32> to vector<6xf32>
    %491 = vector.shape_cast %490 : vector<6xf32> to vector<1x6xf32>
    %cst_160 = arith.constant 1.600000e+01 : f32
    %492 = vector.broadcast %cst_160 : f32 to vector<1x6xf32>
    %493 = arith.divf %491, %492 : vector<1x6xf32>
    %494 = vector.broadcast %493 : vector<1x6xf32> to vector<16x6xf32>
    %495 = arith.subf %489, %494 : vector<16x6xf32>
    %496 = arith.mulf %495, %495 : vector<16x6xf32>
    %cst_161 = arith.constant dense<0.000000e+00> : vector<6xf32>
    %497 = vector.multi_reduction <add>, %496, %cst_161 [0] : vector<16x6xf32> to vector<6xf32>
    %498 = vector.shape_cast %497 : vector<6xf32> to vector<1x6xf32>
    %cst_162 = arith.constant 1.600000e+01 : f32
    %499 = vector.broadcast %cst_162 : f32 to vector<1x6xf32>
    %500 = arith.divf %498, %499 : vector<1x6xf32>
    %501 = vector.broadcast %493 : vector<1x6xf32> to vector<16x6xf32>
    %502 = arith.subf %489, %501 : vector<16x6xf32>
    %cst_163 = arith.constant 9.99999974E-6 : f32
    %503 = vector.broadcast %cst_163 : f32 to vector<1x6xf32>
    %504 = arith.addf %500, %503 : vector<1x6xf32>
    %505 = math.rsqrt %504 : vector<1x6xf32>
    %506 = vector.broadcast %505 : vector<1x6xf32> to vector<16x6xf32>
    %507 = arith.mulf %502, %506 : vector<16x6xf32>
    %c686 = arith.constant 686 : index
    %c0_164 = arith.constant 0 : index
    %508 = vector.load %arg1[%c686, %c0_164] : memref<696x128xf32, #tpu.memory_space<vmem>>, vector<1x6xf32>
    %509 = vector.broadcast %508 : vector<1x6xf32> to vector<16x6xf32>
    %510 = arith.mulf %507, %509 : vector<16x6xf32>
    %c687 = arith.constant 687 : index
    %c0_165 = arith.constant 0 : index
    %511 = vector.load %arg1[%c687, %c0_165] : memref<696x128xf32, #tpu.memory_space<vmem>>, vector<1x6xf32>
    %512 = vector.broadcast %511 : vector<1x6xf32> to vector<16x6xf32>
    %513 = arith.addf %510, %512 : vector<16x6xf32>
    %514 = arith.mulf %513, %1 : vector<16x6xf32>
    %cst_166 = arith.constant dense<0xFF800000> : vector<16xf32>
    %515 = vector.multi_reduction <maximumf>, %514, %cst_166 [1] : vector<16x6xf32> to vector<16xf32>
    %516 = vector.shape_cast %515 : vector<16xf32> to vector<16x1xf32>
    %517 = vector.broadcast %516 : vector<16x1xf32> to vector<16x6xf32>
    %518 = arith.subf %514, %517 : vector<16x6xf32>
    %cst_167 = arith.constant 0.000000e+00 : f32
    %519 = vector.broadcast %cst_167 : f32 to vector<16x6xf32>
    %cst_168 = arith.constant 0.000000e+00 : f32
    %520 = vector.broadcast %cst_168 : f32 to vector<16x6xf32>
    %521 = vector.extract_strided_slice %518 {offsets = [0, 0], sizes = [16, 1], strides = [1, 1]} : vector<16x6xf32> to vector<16x1xf32>
    %522 = vector.broadcast %521 : vector<16x1xf32> to vector<16x6xf32>
    %523 = arith.cmpf oge, %522, %518 : vector<16x6xf32>
    %524 = arith.extui %523 : vector<16x6xi1> to vector<16x6xi32>
    %525 = arith.sitofp %524 : vector<16x6xi32> to vector<16x6xf32>
    %526 = arith.addf %519, %525 : vector<16x6xf32>
    %527 = vector.broadcast %521 : vector<16x1xf32> to vector<16x6xf32>
    %528 = arith.mulf %525, %527 : vector<16x6xf32>
    %529 = arith.addf %520, %528 : vector<16x6xf32>
    %530 = vector.extract_strided_slice %518 {offsets = [0, 1], sizes = [16, 1], strides = [1, 1]} : vector<16x6xf32> to vector<16x1xf32>
    %531 = vector.broadcast %530 : vector<16x1xf32> to vector<16x6xf32>
    %532 = arith.cmpf oge, %531, %518 : vector<16x6xf32>
    %533 = arith.extui %532 : vector<16x6xi1> to vector<16x6xi32>
    %534 = arith.sitofp %533 : vector<16x6xi32> to vector<16x6xf32>
    %535 = arith.addf %526, %534 : vector<16x6xf32>
    %536 = vector.broadcast %530 : vector<16x1xf32> to vector<16x6xf32>
    %537 = arith.mulf %534, %536 : vector<16x6xf32>
    %538 = arith.addf %529, %537 : vector<16x6xf32>
    %539 = vector.extract_strided_slice %518 {offsets = [0, 2], sizes = [16, 1], strides = [1, 1]} : vector<16x6xf32> to vector<16x1xf32>
    %540 = vector.broadcast %539 : vector<16x1xf32> to vector<16x6xf32>
    %541 = arith.cmpf oge, %540, %518 : vector<16x6xf32>
    %542 = arith.extui %541 : vector<16x6xi1> to vector<16x6xi32>
    %543 = arith.sitofp %542 : vector<16x6xi32> to vector<16x6xf32>
    %544 = arith.addf %535, %543 : vector<16x6xf32>
    %545 = vector.broadcast %539 : vector<16x1xf32> to vector<16x6xf32>
    %546 = arith.mulf %543, %545 : vector<16x6xf32>
    %547 = arith.addf %538, %546 : vector<16x6xf32>
    %548 = vector.extract_strided_slice %518 {offsets = [0, 3], sizes = [16, 1], strides = [1, 1]} : vector<16x6xf32> to vector<16x1xf32>
    %549 = vector.broadcast %548 : vector<16x1xf32> to vector<16x6xf32>
    %550 = arith.cmpf oge, %549, %518 : vector<16x6xf32>
    %551 = arith.extui %550 : vector<16x6xi1> to vector<16x6xi32>
    %552 = arith.sitofp %551 : vector<16x6xi32> to vector<16x6xf32>
    %553 = arith.addf %544, %552 : vector<16x6xf32>
    %554 = vector.broadcast %548 : vector<16x1xf32> to vector<16x6xf32>
    %555 = arith.mulf %552, %554 : vector<16x6xf32>
    %556 = arith.addf %547, %555 : vector<16x6xf32>
    %557 = vector.extract_strided_slice %518 {offsets = [0, 4], sizes = [16, 1], strides = [1, 1]} : vector<16x6xf32> to vector<16x1xf32>
    %558 = vector.broadcast %557 : vector<16x1xf32> to vector<16x6xf32>
    %559 = arith.cmpf oge, %558, %518 : vector<16x6xf32>
    %560 = arith.extui %559 : vector<16x6xi1> to vector<16x6xi32>
    %561 = arith.sitofp %560 : vector<16x6xi32> to vector<16x6xf32>
    %562 = arith.addf %553, %561 : vector<16x6xf32>
    %563 = vector.broadcast %557 : vector<16x1xf32> to vector<16x6xf32>
    %564 = arith.mulf %561, %563 : vector<16x6xf32>
    %565 = arith.addf %556, %564 : vector<16x6xf32>
    %566 = vector.extract_strided_slice %518 {offsets = [0, 5], sizes = [16, 1], strides = [1, 1]} : vector<16x6xf32> to vector<16x1xf32>
    %567 = vector.broadcast %566 : vector<16x1xf32> to vector<16x6xf32>
    %568 = arith.cmpf oge, %567, %518 : vector<16x6xf32>
    %569 = arith.extui %568 : vector<16x6xi1> to vector<16x6xi32>
    %570 = arith.sitofp %569 : vector<16x6xi32> to vector<16x6xf32>
    %571 = arith.addf %562, %570 : vector<16x6xf32>
    %572 = vector.broadcast %566 : vector<16x1xf32> to vector<16x6xf32>
    %573 = arith.mulf %570, %572 : vector<16x6xf32>
    %574 = arith.addf %565, %573 : vector<16x6xf32>
    %575 = arith.mulf %571, %518 : vector<16x6xf32>
    %cst_169 = arith.constant 1.000000e+00 : f32
    %576 = vector.broadcast %cst_169 : f32 to vector<16x6xf32>
    %577 = arith.subf %574, %576 : vector<16x6xf32>
    %578 = arith.cmpf ogt, %575, %577 : vector<16x6xf32>
    %579 = arith.extui %578 : vector<16x6xi1> to vector<16x6xi32>
    %580 = arith.sitofp %579 : vector<16x6xi32> to vector<16x6xf32>
    %cst_170 = arith.constant dense<0.000000e+00> : vector<16xf32>
    %581 = vector.multi_reduction <add>, %580, %cst_170 [1] : vector<16x6xf32> to vector<16xf32>
    %582 = vector.shape_cast %581 : vector<16xf32> to vector<16x1xf32>
    %583 = arith.mulf %580, %518 : vector<16x6xf32>
    %cst_171 = arith.constant dense<0.000000e+00> : vector<16xf32>
    %584 = vector.multi_reduction <add>, %583, %cst_171 [1] : vector<16x6xf32> to vector<16xf32>
    %585 = vector.shape_cast %584 : vector<16xf32> to vector<16x1xf32>
    %cst_172 = arith.constant 1.000000e+00 : f32
    %586 = vector.broadcast %cst_172 : f32 to vector<16x1xf32>
    %587 = arith.subf %585, %586 : vector<16x1xf32>
    %588 = arith.divf %587, %582 : vector<16x1xf32>
    %589 = vector.broadcast %588 : vector<16x1xf32> to vector<16x6xf32>
    %590 = arith.subf %518, %589 : vector<16x6xf32>
    %cst_173 = arith.constant 0.000000e+00 : f32
    %591 = vector.broadcast %cst_173 : f32 to vector<16x6xf32>
    %592 = arith.maximumf %590, %591 : vector<16x6xf32>
    %cst_174 = arith.constant 0.000000e+00 : f32
    %593 = vector.broadcast %cst_174 : f32 to vector<16x6xf32>
    %594 = arith.subf %593, %592 : vector<16x6xf32>
    %cst_175 = arith.constant 1.000000e-10 : f32
    %595 = vector.broadcast %cst_175 : f32 to vector<16x6xf32>
    %596 = arith.addf %592, %595 : vector<16x6xf32>
    %597 = math.log %596 : vector<16x6xf32>
    %598 = arith.mulf %594, %597 : vector<16x6xf32>
    %cst_176 = arith.constant dense<0.000000e+00> : vector<16xf32>
    %599 = vector.multi_reduction <add>, %598, %cst_176 [1] : vector<16x6xf32> to vector<16xf32>
    %600 = vector.shape_cast %599 : vector<16xf32> to vector<16x1xf32>
    %cst_177 = arith.constant dense<0.000000e+00> : vector<1xf32>
    %601 = vector.multi_reduction <add>, %600, %cst_177 [0] : vector<16x1xf32> to vector<1xf32>
    %602 = vector.shape_cast %601 : vector<1xf32> to vector<1x1xf32>
    %cst_178 = arith.constant 0.010416667 : f32
    %603 = vector.broadcast %cst_178 : f32 to vector<1x1xf32>
    %604 = arith.mulf %602, %603 : vector<1x1xf32>
    %605 = arith.addf %314, %604 : vector<1x1xf32>
    %606 = arith.mulf %25, %592 : vector<16x6xf32>
    %c0_179 = arith.constant 0 : index
    %c0_180 = arith.constant 0 : index
    %607 = vector.load %arg1[%c0_179, %c0_180] : memref<696x128xf32, #tpu.memory_space<vmem>>, vector<6x128xf32>
    %cst_181 = arith.constant dense<0.000000e+00> : vector<16x128xf32>
    %608 = tpu.matmul %606, %607, %cst_181 {dimension_numbers = #tpu.dot_dimension_numbers<[1], [0], [0], [1], [0, 0, 1, 1], [], []>} : vector<16x6xf32>, vector<6x128xf32>, vector<16x128xf32> -> vector<16x128xf32>
    %c650_182 = arith.constant 650 : index
    %c0_183 = arith.constant 0 : index
    %609 = vector.load %arg1[%c650_182, %c0_183] : memref<696x128xf32, #tpu.memory_space<vmem>>, vector<1x128xf32>
    %610 = vector.broadcast %609 : vector<1x128xf32> to vector<16x128xf32>
    %611 = arith.addf %608, %610 : vector<16x128xf32>
    %cst_184 = arith.constant dense<0.000000e+00> : vector<128xf32>
    %612 = vector.multi_reduction <add>, %611, %cst_184 [0] : vector<16x128xf32> to vector<128xf32>
    %613 = vector.shape_cast %612 : vector<128xf32> to vector<1x128xf32>
    %cst_185 = arith.constant 1.600000e+01 : f32
    %614 = vector.broadcast %cst_185 : f32 to vector<1x128xf32>
    %615 = arith.divf %613, %614 : vector<1x128xf32>
    %616 = vector.broadcast %615 : vector<1x128xf32> to vector<16x128xf32>
    %617 = arith.subf %611, %616 : vector<16x128xf32>
    %618 = arith.mulf %617, %617 : vector<16x128xf32>
    %cst_186 = arith.constant dense<0.000000e+00> : vector<128xf32>
    %619 = vector.multi_reduction <add>, %618, %cst_186 [0] : vector<16x128xf32> to vector<128xf32>
    %620 = vector.shape_cast %619 : vector<128xf32> to vector<1x128xf32>
    %cst_187 = arith.constant 1.600000e+01 : f32
    %621 = vector.broadcast %cst_187 : f32 to vector<1x128xf32>
    %622 = arith.divf %620, %621 : vector<1x128xf32>
    %623 = vector.broadcast %615 : vector<1x128xf32> to vector<16x128xf32>
    %624 = arith.subf %611, %623 : vector<16x128xf32>
    %cst_188 = arith.constant 9.99999974E-6 : f32
    %625 = vector.broadcast %cst_188 : f32 to vector<1x128xf32>
    %626 = arith.addf %622, %625 : vector<1x128xf32>
    %627 = math.rsqrt %626 : vector<1x128xf32>
    %628 = vector.broadcast %627 : vector<1x128xf32> to vector<16x128xf32>
    %629 = arith.mulf %624, %628 : vector<16x128xf32>
    %c672 = arith.constant 672 : index
    %c0_189 = arith.constant 0 : index
    %630 = vector.load %arg1[%c672, %c0_189] : memref<696x128xf32, #tpu.memory_space<vmem>>, vector<1x128xf32>
    %631 = vector.broadcast %630 : vector<1x128xf32> to vector<16x128xf32>
    %632 = arith.mulf %629, %631 : vector<16x128xf32>
    %c673 = arith.constant 673 : index
    %c0_190 = arith.constant 0 : index
    %633 = vector.load %arg1[%c673, %c0_190] : memref<696x128xf32, #tpu.memory_space<vmem>>, vector<1x128xf32>
    %634 = vector.broadcast %633 : vector<1x128xf32> to vector<16x128xf32>
    %635 = arith.addf %632, %634 : vector<16x128xf32>
    %c64_i32_191 = arith.constant 64 : i32
    %636 = tpu.dynamic_rotate %635 by %c64_i32_191 dim 1 : vector<16x128xf32>, i32 -> vector<16x128xf32>
    %cst_192 = arith.constant 5.000000e-01 : f32
    %637 = vector.broadcast %cst_192 : f32 to vector<16x128xf32>
    %638 = arith.mulf %637, %636 : vector<16x128xf32>
    %639 = math.tanh %638 : vector<16x128xf32>
    %cst_193 = arith.constant 5.000000e-01 : f32
    %640 = vector.broadcast %cst_193 : f32 to vector<16x128xf32>
    %641 = arith.mulf %640, %639 : vector<16x128xf32>
    %cst_194 = arith.constant 5.000000e-01 : f32
    %642 = vector.broadcast %cst_194 : f32 to vector<16x128xf32>
    %643 = arith.addf %641, %642 : vector<16x128xf32>
    %644 = arith.mulf %635, %643 : vector<16x128xf32>
    %645 = vector.extract_strided_slice %644 {offsets = [0, 0], sizes = [16, 64], strides = [1, 1]} : vector<16x128xf32> to vector<16x64xf32>
    %c8_195 = arith.constant 8 : index
    %c0_196 = arith.constant 0 : index
    %646 = vector.load %arg1[%c8_195, %c0_196] : memref<696x128xf32, #tpu.memory_space<vmem>>, vector<64x128xf32>
    %cst_197 = arith.constant dense<0.000000e+00> : vector<16x128xf32>
    %647 = tpu.matmul %645, %646, %cst_197 {dimension_numbers = #tpu.dot_dimension_numbers<[1], [0], [0], [1], [0, 0, 1, 1], [], []>} : vector<16x64xf32>, vector<64x128xf32>, vector<16x128xf32> -> vector<16x128xf32>
    %c651_198 = arith.constant 651 : index
    %c0_199 = arith.constant 0 : index
    %648 = vector.load %arg1[%c651_198, %c0_199] : memref<696x128xf32, #tpu.memory_space<vmem>>, vector<1x128xf32>
    %649 = vector.broadcast %648 : vector<1x128xf32> to vector<16x128xf32>
    %650 = arith.addf %647, %649 : vector<16x128xf32>
    %cst_200 = arith.constant dense<0.000000e+00> : vector<128xf32>
    %651 = vector.multi_reduction <add>, %650, %cst_200 [0] : vector<16x128xf32> to vector<128xf32>
    %652 = vector.shape_cast %651 : vector<128xf32> to vector<1x128xf32>
    %cst_201 = arith.constant 1.600000e+01 : f32
    %653 = vector.broadcast %cst_201 : f32 to vector<1x128xf32>
    %654 = arith.divf %652, %653 : vector<1x128xf32>
    %655 = vector.broadcast %654 : vector<1x128xf32> to vector<16x128xf32>
    %656 = arith.subf %650, %655 : vector<16x128xf32>
    %657 = arith.mulf %656, %656 : vector<16x128xf32>
    %cst_202 = arith.constant dense<0.000000e+00> : vector<128xf32>
    %658 = vector.multi_reduction <add>, %657, %cst_202 [0] : vector<16x128xf32> to vector<128xf32>
    %659 = vector.shape_cast %658 : vector<128xf32> to vector<1x128xf32>
    %cst_203 = arith.constant 1.600000e+01 : f32
    %660 = vector.broadcast %cst_203 : f32 to vector<1x128xf32>
    %661 = arith.divf %659, %660 : vector<1x128xf32>
    %662 = vector.broadcast %654 : vector<1x128xf32> to vector<16x128xf32>
    %663 = arith.subf %650, %662 : vector<16x128xf32>
    %cst_204 = arith.constant 9.99999974E-6 : f32
    %664 = vector.broadcast %cst_204 : f32 to vector<1x128xf32>
    %665 = arith.addf %661, %664 : vector<1x128xf32>
    %666 = math.rsqrt %665 : vector<1x128xf32>
    %667 = vector.broadcast %666 : vector<1x128xf32> to vector<16x128xf32>
    %668 = arith.mulf %663, %667 : vector<16x128xf32>
    %c674 = arith.constant 674 : index
    %c0_205 = arith.constant 0 : index
    %669 = vector.load %arg1[%c674, %c0_205] : memref<696x128xf32, #tpu.memory_space<vmem>>, vector<1x128xf32>
    %670 = vector.broadcast %669 : vector<1x128xf32> to vector<16x128xf32>
    %671 = arith.mulf %668, %670 : vector<16x128xf32>
    %c675 = arith.constant 675 : index
    %c0_206 = arith.constant 0 : index
    %672 = vector.load %arg1[%c675, %c0_206] : memref<696x128xf32, #tpu.memory_space<vmem>>, vector<1x128xf32>
    %673 = vector.broadcast %672 : vector<1x128xf32> to vector<16x128xf32>
    %674 = arith.addf %671, %673 : vector<16x128xf32>
    %c64_i32_207 = arith.constant 64 : i32
    %675 = tpu.dynamic_rotate %674 by %c64_i32_207 dim 1 : vector<16x128xf32>, i32 -> vector<16x128xf32>
    %cst_208 = arith.constant 5.000000e-01 : f32
    %676 = vector.broadcast %cst_208 : f32 to vector<16x128xf32>
    %677 = arith.mulf %676, %675 : vector<16x128xf32>
    %678 = math.tanh %677 : vector<16x128xf32>
    %cst_209 = arith.constant 5.000000e-01 : f32
    %679 = vector.broadcast %cst_209 : f32 to vector<16x128xf32>
    %680 = arith.mulf %679, %678 : vector<16x128xf32>
    %cst_210 = arith.constant 5.000000e-01 : f32
    %681 = vector.broadcast %cst_210 : f32 to vector<16x128xf32>
    %682 = arith.addf %680, %681 : vector<16x128xf32>
    %683 = arith.mulf %674, %682 : vector<16x128xf32>
    %684 = vector.extract_strided_slice %683 {offsets = [0, 0], sizes = [16, 64], strides = [1, 1]} : vector<16x128xf32> to vector<16x64xf32>
    %685 = arith.addf %645, %684 : vector<16x64xf32>
    %cst_211 = arith.constant 0.707106769 : f32
    %686 = vector.broadcast %cst_211 : f32 to vector<16x64xf32>
    %687 = arith.mulf %685, %686 : vector<16x64xf32>
    %c328 = arith.constant 328 : index
    %c0_212 = arith.constant 0 : index
    %688 = vector.load %arg1[%c328, %c0_212] : memref<696x128xf32, #tpu.memory_space<vmem>>, vector<64x128xf32>
    %cst_213 = arith.constant dense<0.000000e+00> : vector<16x128xf32>
    %689 = tpu.matmul %687, %688, %cst_213 {dimension_numbers = #tpu.dot_dimension_numbers<[1], [0], [0], [1], [0, 0, 1, 1], [], []>} : vector<16x64xf32>, vector<64x128xf32>, vector<16x128xf32> -> vector<16x128xf32>
    %c676 = arith.constant 676 : index
    %c0_214 = arith.constant 0 : index
    %690 = vector.load %arg1[%c676, %c0_214] : memref<696x128xf32, #tpu.memory_space<vmem>>, vector<1x128xf32>
    %691 = vector.broadcast %690 : vector<1x128xf32> to vector<16x128xf32>
    %692 = arith.addf %689, %691 : vector<16x128xf32>
    %cst_215 = arith.constant dense<0.000000e+00> : vector<128xf32>
    %693 = vector.multi_reduction <add>, %692, %cst_215 [0] : vector<16x128xf32> to vector<128xf32>
    %694 = vector.shape_cast %693 : vector<128xf32> to vector<1x128xf32>
    %cst_216 = arith.constant 1.600000e+01 : f32
    %695 = vector.broadcast %cst_216 : f32 to vector<1x128xf32>
    %696 = arith.divf %694, %695 : vector<1x128xf32>
    %697 = vector.broadcast %696 : vector<1x128xf32> to vector<16x128xf32>
    %698 = arith.subf %692, %697 : vector<16x128xf32>
    %699 = arith.mulf %698, %698 : vector<16x128xf32>
    %cst_217 = arith.constant dense<0.000000e+00> : vector<128xf32>
    %700 = vector.multi_reduction <add>, %699, %cst_217 [0] : vector<16x128xf32> to vector<128xf32>
    %701 = vector.shape_cast %700 : vector<128xf32> to vector<1x128xf32>
    %cst_218 = arith.constant 1.600000e+01 : f32
    %702 = vector.broadcast %cst_218 : f32 to vector<1x128xf32>
    %703 = arith.divf %701, %702 : vector<1x128xf32>
    %704 = vector.broadcast %696 : vector<1x128xf32> to vector<16x128xf32>
    %705 = arith.subf %692, %704 : vector<16x128xf32>
    %cst_219 = arith.constant 9.99999974E-6 : f32
    %706 = vector.broadcast %cst_219 : f32 to vector<1x128xf32>
    %707 = arith.addf %703, %706 : vector<1x128xf32>
    %708 = math.rsqrt %707 : vector<1x128xf32>
    %709 = vector.broadcast %708 : vector<1x128xf32> to vector<16x128xf32>
    %710 = arith.mulf %705, %709 : vector<16x128xf32>
    %c677 = arith.constant 677 : index
    %c0_220 = arith.constant 0 : index
    %711 = vector.load %arg1[%c677, %c0_220] : memref<696x128xf32, #tpu.memory_space<vmem>>, vector<1x128xf32>
    %712 = vector.broadcast %711 : vector<1x128xf32> to vector<16x128xf32>
    %713 = arith.mulf %710, %712 : vector<16x128xf32>
    %c678 = arith.constant 678 : index
    %c0_221 = arith.constant 0 : index
    %714 = vector.load %arg1[%c678, %c0_221] : memref<696x128xf32, #tpu.memory_space<vmem>>, vector<1x128xf32>
    %715 = vector.broadcast %714 : vector<1x128xf32> to vector<16x128xf32>
    %716 = arith.addf %713, %715 : vector<16x128xf32>
    %c64_i32_222 = arith.constant 64 : i32
    %717 = tpu.dynamic_rotate %716 by %c64_i32_222 dim 1 : vector<16x128xf32>, i32 -> vector<16x128xf32>
    %cst_223 = arith.constant 5.000000e-01 : f32
    %718 = vector.broadcast %cst_223 : f32 to vector<16x128xf32>
    %719 = arith.mulf %718, %717 : vector<16x128xf32>
    %720 = math.tanh %719 : vector<16x128xf32>
    %cst_224 = arith.constant 5.000000e-01 : f32
    %721 = vector.broadcast %cst_224 : f32 to vector<16x128xf32>
    %722 = arith.mulf %721, %720 : vector<16x128xf32>
    %cst_225 = arith.constant 5.000000e-01 : f32
    %723 = vector.broadcast %cst_225 : f32 to vector<16x128xf32>
    %724 = arith.addf %722, %723 : vector<16x128xf32>
    %725 = arith.mulf %716, %724 : vector<16x128xf32>
    %726 = vector.extract_strided_slice %725 {offsets = [0, 0], sizes = [16, 64], strides = [1, 1]} : vector<16x128xf32> to vector<16x64xf32>
    %727 = arith.addf %687, %726 : vector<16x64xf32>
    %cst_226 = arith.constant 0.707106769 : f32
    %728 = vector.broadcast %cst_226 : f32 to vector<16x64xf32>
    %729 = arith.mulf %727, %728 : vector<16x64xf32>
    %c392 = arith.constant 392 : index
    %c0_227 = arith.constant 0 : index
    %730 = vector.load %arg1[%c392, %c0_227] : memref<696x128xf32, #tpu.memory_space<vmem>>, vector<64x128xf32>
    %cst_228 = arith.constant dense<0.000000e+00> : vector<16x128xf32>
    %731 = tpu.matmul %729, %730, %cst_228 {dimension_numbers = #tpu.dot_dimension_numbers<[1], [0], [0], [1], [0, 0, 1, 1], [], []>} : vector<16x64xf32>, vector<64x128xf32>, vector<16x128xf32> -> vector<16x128xf32>
    %c679 = arith.constant 679 : index
    %c0_229 = arith.constant 0 : index
    %732 = vector.load %arg1[%c679, %c0_229] : memref<696x128xf32, #tpu.memory_space<vmem>>, vector<1x128xf32>
    %733 = vector.broadcast %732 : vector<1x128xf32> to vector<16x128xf32>
    %734 = arith.addf %731, %733 : vector<16x128xf32>
    %cst_230 = arith.constant dense<0.000000e+00> : vector<128xf32>
    %735 = vector.multi_reduction <add>, %734, %cst_230 [0] : vector<16x128xf32> to vector<128xf32>
    %736 = vector.shape_cast %735 : vector<128xf32> to vector<1x128xf32>
    %cst_231 = arith.constant 1.600000e+01 : f32
    %737 = vector.broadcast %cst_231 : f32 to vector<1x128xf32>
    %738 = arith.divf %736, %737 : vector<1x128xf32>
    %739 = vector.broadcast %738 : vector<1x128xf32> to vector<16x128xf32>
    %740 = arith.subf %734, %739 : vector<16x128xf32>
    %741 = arith.mulf %740, %740 : vector<16x128xf32>
    %cst_232 = arith.constant dense<0.000000e+00> : vector<128xf32>
    %742 = vector.multi_reduction <add>, %741, %cst_232 [0] : vector<16x128xf32> to vector<128xf32>
    %743 = vector.shape_cast %742 : vector<128xf32> to vector<1x128xf32>
    %cst_233 = arith.constant 1.600000e+01 : f32
    %744 = vector.broadcast %cst_233 : f32 to vector<1x128xf32>
    %745 = arith.divf %743, %744 : vector<1x128xf32>
    %746 = vector.broadcast %738 : vector<1x128xf32> to vector<16x128xf32>
    %747 = arith.subf %734, %746 : vector<16x128xf32>
    %cst_234 = arith.constant 9.99999974E-6 : f32
    %748 = vector.broadcast %cst_234 : f32 to vector<1x128xf32>
    %749 = arith.addf %745, %748 : vector<1x128xf32>
    %750 = math.rsqrt %749 : vector<1x128xf32>
    %751 = vector.broadcast %750 : vector<1x128xf32> to vector<16x128xf32>
    %752 = arith.mulf %747, %751 : vector<16x128xf32>
    %c680 = arith.constant 680 : index
    %c0_235 = arith.constant 0 : index
    %753 = vector.load %arg1[%c680, %c0_235] : memref<696x128xf32, #tpu.memory_space<vmem>>, vector<1x128xf32>
    %754 = vector.broadcast %753 : vector<1x128xf32> to vector<16x128xf32>
    %755 = arith.mulf %752, %754 : vector<16x128xf32>
    %c681 = arith.constant 681 : index
    %c0_236 = arith.constant 0 : index
    %756 = vector.load %arg1[%c681, %c0_236] : memref<696x128xf32, #tpu.memory_space<vmem>>, vector<1x128xf32>
    %757 = vector.broadcast %756 : vector<1x128xf32> to vector<16x128xf32>
    %758 = arith.addf %755, %757 : vector<16x128xf32>
    %c64_i32_237 = arith.constant 64 : i32
    %759 = tpu.dynamic_rotate %758 by %c64_i32_237 dim 1 : vector<16x128xf32>, i32 -> vector<16x128xf32>
    %cst_238 = arith.constant 5.000000e-01 : f32
    %760 = vector.broadcast %cst_238 : f32 to vector<16x128xf32>
    %761 = arith.mulf %760, %759 : vector<16x128xf32>
    %762 = math.tanh %761 : vector<16x128xf32>
    %cst_239 = arith.constant 5.000000e-01 : f32
    %763 = vector.broadcast %cst_239 : f32 to vector<16x128xf32>
    %764 = arith.mulf %763, %762 : vector<16x128xf32>
    %cst_240 = arith.constant 5.000000e-01 : f32
    %765 = vector.broadcast %cst_240 : f32 to vector<16x128xf32>
    %766 = arith.addf %764, %765 : vector<16x128xf32>
    %767 = arith.mulf %758, %766 : vector<16x128xf32>
    %768 = vector.extract_strided_slice %767 {offsets = [0, 0], sizes = [16, 64], strides = [1, 1]} : vector<16x128xf32> to vector<16x64xf32>
    %769 = arith.addf %729, %768 : vector<16x64xf32>
    %cst_241 = arith.constant 0.707106769 : f32
    %770 = vector.broadcast %cst_241 : f32 to vector<16x64xf32>
    %771 = arith.mulf %769, %770 : vector<16x64xf32>
    %cst_242 = arith.constant 0.000000e+00 : f32
    %772 = vector.broadcast %cst_242 : f32 to vector<16x64xf32>
    %773 = arith.maximumf %771, %772 : vector<16x64xf32>
    %774 = arith.addf %483, %773 : vector<16x64xf32>
    %c584 = arith.constant 584 : index
    %c0_243 = arith.constant 0 : index
    %775 = vector.load %arg1[%c584, %c0_243] : memref<696x128xf32, #tpu.memory_space<vmem>>, vector<64x128xf32>
    %cst_244 = arith.constant dense<0.000000e+00> : vector<16x128xf32>
    %776 = tpu.matmul %774, %775, %cst_244 {dimension_numbers = #tpu.dot_dimension_numbers<[1], [0], [0], [1], [0, 0, 1, 1], [], []>} : vector<16x64xf32>, vector<64x128xf32>, vector<16x128xf32> -> vector<16x128xf32>
    %c688 = arith.constant 688 : index
    %c0_245 = arith.constant 0 : index
    %777 = vector.load %arg1[%c688, %c0_245] : memref<696x128xf32, #tpu.memory_space<vmem>>, vector<1x128xf32>
    %778 = vector.broadcast %777 : vector<1x128xf32> to vector<16x128xf32>
    %779 = arith.addf %776, %778 : vector<16x128xf32>
    %c0_246 = arith.constant 0 : index
    %c0_247 = arith.constant 0 : index
    %780 = vector.load %arg2[%c0_246, %c0_247] : memref<24x128xf32, #tpu.memory_space<vmem>>, vector<16x128xf32>
    tpu.vector_store %arg2[%c0_246, %c0_247], %779 {strides = array<i32>} : memref<24x128xf32, #tpu.memory_space<vmem>>, vector<16x128xf32>,
    %781 = vector.shape_cast %605 : vector<1x1xf32> to vector<1x1xf32>
    %782 = vector.broadcast %781 : vector<1x1xf32> to vector<8x128xf32>
    %c16_248 = arith.constant 16 : index
    %c0_249 = arith.constant 0 : index
    %783 = vector.load %arg2[%c16_248, %c0_249] : memref<24x128xf32, #tpu.memory_space<vmem>>, vector<8x128xf32>
    tpu.vector_store %arg2[%c16_248, %c0_249], %782 {strides = array<i32>} : memref<24x128xf32, #tpu.memory_space<vmem>>, vector<8x128xf32>,
    return
  }
}

</mosaic_0001>

<llo_original>
// kernel: tabnet_pallas.1
$region0: #{tabnet_pallas.1}
  #allocation0 [shape = 'u32[]', space=smem, size = 0x4, offset = 0x4, fixed_abs, tag = 'smem constant byte address 0x4 - core index']
  #allocation1 [shape = 'u32[144,128]{1,0:T(1,128)}', space=vmem, size = 0x12000, scoped, tag = 'internal scratch']
  %s0 = inlined_call_operand.vmem [shape: f32[32,6], index: 0, kind: input, shape index: {}]
  %s1 = inlined_call_operand.vmem [shape: f32[696,128], index: 1, kind: input, shape index: {}]
  %s2 = inlined_call_operand.vmem [shape: f32[24,128], index: 2, kind: output, shape index: {}]
  %s3 = sld [smem:[#allocation0]]
  $region18: #{tabnet_pallas.1} parent=0
    _
  %s5 = ssub.s32 1, %s3
  %s6 = scalar_select 0, %s5, %s3
  // Predicated region
  $region2: #{tabnet_pallas.1} parent=0 // pred_check
    _
  $region3: #{tabnet_pallas.1} parent=0 // pred_check_branch
    %8 = sbr.rel (0) target = $region5
  $region4: #{tabnet_pallas.1} parent=0 // pred_region
    _
  $region5: #{tabnet_pallas.1} parent=0 // pred_fallthru
    _
  // Predicated region
  $region6: #{tabnet_pallas.1} parent=0 // pred_check
    _
  $region7: #{tabnet_pallas.1} parent=0 // pred_check_branch
    %10 = sbr.rel (0) target = $region9
  $region8: #{tabnet_pallas.1} parent=0 // pred_region
    _
  $region9: #{tabnet_pallas.1} parent=0 // pred_fallthru
    _
  %v11 = vld [vmem:[%s0] sm:$0xff]
  %v12 = vld [vmem:[%s0 + $0x8] sm:$0xff]
  %v13 = vld [vmem:[%s0 + $0x10] sm:$0xff]
  %v14 = vld [vmem:[%s0 + $0x18] sm:$0xff]
  %vm15 = vcmask 48128
  %v16 = vsel %vm15, %v11, 0.0
  %v17 = vsel %vm15, %v12, 0.0
  %v18 = vadd.f32 %v16, %v17
  %v19 = vrot.slane %v18, 4
  %v20 = vadd.f32 %v18, %v19
  %v21 = vrot.slane %v20, 2
  %v22 = vadd.f32 %v20, %v21
  %v23 = vrot.slane %v22, 1
  %v24 = vadd.f32 %v22, %v23
  %v25 = vrcp.pop 16.0
  %v26 = vmul.f32 %v24, %v25
  %v27 = vsub.f32 %v11, %v26
  %v28 = vsub.f32 %v12, %v26
  %v29 = vmul.f32 %v27, %v27
  %v30 = vmul.f32 %v28, %v28
  %v31 = vsel %vm15, %v29, 0.0
  %v32 = vsel %vm15, %v30, 0.0
  %v33 = vadd.f32 %v31, %v32
  %v34 = vrot.slane %v33, 4
  %v35 = vadd.f32 %v33, %v34
  %v36 = vrot.slane %v35, 2
  %v37 = vadd.f32 %v35, %v36
  %v38 = vrot.slane %v37, 1
  %v39 = vadd.f32 %v37, %v38
  %v40 = vmul.f32 %v39, %v25
  %v41 = vadd.f32 %v40, 1e-05
  %v42 = vrsqrt.pop %v41
  %v43 = vmul.f32 %v27, %v42
  %v44 = vmul.f32 %v28, %v42
  %v45 = vld [vmem:[%s1 + $0x288] sm:$0x1]
  %v46 = vlaneseq
  %v47 = vshrl.u32 %v46, 7
  %v48 = vsub.s32 0, %v47
  %v49 = vrot.slane %v45, %v48
  %v50 = vmul.f32 %v43, %v49
  %v51 = vmul.f32 %v44, %v49
  %v52 = vld [vmem:[%s1 + $0x289] sm:$0x1]
  %v53 = vlaneseq
  %v54 = vshrl.u32 %v53, 7
  %v55 = vsub.s32 0, %v54
  %v56 = vrot.slane %v52, %v55
  %v57 = vadd.f32 %v50, %v56
  %v58 = vadd.f32 %v51, %v56
  %v59 = vld [vmem:[%s1] sm:$0x3f]
  %v60 = vld [vmem:[%s1 + $0x28a] sm:$0x1]
  %v61 = vlaneseq
  %v62 = vshrl.u32 %v61, 7
  %v63 = vsub.s32 0, %v62
  %v64 = vrot.slane %v60, %v63
  %v66 = vsel %vm15, %v57, 0
  %v69 = vsel %vm15, %v58, 0
  %vm71 = vcmask 1045504
  %v73 = vsel %vm71, %v59, 0
  %75 = vmatprep.subr.mxu0 0.0
  %76 = vmatpush1.msra.mxu0 %v73
  %77 = vmatprep.subr.mxu0 0.0
  %78 = vmatpush1.msra.mxu0 0.0
  %79 = vmatprep.subr.mxu0 0.0
  %80 = vmatpush1.msra.mxu0 0.0
  %81 = vmatprep.subr.mxu0 0.0
  %82 = vmatpush1.msra.mxu0 0.0
  %83 = vmatprep.subr.mxu0 0.0
  %84 = vmatpush1.msra.mxu0 0.0
  %85 = vmatprep.subr.mxu0 0.0
  %86 = vmatpush1.msra.mxu0 0.0
  %87 = vmatprep.subr.mxu0 0.0
  %88 = vmatpush1.msra.mxu0 0.0
  %89 = vmatprep.subr.mxu0 0.0
  %90 = vmatpush1.msra.mxu0 0.0
  %91 = vmatprep.subr.mxu0 0.0
  %92 = vmatpush1.msra.mxu0 0.0
  %93 = vmatprep.subr.mxu0 0.0
  %94 = vmatpush1.msra.mxu0 0.0
  %95 = vmatprep.subr.mxu0 0.0
  %96 = vmatpush1.msra.mxu0 0.0
  %97 = vmatprep.subr.mxu0 0.0
  %98 = vmatpush1.msra.mxu0 0.0
  %99 = vmatprep.subr.mxu0 0.0
  %100 = vmatpush1.msra.mxu0 0.0
  %101 = vmatprep.subr.mxu0 0.0
  %102 = vmatpush1.msra.mxu0 0.0
  %103 = vmatprep.subr.mxu0 0.0
  %104 = vmatpush1.msra.mxu0 0.0
  %105 = vmatprep.subr.mxu0 0.0
  %106 = vmatpush1.msra.mxu0 0.0
  %107 = vmatprep.subr.mxu0 0.0
  %108 = vmatpush1.msra.mxu0 0.0
  %109 = vmatprep.subr.mxu0 0.0
  %110 = vmatpush1.msra.mxu0 0.0
  %111 = vmatprep.subr.mxu0 0.0
  %112 = vmatpush1.msra.mxu0 0.0
  %113 = vmatprep.subr.mxu0 0.0
  %114 = vmatpush1.msra.mxu0 0.0
  %115 = vmatprep.subr.mxu0 0.0
  %116 = vmatpush1.msra.mxu0 0.0
  %117 = vmatprep.subr.mxu0 0.0
  %118 = vmatpush1.msra.mxu0 0.0
  %119 = vmatprep.subr.mxu0 0.0
  %120 = vmatpush1.msra.mxu0 0.0
  %121 = vmatprep.subr.mxu0 0.0
  %122 = vmatpush1.msra.mxu0 0.0
  %123 = vmatprep.subr.mxu0 0.0
  %124 = vmatpush1.msra.mxu0 0.0
  %125 = vmatprep.subr.mxu0 0.0
  %126 = vmatpush1.msra.mxu0 0.0
  %127 = vmatprep.subr.mxu0 0.0
  %128 = vmatpush1.msra.mxu0 0.0
  %129 = vmatprep.subr.mxu0 0.0
  %130 = vmatpush1.msra.mxu0 0.0
  %131 = vmatprep.subr.mxu0 0.0
  %132 = vmatpush1.msra.mxu0 0.0
  %133 = vmatprep.subr.mxu0 0.0
  %134 = vmatpush1.msra.mxu0 0.0
  %135 = vmatprep.subr.mxu0 0.0
  %136 = vmatpush1.msra.mxu0 0.0
  %137 = vmatprep.subr.mxu0 0.0
  %138 = vmatpush1.msra.mxu0 0.0
  %139 = vmatprep.mubr.f32.mxu0 0.0
  %140 = vmatmul.mubr.f32.gmra.mrb[0].mxu0 %v66
  %v141 = vpop.f32.mrb[0].mxu0
  %v142 = vadd.f32 %v64, %v141
  %v143 = vpop.f32.mrb[0].mxu0
  %144 = vmatprep.mubr.f32.mxu0 0.0
  %145 = vmatmul.mubr.f32.gmra.mrb[0].mxu0 %v69
  %v146 = vpop.f32.mrb[0].mxu0
  %v147 = vadd.f32 %v64, %v146
  %v148 = vpop.f32.mrb[0].mxu0
  %149 = vdwg.mxu0
  %v150 = vadd.f32 %v142, %v147
  %v151 = vrot.slane %v150, 4
  %v152 = vadd.f32 %v150, %v151
  %v153 = vrot.slane %v152, 2
  %v154 = vadd.f32 %v152, %v153
  %v155 = vrot.slane %v154, 1
  %v156 = vadd.f32 %v154, %v155
  %v157 = vmul.f32 %v156, %v25
  %v158 = vsub.f32 %v142, %v157
  %v159 = vsub.f32 %v147, %v157
  %v160 = vmul.f32 %v158, %v158
  %v161 = vmul.f32 %v159, %v159
  %v162 = vadd.f32 %v160, %v161
  %v163 = vrot.slane %v162, 4
  %v164 = vadd.f32 %v162, %v163
  %v165 = vrot.slane %v164, 2
  %v166 = vadd.f32 %v164, %v165
  %v167 = vrot.slane %v166, 1
  %v168 = vadd.f32 %v166, %v167
  %v169 = vmul.f32 %v168, %v25
  %v170 = vadd.f32 %v169, 1e-05
  %v171 = vrsqrt.pop %v170
  %v172 = vmul.f32 %v158, %v171
  %v173 = vmul.f32 %v159, %v171
  %v174 = vld [vmem:[%s1 + $0x28c] sm:$0x1]
  %v175 = vlaneseq
  %v176 = vshrl.u32 %v175, 7
  %v177 = vsub.s32 0, %v176
  %v178 = vrot.slane %v174, %v177
  %v179 = vmul.f32 %v172, %v178
  %v180 = vmul.f32 %v173, %v178
  %v181 = vld [vmem:[%s1 + $0x28d] sm:$0x1]
  %v182 = vlaneseq
  %v183 = vshrl.u32 %v182, 7
  %v184 = vsub.s32 0, %v183
  %v185 = vrot.slane %v181, %v184
  %v186 = vadd.f32 %v179, %v185
  %v187 = vadd.f32 %v180, %v185
  %188 = vrot.lane.b32.xlu0 %v186, 64
  %v189 = vpop.permute.xlu0 %188
  %190 = vrot.lane.b32.xlu0 %v187, 64
  %v191 = vpop.permute.xlu0 %190
  %v192 = vmul.f32 %v189, 0.5
  %v193 = vmul.f32 %v191, 0.5
  %v194 = vtanh.pop %v192
  %v195 = vtanh.pop %v193
  %v196 = vmul.f32 %v194, 0.5
  %v197 = vmul.f32 %v195, 0.5
  %v198 = vadd.f32 %v196, 0.5
  %v199 = vadd.f32 %v197, 0.5
  %v200 = vmul.f32 %v186, %v198
  %v201 = vmul.f32 %v187, %v199
  %v202 = vld [vmem:[%s1 + $0x8] sm:$0xff]
  %v203 = vld [vmem:[%s1 + $0x10] sm:$0xff]
  %v204 = vld [vmem:[%s1 + $0x18] sm:$0xff]
  %v205 = vld [vmem:[%s1 + $0x20] sm:$0xff]
  %v206 = vld [vmem:[%s1 + $0x28] sm:$0xff]
  %v207 = vld [vmem:[%s1 + $0x30] sm:$0xff]
  %v208 = vld [vmem:[%s1 + $0x38] sm:$0xff]
  %v209 = vld [vmem:[%s1 + $0x40] sm:$0xff]
  %v210 = vld [vmem:[%s1 + $0x28b] sm:$0x1]
  %v211 = vlaneseq
  %v212 = vshrl.u32 %v211, 7
  %v213 = vsub.s32 0, %v212
  %v214 = vrot.slane %v210, %v213
  %vm215 = vcmask 523264
  %v217 = vsel %vm215, %v200, 0
  %v220 = vsel %vm215, %v201, 0
  %222 = vmatprep.subr.mxu0 0.0
  %223 = vmatpush1.msra.mxu0 %v202
  %224 = vmatprep.subr.mxu0 0.0
  %225 = vmatpush1.msra.mxu0 %v203
  %226 = vmatprep.subr.mxu0 0.0
  %227 = vmatpush1.msra.mxu0 %v204
  %228 = vmatprep.subr.mxu0 0.0
  %229 = vmatpush1.msra.mxu0 %v205
  %230 = vmatprep.subr.mxu0 0.0
  %231 = vmatpush1.msra.mxu0 %v206
  %232 = vmatprep.subr.mxu0 0.0
  %233 = vmatpush1.msra.mxu0 %v207
  %234 = vmatprep.subr.mxu0 0.0
  %235 = vmatpush1.msra.mxu0 %v208
  %236 = vmatprep.subr.mxu0 0.0
  %237 = vmatpush1.msra.mxu0 %v209
  %238 = vmatprep.subr.mxu0 0.0
  %239 = vmatpush1.msra.mxu0 0.0
  %240 = vmatprep.subr.mxu0 0.0
  %241 = vmatpush1.msra.mxu0 0.0
  %242 = vmatprep.subr.mxu0 0.0
  %243 = vmatpush1.msra.mxu0 0.0
  %244 = vmatprep.subr.mxu0 0.0
  %245 = vmatpush1.msra.mxu0 0.0
  %246 = vmatprep.subr.mxu0 0.0
  %247 = vmatpush1.msra.mxu0 0.0
  %248 = vmatprep.subr.mxu0 0.0
  %249 = vmatpush1.msra.mxu0 0.0
  %250 = vmatprep.subr.mxu0 0.0
  %251 = vmatpush1.msra.mxu0 0.0
  %252 = vmatprep.subr.mxu0 0.0
  %253 = vmatpush1.msra.mxu0 0.0
  %254 = vmatprep.subr.mxu0 0.0
  %255 = vmatpush1.msra.mxu0 0.0
  %256 = vmatprep.subr.mxu0 0.0
  %257 = vmatpush1.msra.mxu0 0.0
  %258 = vmatprep.subr.mxu0 0.0
  %259 = vmatpush1.msra.mxu0 0.0
  %260 = vmatprep.subr.mxu0 0.0
  %261 = vmatpush1.msra.mxu0 0.0
  %262 = vmatprep.subr.mxu0 0.0
  %263 = vmatpush1.msra.mxu0 0.0
  %264 = vmatprep.subr.mxu0 0.0
  %265 = vmatpush1.msra.mxu0 0.0
  %266 = vmatprep.subr.mxu0 0.0
  %267 = vmatpush1.msra.mxu0 0.0
  %268 = vmatprep.subr.mxu0 0.0
  %269 = vmatpush1.msra.mxu0 0.0
  %270 = vmatprep.subr.mxu0 0.0
  %271 = vmatpush1.msra.mxu0 0.0
  %272 = vmatprep.subr.mxu0 0.0
  %273 = vmatpush1.msra.mxu0 0.0
  %274 = vmatprep.subr.mxu0 0.0
  %275 = vmatpush1.msra.mxu0 0.0
  %276 = vmatprep.subr.mxu0 0.0
  %277 = vmatpush1.msra.mxu0 0.0
  %278 = vmatprep.subr.mxu0 0.0
  %279 = vmatpush1.msra.mxu0 0.0
  %280 = vmatprep.subr.mxu0 0.0
  %281 = vmatpush1.msra.mxu0 0.0
  %282 = vmatprep.subr.mxu0 0.0
  %283 = vmatpush1.msra.mxu0 0.0
  %284 = vmatprep.subr.mxu0 0.0
  %285 = vmatpush1.msra.mxu0 0.0
  %286 = vmatprep.mubr.f32.mxu0 0.0
  %287 = vmatmul.mubr.f32.gmra.mrb[0].mxu0 %v217
  %v288 = vpop.f32.mrb[0].mxu0
  %v289 = vadd.f32 %v214, %v288
  %v290 = vpop.f32.mrb[0].mxu0
  %291 = vmatprep.mubr.f32.mxu0 0.0
  %292 = vmatmul.mubr.f32.gmra.mrb[0].mxu0 %v220
  %v293 = vpop.f32.mrb[0].mxu0
  %v294 = vadd.f32 %v214, %v293
  %v295 = vpop.f32.mrb[0].mxu0
  %296 = vdwg.mxu0
  %v297 = vadd.f32 %v289, %v294
  %v298 = vrot.slane %v297, 4
  %v299 = vadd.f32 %v297, %v298
  %v300 = vrot.slane %v299, 2
  %v301 = vadd.f32 %v299, %v300
  %v302 = vrot.slane %v301, 1
  %v303 = vadd.f32 %v301, %v302
  %v304 = vmul.f32 %v303, %v25
  %v305 = vsub.f32 %v289, %v304
  %v306 = vsub.f32 %v294, %v304
  %v307 = vmul.f32 %v305, %v305
  %v308 = vmul.f32 %v306, %v306
  %v309 = vadd.f32 %v307, %v308
  %v310 = vrot.slane %v309, 4
  %v311 = vadd.f32 %v309, %v310
  %v312 = vrot.slane %v311, 2
  %v313 = vadd.f32 %v311, %v312
  %v314 = vrot.slane %v313, 1
  %v315 = vadd.f32 %v313, %v314
  %v316 = vmul.f32 %v315, %v25
  %v317 = vadd.f32 %v316, 1e-05
  %v318 = vrsqrt.pop %v317
  %v319 = vmul.f32 %v305, %v318
  %v320 = vmul.f32 %v306, %v318
  %v321 = vld [vmem:[%s1 + $0x28e] sm:$0x1]
  %v322 = vlaneseq
  %v323 = vshrl.u32 %v322, 7
  %v324 = vsub.s32 0, %v323
  %v325 = vrot.slane %v321, %v324
  %v326 = vmul.f32 %v319, %v325
  %v327 = vmul.f32 %v320, %v325
  %v328 = vld [vmem:[%s1 + $0x28f] sm:$0x1]
  %v329 = vlaneseq
  %v330 = vshrl.u32 %v329, 7
  %v331 = vsub.s32 0, %v330
  %v332 = vrot.slane %v328, %v331
  %v333 = vadd.f32 %v326, %v332
  %v334 = vadd.f32 %v327, %v332
  %335 = vrot.lane.b32.xlu0 %v333, 64
  %v336 = vpop.permute.xlu0 %335
  %337 = vrot.lane.b32.xlu0 %v334, 64
  %v338 = vpop.permute.xlu0 %337
  %v339 = vmul.f32 %v336, 0.5
  %v340 = vmul.f32 %v338, 0.5
  %v341 = vtanh.pop %v339
  %v342 = vtanh.pop %v340
  %v343 = vmul.f32 %v341, 0.5
  %v344 = vmul.f32 %v342, 0.5
  %v345 = vadd.f32 %v343, 0.5
  %v346 = vadd.f32 %v344, 0.5
  %v347 = vmul.f32 %v333, %v345
  %v348 = vmul.f32 %v334, %v346
  %v349 = vadd.f32 %v200, %v347
  %v350 = vadd.f32 %v201, %v348
  %v351 = vmul.f32 %v349, 0.70710677
  %v352 = vmul.f32 %v350, 0.70710677
  %v353 = vld [vmem:[%s1 + $0x48] sm:$0xff]
  %v354 = vld [vmem:[%s1 + $0x50] sm:$0xff]
  %v355 = vld [vmem:[%s1 + $0x58] sm:$0xff]
  %v356 = vld [vmem:[%s1 + $0x60] sm:$0xff]
  %v357 = vld [vmem:[%s1 + $0x68] sm:$0xff]
  %v358 = vld [vmem:[%s1 + $0x70] sm:$0xff]
  %v359 = vld [vmem:[%s1 + $0x78] sm:$0xff]
  %v360 = vld [vmem:[%s1 + $0x80] sm:$0xff]
  %v361 = vld [vmem:[%s1 + $0x290] sm:$0x1]
  %v362 = vlaneseq
  %v363 = vshrl.u32 %v362, 7
  %v364 = vsub.s32 0, %v363
  %v365 = vrot.slane %v361, %v364
  %v367 = vsel %vm215, %v351, 0
  %v370 = vsel %vm215, %v352, 0
  %372 = vmatprep.subr.mxu0 0.0
  %373 = vmatpush1.msra.mxu0 %v353
  %374 = vmatprep.subr.mxu0 0.0
  %375 = vmatpush1.msra.mxu0 %v354
  %376 = vmatprep.subr.mxu0 0.0
  %377 = vmatpush1.msra.mxu0 %v355
  %378 = vmatprep.subr.mxu0 0.0
  %379 = vmatpush1.msra.mxu0 %v356
  %380 = vmatprep.subr.mxu0 0.0
  %381 = vmatpush1.msra.mxu0 %v357
  %382 = vmatprep.subr.mxu0 0.0
  %383 = vmatpush1.msra.mxu0 %v358
  %384 = vmatprep.subr.mxu0 0.0
  %385 = vmatpush1.msra.mxu0 %v359
  %386 = vmatprep.subr.mxu0 0.0
  %387 = vmatpush1.msra.mxu0 %v360
  %388 = vmatprep.subr.mxu0 0.0
  %389 = vmatpush1.msra.mxu0 0.0
  %390 = vmatprep.subr.mxu0 0.0
  %391 = vmatpush1.msra.mxu0 0.0
  %392 = vmatprep.subr.mxu0 0.0
  %393 = vmatpush1.msra.mxu0 0.0
  %394 = vmatprep.subr.mxu0 0.0
  %395 = vmatpush1.msra.mxu0 0.0
  %396 = vmatprep.subr.mxu0 0.0
  %397 = vmatpush1.msra.mxu0 0.0
  %398 = vmatprep.subr.mxu0 0.0
  %399 = vmatpush1.msra.mxu0 0.0
  %400 = vmatprep.subr.mxu0 0.0
  %401 = vmatpush1.msra.mxu0 0.0
  %402 = vmatprep.subr.mxu0 0.0
  %403 = vmatpush1.msra.mxu0 0.0
  %404 = vmatprep.subr.mxu0 0.0
  %405 = vmatpush1.msra.mxu0 0.0
  %406 = vmatprep.subr.mxu0 0.0
  %407 = vmatpush1.msra.mxu0 0.0
  %408 = vmatprep.subr.mxu0 0.0
  %409 = vmatpush1.msra.mxu0 0.0
  %410 = vmatprep.subr.mxu0 0.0
  %411 = vmatpush1.msra.mxu0 0.0
  %412 = vmatprep.subr.mxu0 0.0
  %413 = vmatpush1.msra.mxu0 0.0
  %414 = vmatprep.subr.mxu0 0.0
  %415 = vmatpush1.msra.mxu0 0.0
  %416 = vmatprep.subr.mxu0 0.0
  %417 = vmatpush1.msra.mxu0 0.0
  %418 = vmatprep.subr.mxu0 0.0
  %419 = vmatpush1.msra.mxu0 0.0
  %420 = vmatprep.subr.mxu0 0.0
  %421 = vmatpush1.msra.mxu0 0.0
  %422 = vmatprep.subr.mxu0 0.0
  %423 = vmatpush1.msra.mxu0 0.0
  %424 = vmatprep.subr.mxu0 0.0
  %425 = vmatpush1.msra.mxu0 0.0
  %426 = vmatprep.subr.mxu0 0.0
  %427 = vmatpush1.msra.mxu0 0.0
  %428 = vmatprep.subr.mxu0 0.0
  %429 = vmatpush1.msra.mxu0 0.0
  %430 = vmatprep.subr.mxu0 0.0
  %431 = vmatpush1.msra.mxu0 0.0
  %432 = vmatprep.subr.mxu0 0.0
  %433 = vmatpush1.msra.mxu0 0.0
  %434 = vmatprep.subr.mxu0 0.0
  %435 = vmatpush1.msra.mxu0 0.0
  %436 = vmatprep.mubr.f32.mxu0 0.0
  %437 = vmatmul.mubr.f32.gmra.mrb[0].mxu0 %v367
  %v438 = vpop.f32.mrb[0].mxu0
  %v439 = vadd.f32 %v365, %v438
  %v440 = vpop.f32.mrb[0].mxu0
  %441 = vmatprep.mubr.f32.mxu0 0.0
  %442 = vmatmul.mubr.f32.gmra.mrb[0].mxu0 %v370
  %v443 = vpop.f32.mrb[0].mxu0
  %v444 = vadd.f32 %v365, %v443
  %v445 = vpop.f32.mrb[0].mxu0
  %446 = vdwg.mxu0
  %v447 = vadd.f32 %v439, %v444
  %v448 = vrot.slane %v447, 4
  %v449 = vadd.f32 %v447, %v448
  %v450 = vrot.slane %v449, 2
  %v451 = vadd.f32 %v449, %v450
  %v452 = vrot.slane %v451, 1
  %v453 = vadd.f32 %v451, %v452
  %v454 = vmul.f32 %v453, %v25
  %v455 = vsub.f32 %v439, %v454
  %v456 = vsub.f32 %v444, %v454
  %v457 = vmul.f32 %v455, %v455
  %v458 = vmul.f32 %v456, %v456
  %v459 = vadd.f32 %v457, %v458
  %v460 = vrot.slane %v459, 4
  %v461 = vadd.f32 %v459, %v460
  %v462 = vrot.slane %v461, 2
  %v463 = vadd.f32 %v461, %v462
  %v464 = vrot.slane %v463, 1
  %v465 = vadd.f32 %v463, %v464
  %v466 = vmul.f32 %v465, %v25
  %v467 = vadd.f32 %v466, 1e-05
  %v468 = vrsqrt.pop %v467
  %v469 = vmul.f32 %v455, %v468
  %v470 = vmul.f32 %v456, %v468
  %v471 = vld [vmem:[%s1 + $0x291] sm:$0x1]
  %v472 = vlaneseq
  %v473 = vshrl.u32 %v472, 7
  %v474 = vsub.s32 0, %v473
  %v475 = vrot.slane %v471, %v474
  %v476 = vmul.f32 %v469, %v475
  %v477 = vmul.f32 %v470, %v475
  %v478 = vld [vmem:[%s1 + $0x292] sm:$0x1]
  %v479 = vlaneseq
  %v480 = vshrl.u32 %v479, 7
  %v481 = vsub.s32 0, %v480
  %v482 = vrot.slane %v478, %v481
  %v483 = vadd.f32 %v476, %v482
  %v484 = vadd.f32 %v477, %v482
  %485 = vrot.lane.b32.xlu0 %v483, 64
  %v486 = vpop.permute.xlu0 %485
  %487 = vrot.lane.b32.xlu0 %v484, 64
  %v488 = vpop.permute.xlu0 %487
  %v489 = vmul.f32 %v486, 0.5
  %v490 = vmul.f32 %v488, 0.5
  %v491 = vtanh.pop %v489
  %v492 = vtanh.pop %v490
  %v493 = vmul.f32 %v491, 0.5
  %v494 = vmul.f32 %v492, 0.5
  %v495 = vadd.f32 %v493, 0.5
  %v496 = vadd.f32 %v494, 0.5
  %v497 = vmul.f32 %v483, %v495
  %v498 = vmul.f32 %v484, %v496
  %v499 = vadd.f32 %v351, %v497
  %v500 = vadd.f32 %v352, %v498
  %v501 = vmul.f32 %v499, 0.70710677
  %v502 = vmul.f32 %v500, 0.70710677
  %v503 = vld [vmem:[%s1 + $0x88] sm:$0xff]
  %v504 = vld [vmem:[%s1 + $0x90] sm:$0xff]
  %v505 = vld [vmem:[%s1 + $0x98] sm:$0xff]
  %v506 = vld [vmem:[%s1 + $0xa0] sm:$0xff]
  %v507 = vld [vmem:[%s1 + $0xa8] sm:$0xff]
  %v508 = vld [vmem:[%s1 + $0xb0] sm:$0xff]
  %v509 = vld [vmem:[%s1 + $0xb8] sm:$0xff]
  %v510 = vld [vmem:[%s1 + $0xc0] sm:$0xff]
  %v511 = vld [vmem:[%s1 + $0x293] sm:$0x1]
  %v512 = vlaneseq
  %v513 = vshrl.u32 %v512, 7
  %v514 = vsub.s32 0, %v513
  %v515 = vrot.slane %v511, %v514
  %v517 = vsel %vm215, %v501, 0
  %v520 = vsel %vm215, %v502, 0
  %522 = vmatprep.subr.mxu0 0.0
  %523 = vmatpush1.msra.mxu0 %v503
  %524 = vmatprep.subr.mxu0 0.0
  %525 = vmatpush1.msra.mxu0 %v504
  %526 = vmatprep.subr.mxu0 0.0
  %527 = vmatpush1.msra.mxu0 %v505
  %528 = vmatprep.subr.mxu0 0.0
  %529 = vmatpush1.msra.mxu0 %v506
  %530 = vmatprep.subr.mxu0 0.0
  %531 = vmatpush1.msra.mxu0 %v507
  %532 = vmatprep.subr.mxu0 0.0
  %533 = vmatpush1.msra.mxu0 %v508
  %534 = vmatprep.subr.mxu0 0.0
  %535 = vmatpush1.msra.mxu0 %v509
  %536 = vmatprep.subr.mxu0 0.0
  %537 = vmatpush1.msra.mxu0 %v510
  %538 = vmatprep.subr.mxu0 0.0
  %539 = vmatpush1.msra.mxu0 0.0
  %540 = vmatprep.subr.mxu0 0.0
  %541 = vmatpush1.msra.mxu0 0.0
  %542 = vmatprep.subr.mxu0 0.0
  %543 = vmatpush1.msra.mxu0 0.0
  %544 = vmatprep.subr.mxu0 0.0
  %545 = vmatpush1.msra.mxu0 0.0
  %546 = vmatprep.subr.mxu0 0.0
  %547 = vmatpush1.msra.mxu0 0.0
  %548 = vmatprep.subr.mxu0 0.0
  %549 = vmatpush1.msra.mxu0 0.0
  %550 = vmatprep.subr.mxu0 0.0
  %551 = vmatpush1.msra.mxu0 0.0
  %552 = vmatprep.subr.mxu0 0.0
  %553 = vmatpush1.msra.mxu0 0.0
  %554 = vmatprep.subr.mxu0 0.0
  %555 = vmatpush1.msra.mxu0 0.0
  %556 = vmatprep.subr.mxu0 0.0
  %557 = vmatpush1.msra.mxu0 0.0
  %558 = vmatprep.subr.mxu0 0.0
  %559 = vmatpush1.msra.mxu0 0.0
  %560 = vmatprep.subr.mxu0 0.0
  %561 = vmatpush1.msra.mxu0 0.0
  %562 = vmatprep.subr.mxu0 0.0
  %563 = vmatpush1.msra.mxu0 0.0
  %564 = vmatprep.subr.mxu0 0.0
  %565 = vmatpush1.msra.mxu0 0.0
  %566 = vmatprep.subr.mxu0 0.0
  %567 = vmatpush1.msra.mxu0 0.0
  %568 = vmatprep.subr.mxu0 0.0
  %569 = vmatpush1.msra.mxu0 0.0
  %570 = vmatprep.subr.mxu0 0.0
  %571 = vmatpush1.msra.mxu0 0.0
  %572 = vmatprep.subr.mxu0 0.0
  %573 = vmatpush1.msra.mxu0 0.0
  %574 = vmatprep.subr.mxu0 0.0
  %575 = vmatpush1.msra.mxu0 0.0
  %576 = vmatprep.subr.mxu0 0.0
  %577 = vmatpush1.msra.mxu0 0.0
  %578 = vmatprep.subr.mxu0 0.0
  %579 = vmatpush1.msra.mxu0 0.0
  %580 = vmatprep.subr.mxu0 0.0
  %581 = vmatpush1.msra.mxu0 0.0
  %582 = vmatprep.subr.mxu0 0.0
  %583 = vmatpush1.msra.mxu0 0.0
  %584 = vmatprep.subr.mxu0 0.0
  %585 = vmatpush1.msra.mxu0 0.0
  %586 = vmatprep.mubr.f32.mxu0 0.0
  %587 = vmatmul.mubr.f32.gmra.mrb[0].mxu0 %v517
  %v588 = vpop.f32.mrb[0].mxu0
  %v589 = vadd.f32 %v515, %v588
  %v590 = vpop.f32.mrb[0].mxu0
  %591 = vmatprep.mubr.f32.mxu0 0.0
  %592 = vmatmul.mubr.f32.gmra.mrb[0].mxu0 %v520
  %v593 = vpop.f32.mrb[0].mxu0
  %v594 = vadd.f32 %v515, %v593
  %v595 = vpop.f32.mrb[0].mxu0
  %596 = vdwg.mxu0
  %v597 = vadd.f32 %v589, %v594
  %v598 = vrot.slane %v597, 4
  %v599 = vadd.f32 %v597, %v598
  %v600 = vrot.slane %v599, 2
  %v601 = vadd.f32 %v599, %v600
  %v602 = vrot.slane %v601, 1
  %v603 = vadd.f32 %v601, %v602
  %v604 = vmul.f32 %v603, %v25
  %v605 = vsub.f32 %v589, %v604
  %v606 = vsub.f32 %v594, %v604
  %v607 = vmul.f32 %v605, %v605
  %v608 = vmul.f32 %v606, %v606
  %v609 = vadd.f32 %v607, %v608
  %v610 = vrot.slane %v609, 4
  %v611 = vadd.f32 %v609, %v610
  %v612 = vrot.slane %v611, 2
  %v613 = vadd.f32 %v611, %v612
  %v614 = vrot.slane %v613, 1
  %v615 = vadd.f32 %v613, %v614
  %v616 = vmul.f32 %v615, %v25
  %v617 = vadd.f32 %v616, 1e-05
  %v618 = vrsqrt.pop %v617
  %v619 = vmul.f32 %v605, %v618
  %v620 = vmul.f32 %v606, %v618
  %v621 = vld [vmem:[%s1 + $0x294] sm:$0x1]
  %v622 = vlaneseq
  %v623 = vshrl.u32 %v622, 7
  %v624 = vsub.s32 0, %v623
  %v625 = vrot.slane %v621, %v624
  %v626 = vmul.f32 %v619, %v625
  %v627 = vmul.f32 %v620, %v625
  %v628 = vld [vmem:[%s1 + $0x295] sm:$0x1]
  %v629 = vlaneseq
  %v630 = vshrl.u32 %v629, 7
  %v631 = vsub.s32 0, %v630
  %v632 = vrot.slane %v628, %v631
  %v633 = vadd.f32 %v626, %v632
  %v634 = vadd.f32 %v627, %v632
  %635 = vrot.lane.b32.xlu0 %v633, 64
  %v636 = vpop.permute.xlu0 %635
  %637 = vrot.lane.b32.xlu0 %v634, 64
  %v638 = vpop.permute.xlu0 %637
  %v639 = vmul.f32 %v636, 0.5
  %v640 = vmul.f32 %v638, 0.5
  %v641 = vtanh.pop %v639
  %v642 = vtanh.pop %v640
  %v643 = vmul.f32 %v641, 0.5
  %v644 = vmul.f32 %v642, 0.5
  %v645 = vadd.f32 %v643, 0.5
  %v646 = vadd.f32 %v644, 0.5
  %v647 = vmul.f32 %v633, %v645
  %v648 = vmul.f32 %v634, %v646
  %v649 = vadd.f32 %v501, %v647
  %v650 = vadd.f32 %v502, %v648
  %v651 = vmul.f32 %v649, 0.70710677
  %v652 = vmul.f32 %v650, 0.70710677
  %v653 = vld [vmem:[%s1 + $0x1c8] sm:$0xff]
  %v654 = vld [vmem:[%s1 + $0x1d0] sm:$0xff]
  %v655 = vld [vmem:[%s1 + $0x1d8] sm:$0xff]
  %v656 = vld [vmem:[%s1 + $0x1e0] sm:$0xff]
  %v657 = vld [vmem:[%s1 + $0x1e8] sm:$0xff]
  %v658 = vld [vmem:[%s1 + $0x1f0] sm:$0xff]
  %v659 = vld [vmem:[%s1 + $0x1f8] sm:$0xff]
  %v660 = vld [vmem:[%s1 + $0x200] sm:$0xff]
  %v662 = vsel %vm215, %v651, 0
  %v665 = vsel %vm215, %v652, 0
  %667 = vmatprep.subr.mxu0 0.0
  %668 = vmatpush1.msra.mxu0 %v653
  %669 = vmatprep.subr.mxu0 0.0
  %670 = vmatpush1.msra.mxu0 %v654
  %671 = vmatprep.subr.mxu0 0.0
  %672 = vmatpush1.msra.mxu0 %v655
  %673 = vmatprep.subr.mxu0 0.0
  %674 = vmatpush1.msra.mxu0 %v656
  %675 = vmatprep.subr.mxu0 0.0
  %676 = vmatpush1.msra.mxu0 %v657
  %677 = vmatprep.subr.mxu0 0.0
  %678 = vmatpush1.msra.mxu0 %v658
  %679 = vmatprep.subr.mxu0 0.0
  %680 = vmatpush1.msra.mxu0 %v659
  %681 = vmatprep.subr.mxu0 0.0
  %682 = vmatpush1.msra.mxu0 %v660
  %683 = vmatprep.subr.mxu0 0.0
  %684 = vmatpush1.msra.mxu0 0.0
  %685 = vmatprep.subr.mxu0 0.0
  %686 = vmatpush1.msra.mxu0 0.0
  %687 = vmatprep.subr.mxu0 0.0
  %688 = vmatpush1.msra.mxu0 0.0
  %689 = vmatprep.subr.mxu0 0.0
  %690 = vmatpush1.msra.mxu0 0.0
  %691 = vmatprep.subr.mxu0 0.0
  %692 = vmatpush1.msra.mxu0 0.0
  %693 = vmatprep.subr.mxu0 0.0
  %694 = vmatpush1.msra.mxu0 0.0
  %695 = vmatprep.subr.mxu0 0.0
  %696 = vmatpush1.msra.mxu0 0.0
  %697 = vmatprep.subr.mxu0 0.0
  %698 = vmatpush1.msra.mxu0 0.0
  %699 = vmatprep.subr.mxu0 0.0
  %700 = vmatpush1.msra.mxu0 0.0
  %701 = vmatprep.subr.mxu0 0.0
  %702 = vmatpush1.msra.mxu0 0.0
  %703 = vmatprep.subr.mxu0 0.0
  %704 = vmatpush1.msra.mxu0 0.0
  %705 = vmatprep.subr.mxu0 0.0
  %706 = vmatpush1.msra.mxu0 0.0
  %707 = vmatprep.subr.mxu0 0.0
  %708 = vmatpush1.msra.mxu0 0.0
  %709 = vmatprep.subr.mxu0 0.0
  %710 = vmatpush1.msra.mxu0 0.0
  %711 = vmatprep.subr.mxu0 0.0
  %712 = vmatpush1.msra.mxu0 0.0
  %713 = vmatprep.subr.mxu0 0.0
  %714 = vmatpush1.msra.mxu0 0.0
  %715 = vmatprep.subr.mxu0 0.0
  %716 = vmatpush1.msra.mxu0 0.0
  %717 = vmatprep.subr.mxu0 0.0
  %718 = vmatpush1.msra.mxu0 0.0
  %719 = vmatprep.subr.mxu0 0.0
  %720 = vmatpush1.msra.mxu0 0.0
  %721 = vmatprep.subr.mxu0 0.0
  %722 = vmatpush1.msra.mxu0 0.0
  %723 = vmatprep.subr.mxu0 0.0
  %724 = vmatpush1.msra.mxu0 0.0
  %725 = vmatprep.subr.mxu0 0.0
  %726 = vmatpush1.msra.mxu0 0.0
  %727 = vmatprep.subr.mxu0 0.0
  %728 = vmatpush1.msra.mxu0 0.0
  %729 = vmatprep.subr.mxu0 0.0
  %730 = vmatpush1.msra.mxu0 0.0
  %731 = vmatprep.mubr.f32.mxu0 0.0
  %732 = vmatmul.mubr.f32.gmra.mrb[0].mxu0 %v662
  %v733 = vpop.f32.mrb[0].mxu0
  %v734 = vadd.f32 0.0, %v733
  %v735 = vpop.f32.mrb[0].mxu0
  %736 = vmatprep.mubr.f32.mxu0 0.0
  %737 = vmatmul.mubr.f32.gmra.mrb[0].mxu0 %v665
  %v738 = vpop.f32.mrb[0].mxu0
  %v739 = vadd.f32 0.0, %v738
  %v740 = vpop.f32.mrb[0].mxu0
  %741 = vdwg.mxu0
  %v742 = vld [vmem:[%s1 + $0x2aa] sm:$0x1]
  %v743 = vlaneseq
  %v744 = vshrl.u32 %v743, 7
  %v745 = vsub.s32 0, %v744
  %v746 = vrot.slane %v742, %v745
  %v747 = vadd.f32 %v734, %v746
  %v748 = vadd.f32 %v739, %v746
  %v749 = vsel %vm15, %v747, 0.0
  %v750 = vsel %vm15, %v748, 0.0
  %v751 = vadd.f32 %v749, %v750
  %v752 = vrot.slane %v751, 4
  %v753 = vadd.f32 %v751, %v752
  %v754 = vrot.slane %v753, 2
  %v755 = vadd.f32 %v753, %v754
  %v756 = vrot.slane %v755, 1
  %v757 = vadd.f32 %v755, %v756
  %v758 = vmul.f32 %v757, %v25
  %v759 = vsub.f32 %v747, %v758
  %v760 = vsub.f32 %v748, %v758
  %v761 = vmul.f32 %v759, %v759
  %v762 = vmul.f32 %v760, %v760
  %v763 = vsel %vm15, %v761, 0.0
  %v764 = vsel %vm15, %v762, 0.0
  %v765 = vadd.f32 %v763, %v764
  %v766 = vrot.slane %v765, 4
  %v767 = vadd.f32 %v765, %v766
  %v768 = vrot.slane %v767, 2
  %v769 = vadd.f32 %v767, %v768
  %v770 = vrot.slane %v769, 1
  %v771 = vadd.f32 %v769, %v770
  %v772 = vmul.f32 %v771, %v25
  %v773 = vadd.f32 %v772, 1e-05
  %v774 = vrsqrt.pop %v773
  %v775 = vmul.f32 %v759, %v774
  %v776 = vmul.f32 %v760, %v774
  %v777 = vld [vmem:[%s1 + $0x2ab] sm:$0x1]
  %v778 = vlaneseq
  %v779 = vshrl.u32 %v778, 7
  %v780 = vsub.s32 0, %v779
  %v781 = vrot.slane %v777, %v780
  %v782 = vmul.f32 %v775, %v781
  %v783 = vmul.f32 %v776, %v781
  %v784 = vld [vmem:[%s1 + $0x2ac] sm:$0x1]
  %v785 = vlaneseq
  %v786 = vshrl.u32 %v785, 7
  %v787 = vsub.s32 0, %v786
  %v788 = vrot.slane %v784, %v787
  %v789 = vadd.f32 %v782, %v788
  %v790 = vadd.f32 %v783, %v788
  %v791 = vmul.f32 %v789, %v13
  %v792 = vmul.f32 %v790, %v14
  %v793 = vsel %vm15, %v791, -inf
  %794 = vmax.xlane.f32.xlu0 %v793
  %v795 = vpop.xlane.xlu0 %794
  %v796 = vsel %vm15, %v792, -inf
  %797 = vmax.xlane.f32.xlu0 %v796
  %v798 = vpop.xlane.xlu0 %797
  %v799 = vsub.f32 %v791, %v795
  %v800 = vsub.f32 %v792, %v798
  %802 = vset.pattern.permute.xlu0 0
  %803 = vperm.xlu0 %802, %v799
  %v804 = vpop.permute.xlu0 %803
  %807 = vset.pattern.permute.xlu0 0
  %808 = vperm.xlu0 %807, %v800
  %v809 = vpop.permute.xlu0 %808
  %vm811 = vcmp.ge.f32.partialorder %v804, %v799
  %vm812 = vcmp.ge.f32.partialorder %v809, %v800
  %v813 = vsel %vm811, 1, 0
  %v814 = vsel %vm812, 1, 0
  %v815 = vcvt.s32.f32 %v813
  %v816 = vcvt.s32.f32 %v814
  %v817 = vadd.f32 %v815, 0.0
  %v818 = vadd.f32 %v816, 0.0
  %v819 = vmul.f32 %v815, %v804
  %v820 = vmul.f32 %v816, %v809
  %v821 = vadd.f32 %v819, 0.0
  %v822 = vadd.f32 %v820, 0.0
  %823 = vset.pattern.permute.xlu0 1
  %824 = vperm.xlu0 %823, %v799
  %v825 = vpop.permute.xlu0 %824
  %827 = vset.pattern.permute.xlu0 1
  %828 = vperm.xlu0 %827, %v800
  %v829 = vpop.permute.xlu0 %828
  %vm831 = vcmp.ge.f32.partialorder %v825, %v799
  %vm832 = vcmp.ge.f32.partialorder %v829, %v800
  %v833 = vsel %vm831, 1, 0
  %v834 = vsel %vm832, 1, 0
  %v835 = vcvt.s32.f32 %v833
  %v836 = vcvt.s32.f32 %v834
  %v837 = vadd.f32 %v817, %v835
  %v838 = vadd.f32 %v818, %v836
  %v839 = vmul.f32 %v835, %v825
  %v840 = vmul.f32 %v836, %v829
  %v841 = vadd.f32 %v821, %v839
  %v842 = vadd.f32 %v822, %v840
  %843 = vset.pattern.permute.xlu0 2
  %844 = vperm.xlu0 %843, %v799
  %v845 = vpop.permute.xlu0 %844
  %847 = vset.pattern.permute.xlu0 2
  %848 = vperm.xlu0 %847, %v800
  %v849 = vpop.permute.xlu0 %848
  %vm851 = vcmp.ge.f32.partialorder %v845, %v799
  %vm852 = vcmp.ge.f32.partialorder %v849, %v800
  %v853 = vsel %vm851, 1, 0
  %v854 = vsel %vm852, 1, 0
  %v855 = vcvt.s32.f32 %v853
  %v856 = vcvt.s32.f32 %v854
  %v857 = vadd.f32 %v837, %v855
  %v858 = vadd.f32 %v838, %v856
  %v859 = vmul.f32 %v855, %v845
  %v860 = vmul.f32 %v856, %v849
  %v861 = vadd.f32 %v841, %v859
  %v862 = vadd.f32 %v842, %v860
  %863 = vset.pattern.permute.xlu0 3
  %864 = vperm.xlu0 %863, %v799
  %v865 = vpop.permute.xlu0 %864
  %867 = vset.pattern.permute.xlu0 3
  %868 = vperm.xlu0 %867, %v800
  %v869 = vpop.permute.xlu0 %868
  %vm871 = vcmp.ge.f32.partialorder %v865, %v799
  %vm872 = vcmp.ge.f32.partialorder %v869, %v800
  %v873 = vsel %vm871, 1, 0
  %v874 = vsel %vm872, 1, 0
  %v875 = vcvt.s32.f32 %v873
  %v876 = vcvt.s32.f32 %v874
  %v877 = vadd.f32 %v857, %v875
  %v878 = vadd.f32 %v858, %v876
  %v879 = vmul.f32 %v875, %v865
  %v880 = vmul.f32 %v876, %v869
  %v881 = vadd.f32 %v861, %v879
  %v882 = vadd.f32 %v862, %v880
  %883 = vset.pattern.permute.xlu0 4
  %884 = vperm.xlu0 %883, %v799
  %v885 = vpop.permute.xlu0 %884
  %887 = vset.pattern.permute.xlu0 4
  %888 = vperm.xlu0 %887, %v800
  %v889 = vpop.permute.xlu0 %888
  %vm891 = vcmp.ge.f32.partialorder %v885, %v799
  %vm892 = vcmp.ge.f32.partialorder %v889, %v800
  %v893 = vsel %vm891, 1, 0
  %v894 = vsel %vm892, 1, 0
  %v895 = vcvt.s32.f32 %v893
  %v896 = vcvt.s32.f32 %v894
  %v897 = vadd.f32 %v877, %v895
  %v898 = vadd.f32 %v878, %v896
  %v899 = vmul.f32 %v895, %v885
  %v900 = vmul.f32 %v896, %v889
  %v901 = vadd.f32 %v881, %v899
  %v902 = vadd.f32 %v882, %v900
  %903 = vset.pattern.permute.xlu0 5
  %904 = vperm.xlu0 %903, %v799
  %v905 = vpop.permute.xlu0 %904
  %907 = vset.pattern.permute.xlu0 5
  %908 = vperm.xlu0 %907, %v800
  %v909 = vpop.permute.xlu0 %908
  %vm911 = vcmp.ge.f32.partialorder %v905, %v799
  %vm912 = vcmp.ge.f32.partialorder %v909, %v800
  %v913 = vsel %vm911, 1, 0
  %v914 = vsel %vm912, 1, 0
  %v915 = vcvt.s32.f32 %v913
  %v916 = vcvt.s32.f32 %v914
  %v917 = vadd.f32 %v897, %v915
  %v918 = vadd.f32 %v898, %v916
  %v919 = vmul.f32 %v915, %v905
  %v920 = vmul.f32 %v916, %v909
  %v921 = vadd.f32 %v901, %v919
  %v922 = vadd.f32 %v902, %v920
  %v923 = vmul.f32 %v917, %v799
  %v924 = vmul.f32 %v918, %v800
  %v925 = vsub.f32 %v921, 1.0
  %v926 = vsub.f32 %v922, 1.0
  %vm927 = vcmp.gt.f32.partialorder %v923, %v925
  %vm928 = vcmp.gt.f32.partialorder %v924, %v926
  %v929 = vsel %vm927, 1, 0
  %v930 = vsel %vm928, 1, 0
  %v931 = vcvt.s32.f32 %v929
  %v932 = vcvt.s32.f32 %v930
  %v933 = vsel %vm15, %v931, 0.0
  %934 = vadd.xlane.f32.xlu0 %v933
  %v935 = vpop.xlane.xlu0 %934
  %v936 = vsel %vm15, %v932, 0.0
  %937 = vadd.xlane.f32.xlu0 %v936
  %v938 = vpop.xlane.xlu0 %937
  %v939 = vmul.f32 %v931, %v799
  %v940 = vmul.f32 %v932, %v800
  %v941 = vsel %vm15, %v939, 0.0
  %942 = vadd.xlane.f32.xlu0 %v941
  %v943 = vpop.xlane.xlu0 %942
  %v944 = vsel %vm15, %v940, 0.0
  %945 = vadd.xlane.f32.xlu0 %v944
  %v946 = vpop.xlane.xlu0 %945
  %v947 = vsub.f32 %v943, 1.0
  %v948 = vsub.f32 %v946, 1.0
  %v949 = vrcp.pop %v935
  %v950 = vmul.f32 %v947, %v949
  %v951 = vrcp.pop %v938
  %v952 = vmul.f32 %v948, %v951
  %v953 = vsub.f32 %v799, %v950
  %v954 = vsub.f32 %v800, %v952
  %v955 = vmax.f32 %v953, 0.0
  %v956 = vmax.f32 %v954, 0.0
  %v957 = vsub.f32 0.0, %v955
  %v958 = vsub.f32 0.0, %v956
  %v959 = vadd.f32 %v955, 1e-10
  %v960 = vadd.f32 %v956, 1e-10
  %v961 = vlog2.pop %v959
  %v962 = vmul.f32 %v961, 0.6931472
  %v963 = vlog2.pop %v960
  %v964 = vmul.f32 %v963, 0.6931472
  %v965 = vmul.f32 %v957, %v962
  %v966 = vmul.f32 %v958, %v964
  %v967 = vsel %vm15, %v965, 0.0
  %968 = vadd.xlane.f32.xlu0 %v967
  %v969 = vpop.xlane.xlu0 %968
  %v970 = vsel %vm15, %v966, 0.0
  %971 = vadd.xlane.f32.xlu0 %v970
  %v972 = vpop.xlane.xlu0 %971
  %v973 = vadd.f32 %v969, %v972
  %v974 = vrot.slane %v973, 4
  %v975 = vadd.f32 %v973, %v974
  %v976 = vrot.slane %v975, 2
  %v977 = vadd.f32 %v975, %v976
  %v978 = vrot.slane %v977, 1
  %v979 = vadd.f32 %v977, %v978
  %v980 = vmul.f32 %v979, 0.010416667
  %v981 = vadd.f32 %v980, 0.0
  %v982 = vmul.f32 %v57, %v955
  %v983 = vmul.f32 %v58, %v956
  %v985 = vsel %vm15, %v982, 0
  %v988 = vsel %vm15, %v983, 0
  %990 = vmatprep.subr.mxu0 0.0
  %991 = vmatpush1.msra.mxu0 %v73
  %992 = vmatprep.subr.mxu0 0.0
  %993 = vmatpush1.msra.mxu0 0.0
  %994 = vmatprep.subr.mxu0 0.0
  %995 = vmatpush1.msra.mxu0 0.0
  %996 = vmatprep.subr.mxu0 0.0
  %997 = vmatpush1.msra.mxu0 0.0
  %998 = vmatprep.subr.mxu0 0.0
  %999 = vmatpush1.msra.mxu0 0.0
  %1000 = vmatprep.subr.mxu0 0.0
  %1001 = vmatpush1.msra.mxu0 0.0
  %1002 = vmatprep.subr.mxu0 0.0
  %1003 = vmatpush1.msra.mxu0 0.0
  %1004 = vmatprep.subr.mxu0 0.0
  %1005 = vmatpush1.msra.mxu0 0.0
  %1006 = vmatprep.subr.mxu0 0.0
  %1007 = vmatpush1.msra.mxu0 0.0
  %1008 = vmatprep.subr.mxu0 0.0
  %1009 = vmatpush1.msra.mxu0 0.0
  %1010 = vmatprep.subr.mxu0 0.0
  %1011 = vmatpush1.msra.mxu0 0.0
  %1012 = vmatprep.subr.mxu0 0.0
  %1013 = vmatpush1.msra.mxu0 0.0
  %1014 = vmatprep.subr.mxu0 0.0
  %1015 = vmatpush1.msra.mxu0 0.0
  %1016 = vmatprep.subr.mxu0 0.0
  %1017 = vmatpush1.msra.mxu0 0.0
  %1018 = vmatprep.subr.mxu0 0.0
  %1019 = vmatpush1.msra.mxu0 0.0
  %1020 = vmatprep.subr.mxu0 0.0
  %1021 = vmatpush1.msra.mxu0 0.0
  %1022 = vmatprep.subr.mxu0 0.0
  %1023 = vmatpush1.msra.mxu0 0.0
  %1024 = vmatprep.subr.mxu0 0.0
  %1025 = vmatpush1.msra.mxu0 0.0
  %1026 = vmatprep.subr.mxu0 0.0
  %1027 = vmatpush1.msra.mxu0 0.0
  %1028 = vmatprep.subr.mxu0 0.0
  %1029 = vmatpush1.msra.mxu0 0.0
  %1030 = vmatprep.subr.mxu0 0.0
  %1031 = vmatpush1.msra.mxu0 0.0
  %1032 = vmatprep.subr.mxu0 0.0
  %1033 = vmatpush1.msra.mxu0 0.0
  %1034 = vmatprep.subr.mxu0 0.0
  %1035 = vmatpush1.msra.mxu0 0.0
  %1036 = vmatprep.subr.mxu0 0.0
  %1037 = vmatpush1.msra.mxu0 0.0
  %1038 = vmatprep.subr.mxu0 0.0
  %1039 = vmatpush1.msra.mxu0 0.0
  %1040 = vmatprep.subr.mxu0 0.0
  %1041 = vmatpush1.msra.mxu0 0.0
  %1042 = vmatprep.subr.mxu0 0.0
  %1043 = vmatpush1.msra.mxu0 0.0
  %1044 = vmatprep.subr.mxu0 0.0
  %1045 = vmatpush1.msra.mxu0 0.0
  %1046 = vmatprep.subr.mxu0 0.0
  %1047 = vmatpush1.msra.mxu0 0.0
  %1048 = vmatprep.subr.mxu0 0.0
  %1049 = vmatpush1.msra.mxu0 0.0
  %1050 = vmatprep.subr.mxu0 0.0
  %1051 = vmatpush1.msra.mxu0 0.0
  %1052 = vmatprep.subr.mxu0 0.0
  %1053 = vmatpush1.msra.mxu0 0.0
  %1054 = vmatprep.mubr.f32.mxu0 0.0
  %1055 = vmatmul.mubr.f32.gmra.mrb[0].mxu0 %v985
  %v1056 = vpop.f32.mrb[0].mxu0
  %v1057 = vadd.f32 %v64, %v1056
  %v1058 = vpop.f32.mrb[0].mxu0
  %1059 = vmatprep.mubr.f32.mxu0 0.0
  %1060 = vmatmul.mubr.f32.gmra.mrb[0].mxu0 %v988
  %v1061 = vpop.f32.mrb[0].mxu0
  %v1062 = vadd.f32 %v64, %v1061
  %v1063 = vpop.f32.mrb[0].mxu0
  %1064 = vdwg.mxu0
  %v1065 = vadd.f32 %v1057, %v1062
  %v1066 = vrot.slane %v1065, 4
  %v1067 = vadd.f32 %v1065, %v1066
  %v1068 = vrot.slane %v1067, 2
  %v1069 = vadd.f32 %v1067, %v1068
  %v1070 = vrot.slane %v1069, 1
  %v1071 = vadd.f32 %v1069, %v1070
  %v1072 = vmul.f32 %v1071, %v25
  %v1073 = vsub.f32 %v1057, %v1072
  %v1074 = vsub.f32 %v1062, %v1072
  %v1075 = vmul.f32 %v1073, %v1073
  %v1076 = vmul.f32 %v1074, %v1074
  %v1077 = vadd.f32 %v1075, %v1076
  %v1078 = vrot.slane %v1077, 4
  %v1079 = vadd.f32 %v1077, %v1078
  %v1080 = vrot.slane %v1079, 2
  %v1081 = vadd.f32 %v1079, %v1080
  %v1082 = vrot.slane %v1081, 1
  %v1083 = vadd.f32 %v1081, %v1082
  %v1084 = vmul.f32 %v1083, %v25
  %v1085 = vadd.f32 %v1084, 1e-05
  %v1086 = vrsqrt.pop %v1085
  %v1087 = vmul.f32 %v1073, %v1086
  %v1088 = vmul.f32 %v1074, %v1086
  %v1089 = vld [vmem:[%s1 + $0x296] sm:$0x1]
  %v1090 = vlaneseq
  %v1091 = vshrl.u32 %v1090, 7
  %v1092 = vsub.s32 0, %v1091
  %v1093 = vrot.slane %v1089, %v1092
  %v1094 = vmul.f32 %v1087, %v1093
  %v1095 = vmul.f32 %v1088, %v1093
  %v1096 = vld [vmem:[%s1 + $0x297] sm:$0x1]
  %v1097 = vlaneseq
  %v1098 = vshrl.u32 %v1097, 7
  %v1099 = vsub.s32 0, %v1098
  %v1100 = vrot.slane %v1096, %v1099
  %v1101 = vadd.f32 %v1094, %v1100
  %v1102 = vadd.f32 %v1095, %v1100
  %1103 = vrot.lane.b32.xlu0 %v1101, 64
  %v1104 = vpop.permute.xlu0 %1103
  %1105 = vrot.lane.b32.xlu0 %v1102, 64
  %v1106 = vpop.permute.xlu0 %1105
  %v1107 = vmul.f32 %v1104, 0.5
  %v1108 = vmul.f32 %v1106, 0.5
  %v1109 = vtanh.pop %v1107
  %v1110 = vtanh.pop %v1108
  %v1111 = vmul.f32 %v1109, 0.5
  %v1112 = vmul.f32 %v1110, 0.5
  %v1113 = vadd.f32 %v1111, 0.5
  %v1114 = vadd.f32 %v1112, 0.5
  %v1115 = vmul.f32 %v1101, %v1113
  %v1116 = vmul.f32 %v1102, %v1114
  %v1118 = vsel %vm215, %v1115, 0
  %v1121 = vsel %vm215, %v1116, 0
  %1123 = vmatprep.subr.mxu0 0.0
  %1124 = vmatpush1.msra.mxu0 %v202
  %1125 = vmatprep.subr.mxu0 0.0
  %1126 = vmatpush1.msra.mxu0 %v203
  %1127 = vmatprep.subr.mxu0 0.0
  %1128 = vmatpush1.msra.mxu0 %v204
  %1129 = vmatprep.subr.mxu0 0.0
  %1130 = vmatpush1.msra.mxu0 %v205
  %1131 = vmatprep.subr.mxu0 0.0
  %1132 = vmatpush1.msra.mxu0 %v206
  %1133 = vmatprep.subr.mxu0 0.0
  %1134 = vmatpush1.msra.mxu0 %v207
  %1135 = vmatprep.subr.mxu0 0.0
  %1136 = vmatpush1.msra.mxu0 %v208
  %1137 = vmatprep.subr.mxu0 0.0
  %1138 = vmatpush1.msra.mxu0 %v209
  %1139 = vmatprep.subr.mxu0 0.0
  %1140 = vmatpush1.msra.mxu0 0.0
  %1141 = vmatprep.subr.mxu0 0.0
  %1142 = vmatpush1.msra.mxu0 0.0
  %1143 = vmatprep.subr.mxu0 0.0
  %1144 = vmatpush1.msra.mxu0 0.0
  %1145 = vmatprep.subr.mxu0 0.0
  %1146 = vmatpush1.msra.mxu0 0.0
  %1147 = vmatprep.subr.mxu0 0.0
  %1148 = vmatpush1.msra.mxu0 0.0
  %1149 = vmatprep.subr.mxu0 0.0
  %1150 = vmatpush1.msra.mxu0 0.0
  %1151 = vmatprep.subr.mxu0 0.0
  %1152 = vmatpush1.msra.mxu0 0.0
  %1153 = vmatprep.subr.mxu0 0.0
  %1154 = vmatpush1.msra.mxu0 0.0
  %1155 = vmatprep.subr.mxu0 0.0
  %1156 = vmatpush1.msra.mxu0 0.0
  %1157 = vmatprep.subr.mxu0 0.0
  %1158 = vmatpush1.msra.mxu0 0.0
  %1159 = vmatprep.subr.mxu0 0.0
  %1160 = vmatpush1.msra.mxu0 0.0
  %1161 = vmatprep.subr.mxu0 0.0
  %1162 = vmatpush1.msra.mxu0 0.0
  %1163 = vmatprep.subr.mxu0 0.0
  %1164 = vmatpush1.msra.mxu0 0.0
  %1165 = vmatprep.subr.mxu0 0.0
  %1166 = vmatpush1.msra.mxu0 0.0
  %1167 = vmatprep.subr.mxu0 0.0
  %1168 = vmatpush1.msra.mxu0 0.0
  %1169 = vmatprep.subr.mxu0 0.0
  %1170 = vmatpush1.msra.mxu0 0.0
  %1171 = vmatprep.subr.mxu0 0.0
  %1172 = vmatpush1.msra.mxu0 0.0
  %1173 = vmatprep.subr.mxu0 0.0
  %1174 = vmatpush1.msra.mxu0 0.0
  %1175 = vmatprep.subr.mxu0 0.0
  %1176 = vmatpush1.msra.mxu0 0.0
  %1177 = vmatprep.subr.mxu0 0.0
  %1178 = vmatpush1.msra.mxu0 0.0
  %1179 = vmatprep.subr.mxu0 0.0
  %1180 = vmatpush1.msra.mxu0 0.0
  %1181 = vmatprep.subr.mxu0 0.0
  %1182 = vmatpush1.msra.mxu0 0.0
  %1183 = vmatprep.subr.mxu0 0.0
  %1184 = vmatpush1.msra.mxu0 0.0
  %1185 = vmatprep.subr.mxu0 0.0
  %1186 = vmatpush1.msra.mxu0 0.0
  %1187 = vmatprep.mubr.f32.mxu0 0.0
  %1188 = vmatmul.mubr.f32.gmra.mrb[0].mxu0 %v1118
  %v1189 = vpop.f32.mrb[0].mxu0
  %v1190 = vadd.f32 %v214, %v1189
  %v1191 = vpop.f32.mrb[0].mxu0
  %1192 = vmatprep.mubr.f32.mxu0 0.0
  %1193 = vmatmul.mubr.f32.gmra.mrb[0].mxu0 %v1121
  %v1194 = vpop.f32.mrb[0].mxu0
  %v1195 = vadd.f32 %v214, %v1194
  %v1196 = vpop.f32.mrb[0].mxu0
  %1197 = vdwg.mxu0
  %v1198 = vadd.f32 %v1190, %v1195
  %v1199 = vrot.slane %v1198, 4
  %v1200 = vadd.f32 %v1198, %v1199
  %v1201 = vrot.slane %v1200, 2
  %v1202 = vadd.f32 %v1200, %v1201
  %v1203 = vrot.slane %v1202, 1
  %v1204 = vadd.f32 %v1202, %v1203
  %v1205 = vmul.f32 %v1204, %v25
  %v1206 = vsub.f32 %v1190, %v1205
  %v1207 = vsub.f32 %v1195, %v1205
  %v1208 = vmul.f32 %v1206, %v1206
  %v1209 = vmul.f32 %v1207, %v1207
  %v1210 = vadd.f32 %v1208, %v1209
  %v1211 = vrot.slane %v1210, 4
  %v1212 = vadd.f32 %v1210, %v1211
  %v1213 = vrot.slane %v1212, 2
  %v1214 = vadd.f32 %v1212, %v1213
  %v1215 = vrot.slane %v1214, 1
  %v1216 = vadd.f32 %v1214, %v1215
  %v1217 = vmul.f32 %v1216, %v25
  %v1218 = vadd.f32 %v1217, 1e-05
  %v1219 = vrsqrt.pop %v1218
  %v1220 = vmul.f32 %v1206, %v1219
  %v1221 = vmul.f32 %v1207, %v1219
  %v1222 = vld [vmem:[%s1 + $0x298] sm:$0x1]
  %v1223 = vlaneseq
  %v1224 = vshrl.u32 %v1223, 7
  %v1225 = vsub.s32 0, %v1224
  %v1226 = vrot.slane %v1222, %v1225
  %v1227 = vmul.f32 %v1220, %v1226
  %v1228 = vmul.f32 %v1221, %v1226
  %v1229 = vld [vmem:[%s1 + $0x299] sm:$0x1]
  %v1230 = vlaneseq
  %v1231 = vshrl.u32 %v1230, 7
  %v1232 = vsub.s32 0, %v1231
  %v1233 = vrot.slane %v1229, %v1232
  %v1234 = vadd.f32 %v1227, %v1233
  %v1235 = vadd.f32 %v1228, %v1233
  %1236 = vrot.lane.b32.xlu0 %v1234, 64
  %v1237 = vpop.permute.xlu0 %1236
  %1238 = vrot.lane.b32.xlu0 %v1235, 64
  %v1239 = vpop.permute.xlu0 %1238
  %v1240 = vmul.f32 %v1237, 0.5
  %v1241 = vmul.f32 %v1239, 0.5
  %v1242 = vtanh.pop %v1240
  %v1243 = vtanh.pop %v1241
  %v1244 = vmul.f32 %v1242, 0.5
  %v1245 = vmul.f32 %v1243, 0.5
  %v1246 = vadd.f32 %v1244, 0.5
  %v1247 = vadd.f32 %v1245, 0.5
  %v1248 = vmul.f32 %v1234, %v1246
  %v1249 = vmul.f32 %v1235, %v1247
  %v1250 = vadd.f32 %v1115, %v1248
  %v1251 = vadd.f32 %v1116, %v1249
  %v1252 = vmul.f32 %v1250, 0.70710677
  %v1253 = vmul.f32 %v1251, 0.70710677
  %v1254 = vld [vmem:[%s1 + $0xc8] sm:$0xff]
  %v1255 = vld [vmem:[%s1 + $0xd0] sm:$0xff]
  %v1256 = vld [vmem:[%s1 + $0xd8] sm:$0xff]
  %v1257 = vld [vmem:[%s1 + $0xe0] sm:$0xff]
  %v1258 = vld [vmem:[%s1 + $0xe8] sm:$0xff]
  %v1259 = vld [vmem:[%s1 + $0xf0] sm:$0xff]
  %v1260 = vld [vmem:[%s1 + $0xf8] sm:$0xff]
  %v1261 = vld [vmem:[%s1 + $0x100] sm:$0xff]
  %v1262 = vld [vmem:[%s1 + $0x29a] sm:$0x1]
  %v1263 = vlaneseq
  %v1264 = vshrl.u32 %v1263, 7
  %v1265 = vsub.s32 0, %v1264
  %v1266 = vrot.slane %v1262, %v1265
  %v1268 = vsel %vm215, %v1252, 0
  %v1271 = vsel %vm215, %v1253, 0
  %1273 = vmatprep.subr.mxu0 0.0
  %1274 = vmatpush1.msra.mxu0 %v1254
  %1275 = vmatprep.subr.mxu0 0.0
  %1276 = vmatpush1.msra.mxu0 %v1255
  %1277 = vmatprep.subr.mxu0 0.0
  %1278 = vmatpush1.msra.mxu0 %v1256
  %1279 = vmatprep.subr.mxu0 0.0
  %1280 = vmatpush1.msra.mxu0 %v1257
  %1281 = vmatprep.subr.mxu0 0.0
  %1282 = vmatpush1.msra.mxu0 %v1258
  %1283 = vmatprep.subr.mxu0 0.0
  %1284 = vmatpush1.msra.mxu0 %v1259
  %1285 = vmatprep.subr.mxu0 0.0
  %1286 = vmatpush1.msra.mxu0 %v1260
  %1287 = vmatprep.subr.mxu0 0.0
  %1288 = vmatpush1.msra.mxu0 %v1261
  %1289 = vmatprep.subr.mxu0 0.0
  %1290 = vmatpush1.msra.mxu0 0.0
  %1291 = vmatprep.subr.mxu0 0.0
  %1292 = vmatpush1.msra.mxu0 0.0
  %1293 = vmatprep.subr.mxu0 0.0
  %1294 = vmatpush1.msra.mxu0 0.0
  %1295 = vmatprep.subr.mxu0 0.0
  %1296 = vmatpush1.msra.mxu0 0.0
  %1297 = vmatprep.subr.mxu0 0.0
  %1298 = vmatpush1.msra.mxu0 0.0
  %1299 = vmatprep.subr.mxu0 0.0
  %1300 = vmatpush1.msra.mxu0 0.0
  %1301 = vmatprep.subr.mxu0 0.0
  %1302 = vmatpush1.msra.mxu0 0.0
  %1303 = vmatprep.subr.mxu0 0.0
  %1304 = vmatpush1.msra.mxu0 0.0
  %1305 = vmatprep.subr.mxu0 0.0
  %1306 = vmatpush1.msra.mxu0 0.0
  %1307 = vmatprep.subr.mxu0 0.0
  %1308 = vmatpush1.msra.mxu0 0.0
  %1309 = vmatprep.subr.mxu0 0.0
  %1310 = vmatpush1.msra.mxu0 0.0
  %1311 = vmatprep.subr.mxu0 0.0
  %1312 = vmatpush1.msra.mxu0 0.0
  %1313 = vmatprep.subr.mxu0 0.0
  %1314 = vmatpush1.msra.mxu0 0.0
  %1315 = vmatprep.subr.mxu0 0.0
  %1316 = vmatpush1.msra.mxu0 0.0
  %1317 = vmatprep.subr.mxu0 0.0
  %1318 = vmatpush1.msra.mxu0 0.0
  %1319 = vmatprep.subr.mxu0 0.0
  %1320 = vmatpush1.msra.mxu0 0.0
  %1321 = vmatprep.subr.mxu0 0.0
  %1322 = vmatpush1.msra.mxu0 0.0
  %1323 = vmatprep.subr.mxu0 0.0
  %1324 = vmatpush1.msra.mxu0 0.0
  %1325 = vmatprep.subr.mxu0 0.0
  %1326 = vmatpush1.msra.mxu0 0.0
  %1327 = vmatprep.subr.mxu0 0.0
  %1328 = vmatpush1.msra.mxu0 0.0
  %1329 = vmatprep.subr.mxu0 0.0
  %1330 = vmatpush1.msra.mxu0 0.0
  %1331 = vmatprep.subr.mxu0 0.0
  %1332 = vmatpush1.msra.mxu0 0.0
  %1333 = vmatprep.subr.mxu0 0.0
  %1334 = vmatpush1.msra.mxu0 0.0
  %1335 = vmatprep.subr.mxu0 0.0
  %1336 = vmatpush1.msra.mxu0 0.0
  %1337 = vmatprep.mubr.f32.mxu0 0.0
  %1338 = vmatmul.mubr.f32.gmra.mrb[0].mxu0 %v1268
  %v1339 = vpop.f32.mrb[0].mxu0
  %v1340 = vadd.f32 %v1266, %v1339
  %v1341 = vpop.f32.mrb[0].mxu0
  %1342 = vmatprep.mubr.f32.mxu0 0.0
  %1343 = vmatmul.mubr.f32.gmra.mrb[0].mxu0 %v1271
  %v1344 = vpop.f32.mrb[0].mxu0
  %v1345 = vadd.f32 %v1266, %v1344
  %v1346 = vpop.f32.mrb[0].mxu0
  %1347 = vdwg.mxu0
  %v1348 = vadd.f32 %v1340, %v1345
  %v1349 = vrot.slane %v1348, 4
  %v1350 = vadd.f32 %v1348, %v1349
  %v1351 = vrot.slane %v1350, 2
  %v1352 = vadd.f32 %v1350, %v1351
  %v1353 = vrot.slane %v1352, 1
  %v1354 = vadd.f32 %v1352, %v1353
  %v1355 = vmul.f32 %v1354, %v25
  %v1356 = vsub.f32 %v1340, %v1355
  %v1357 = vsub.f32 %v1345, %v1355
  %v1358 = vmul.f32 %v1356, %v1356
  %v1359 = vmul.f32 %v1357, %v1357
  %v1360 = vadd.f32 %v1358, %v1359
  %v1361 = vrot.slane %v1360, 4
  %v1362 = vadd.f32 %v1360, %v1361
  %v1363 = vrot.slane %v1362, 2
  %v1364 = vadd.f32 %v1362, %v1363
  %v1365 = vrot.slane %v1364, 1
  %v1366 = vadd.f32 %v1364, %v1365
  %v1367 = vmul.f32 %v1366, %v25
  %v1368 = vadd.f32 %v1367, 1e-05
  %v1369 = vrsqrt.pop %v1368
  %v1370 = vmul.f32 %v1356, %v1369
  %v1371 = vmul.f32 %v1357, %v1369
  %v1372 = vld [vmem:[%s1 + $0x29b] sm:$0x1]
  %v1373 = vlaneseq
  %v1374 = vshrl.u32 %v1373, 7
  %v1375 = vsub.s32 0, %v1374
  %v1376 = vrot.slane %v1372, %v1375
  %v1377 = vmul.f32 %v1370, %v1376
  %v1378 = vmul.f32 %v1371, %v1376
  %v1379 = vld [vmem:[%s1 + $0x29c] sm:$0x1]
  %v1380 = vlaneseq
  %v1381 = vshrl.u32 %v1380, 7
  %v1382 = vsub.s32 0, %v1381
  %v1383 = vrot.slane %v1379, %v1382
  %v1384 = vadd.f32 %v1377, %v1383
  %v1385 = vadd.f32 %v1378, %v1383
  %1386 = vrot.lane.b32.xlu0 %v1384, 64
  %v1387 = vpop.permute.xlu0 %1386
  %1388 = vrot.lane.b32.xlu0 %v1385, 64
  %v1389 = vpop.permute.xlu0 %1388
  %v1390 = vmul.f32 %v1387, 0.5
  %v1391 = vmul.f32 %v1389, 0.5
  %v1392 = vtanh.pop %v1390
  %v1393 = vtanh.pop %v1391
  %v1394 = vmul.f32 %v1392, 0.5
  %v1395 = vmul.f32 %v1393, 0.5
  %v1396 = vadd.f32 %v1394, 0.5
  %v1397 = vadd.f32 %v1395, 0.5
  %v1398 = vmul.f32 %v1384, %v1396
  %v1399 = vmul.f32 %v1385, %v1397
  %v1400 = vadd.f32 %v1252, %v1398
  %v1401 = vadd.f32 %v1253, %v1399
  %v1402 = vmul.f32 %v1400, 0.70710677
  %v1403 = vmul.f32 %v1401, 0.70710677
  %v1404 = vld [vmem:[%s1 + $0x108] sm:$0xff]
  %v1405 = vld [vmem:[%s1 + $0x110] sm:$0xff]
  %v1406 = vld [vmem:[%s1 + $0x118] sm:$0xff]
  %v1407 = vld [vmem:[%s1 + $0x120] sm:$0xff]
  %v1408 = vld [vmem:[%s1 + $0x128] sm:$0xff]
  %v1409 = vld [vmem:[%s1 + $0x130] sm:$0xff]
  %v1410 = vld [vmem:[%s1 + $0x138] sm:$0xff]
  %v1411 = vld [vmem:[%s1 + $0x140] sm:$0xff]
  %v1412 = vld [vmem:[%s1 + $0x29d] sm:$0x1]
  %v1413 = vlaneseq
  %v1414 = vshrl.u32 %v1413, 7
  %v1415 = vsub.s32 0, %v1414
  %v1416 = vrot.slane %v1412, %v1415
  %v1418 = vsel %vm215, %v1402, 0
  %v1421 = vsel %vm215, %v1403, 0
  %1423 = vmatprep.subr.mxu0 0.0
  %1424 = vmatpush1.msra.mxu0 %v1404
  %1425 = vmatprep.subr.mxu0 0.0
  %1426 = vmatpush1.msra.mxu0 %v1405
  %1427 = vmatprep.subr.mxu0 0.0
  %1428 = vmatpush1.msra.mxu0 %v1406
  %1429 = vmatprep.subr.mxu0 0.0
  %1430 = vmatpush1.msra.mxu0 %v1407
  %1431 = vmatprep.subr.mxu0 0.0
  %1432 = vmatpush1.msra.mxu0 %v1408
  %1433 = vmatprep.subr.mxu0 0.0
  %1434 = vmatpush1.msra.mxu0 %v1409
  %1435 = vmatprep.subr.mxu0 0.0
  %1436 = vmatpush1.msra.mxu0 %v1410
  %1437 = vmatprep.subr.mxu0 0.0
  %1438 = vmatpush1.msra.mxu0 %v1411
  %1439 = vmatprep.subr.mxu0 0.0
  %1440 = vmatpush1.msra.mxu0 0.0
  %1441 = vmatprep.subr.mxu0 0.0
  %1442 = vmatpush1.msra.mxu0 0.0
  %1443 = vmatprep.subr.mxu0 0.0
  %1444 = vmatpush1.msra.mxu0 0.0
  %1445 = vmatprep.subr.mxu0 0.0
  %1446 = vmatpush1.msra.mxu0 0.0
  %1447 = vmatprep.subr.mxu0 0.0
  %1448 = vmatpush1.msra.mxu0 0.0
  %1449 = vmatprep.subr.mxu0 0.0
  %1450 = vmatpush1.msra.mxu0 0.0
  %1451 = vmatprep.subr.mxu0 0.0
  %1452 = vmatpush1.msra.mxu0 0.0
  %1453 = vmatprep.subr.mxu0 0.0
  %1454 = vmatpush1.msra.mxu0 0.0
  %1455 = vmatprep.subr.mxu0 0.0
  %1456 = vmatpush1.msra.mxu0 0.0
  %1457 = vmatprep.subr.mxu0 0.0
  %1458 = vmatpush1.msra.mxu0 0.0
  %1459 = vmatprep.subr.mxu0 0.0
  %1460 = vmatpush1.msra.mxu0 0.0
  %1461 = vmatprep.subr.mxu0 0.0
  %1462 = vmatpush1.msra.mxu0 0.0
  %1463 = vmatprep.subr.mxu0 0.0
  %1464 = vmatpush1.msra.mxu0 0.0
  %1465 = vmatprep.subr.mxu0 0.0
  %1466 = vmatpush1.msra.mxu0 0.0
  %1467 = vmatprep.subr.mxu0 0.0
  %1468 = vmatpush1.msra.mxu0 0.0
  %1469 = vmatprep.subr.mxu0 0.0
  %1470 = vmatpush1.msra.mxu0 0.0
  %1471 = vmatprep.subr.mxu0 0.0
  %1472 = vmatpush1.msra.mxu0 0.0
  %1473 = vmatprep.subr.mxu0 0.0
  %1474 = vmatpush1.msra.mxu0 0.0
  %1475 = vmatprep.subr.mxu0 0.0
  %1476 = vmatpush1.msra.mxu0 0.0
  %1477 = vmatprep.subr.mxu0 0.0
  %1478 = vmatpush1.msra.mxu0 0.0
  %1479 = vmatprep.subr.mxu0 0.0
  %1480 = vmatpush1.msra.mxu0 0.0
  %1481 = vmatprep.subr.mxu0 0.0
  %1482 = vmatpush1.msra.mxu0 0.0
  %1483 = vmatprep.subr.mxu0 0.0
  %1484 = vmatpush1.msra.mxu0 0.0
  %1485 = vmatprep.subr.mxu0 0.0
  %1486 = vmatpush1.msra.mxu0 0.0
  %1487 = vmatprep.mubr.f32.mxu0 0.0
  %1488 = vmatmul.mubr.f32.gmra.mrb[0].mxu0 %v1418
  %v1489 = vpop.f32.mrb[0].mxu0
  %v1490 = vadd.f32 %v1416, %v1489
  %v1491 = vpop.f32.mrb[0].mxu0
  %1492 = vmatprep.mubr.f32.mxu0 0.0
  %1493 = vmatmul.mubr.f32.gmra.mrb[0].mxu0 %v1421
  %v1494 = vpop.f32.mrb[0].mxu0
  %v1495 = vadd.f32 %v1416, %v1494
  %v1496 = vpop.f32.mrb[0].mxu0
  %1497 = vdwg.mxu0
  %v1498 = vadd.f32 %v1490, %v1495
  %v1499 = vrot.slane %v1498, 4
  %v1500 = vadd.f32 %v1498, %v1499
  %v1501 = vrot.slane %v1500, 2
  %v1502 = vadd.f32 %v1500, %v1501
  %v1503 = vrot.slane %v1502, 1
  %v1504 = vadd.f32 %v1502, %v1503
  %v1505 = vmul.f32 %v1504, %v25
  %v1506 = vsub.f32 %v1490, %v1505
  %v1507 = vsub.f32 %v1495, %v1505
  %v1508 = vmul.f32 %v1506, %v1506
  %v1509 = vmul.f32 %v1507, %v1507
  %v1510 = vadd.f32 %v1508, %v1509
  %v1511 = vrot.slane %v1510, 4
  %v1512 = vadd.f32 %v1510, %v1511
  %v1513 = vrot.slane %v1512, 2
  %v1514 = vadd.f32 %v1512, %v1513
  %v1515 = vrot.slane %v1514, 1
  %v1516 = vadd.f32 %v1514, %v1515
  %v1517 = vmul.f32 %v1516, %v25
  %v1518 = vadd.f32 %v1517, 1e-05
  %v1519 = vrsqrt.pop %v1518
  %v1520 = vmul.f32 %v1506, %v1519
  %v1521 = vmul.f32 %v1507, %v1519
  %v1522 = vld [vmem:[%s1 + $0x29e] sm:$0x1]
  %v1523 = vlaneseq
  %v1524 = vshrl.u32 %v1523, 7
  %v1525 = vsub.s32 0, %v1524
  %v1526 = vrot.slane %v1522, %v1525
  %v1527 = vmul.f32 %v1520, %v1526
  %v1528 = vmul.f32 %v1521, %v1526
  %v1529 = vld [vmem:[%s1 + $0x29f] sm:$0x1]
  %v1530 = vlaneseq
  %v1531 = vshrl.u32 %v1530, 7
  %v1532 = vsub.s32 0, %v1531
  %v1533 = vrot.slane %v1529, %v1532
  %v1534 = vadd.f32 %v1527, %v1533
  %v1535 = vadd.f32 %v1528, %v1533
  %1536 = vrot.lane.b32.xlu0 %v1534, 64
  %v1537 = vpop.permute.xlu0 %1536
  %1538 = vrot.lane.b32.xlu0 %v1535, 64
  %v1539 = vpop.permute.xlu0 %1538
  %v1540 = vmul.f32 %v1537, 0.5
  %v1541 = vmul.f32 %v1539, 0.5
  %v1542 = vtanh.pop %v1540
  %v1543 = vtanh.pop %v1541
  %v1544 = vmul.f32 %v1542, 0.5
  %v1545 = vmul.f32 %v1543, 0.5
  %v1546 = vadd.f32 %v1544, 0.5
  %v1547 = vadd.f32 %v1545, 0.5
  %v1548 = vmul.f32 %v1534, %v1546
  %v1549 = vmul.f32 %v1535, %v1547
  %v1550 = vadd.f32 %v1402, %v1548
  %v1551 = vadd.f32 %v1403, %v1549
  %v1552 = vmul.f32 %v1550, 0.70710677
  %v1553 = vmul.f32 %v1551, 0.70710677
  %v1554 = vmax.f32 %v1552, 0.0
  %v1555 = vmax.f32 %v1553, 0.0
  %v1556 = vadd.f32 %v1554, 0.0
  %v1557 = vadd.f32 %v1555, 0.0
  %v1558 = vld [vmem:[%s1 + $0x208] sm:$0xff]
  %v1559 = vld [vmem:[%s1 + $0x210] sm:$0xff]
  %v1560 = vld [vmem:[%s1 + $0x218] sm:$0xff]
  %v1561 = vld [vmem:[%s1 + $0x220] sm:$0xff]
  %v1562 = vld [vmem:[%s1 + $0x228] sm:$0xff]
  %v1563 = vld [vmem:[%s1 + $0x230] sm:$0xff]
  %v1564 = vld [vmem:[%s1 + $0x238] sm:$0xff]
  %v1565 = vld [vmem:[%s1 + $0x240] sm:$0xff]
  %v1567 = vsel %vm215, %v1552, 0
  %v1570 = vsel %vm215, %v1553, 0
  %1572 = vmatprep.subr.mxu0 0.0
  %1573 = vmatpush1.msra.mxu0 %v1558
  %1574 = vmatprep.subr.mxu0 0.0
  %1575 = vmatpush1.msra.mxu0 %v1559
  %1576 = vmatprep.subr.mxu0 0.0
  %1577 = vmatpush1.msra.mxu0 %v1560
  %1578 = vmatprep.subr.mxu0 0.0
  %1579 = vmatpush1.msra.mxu0 %v1561
  %1580 = vmatprep.subr.mxu0 0.0
  %1581 = vmatpush1.msra.mxu0 %v1562
  %1582 = vmatprep.subr.mxu0 0.0
  %1583 = vmatpush1.msra.mxu0 %v1563
  %1584 = vmatprep.subr.mxu0 0.0
  %1585 = vmatpush1.msra.mxu0 %v1564
  %1586 = vmatprep.subr.mxu0 0.0
  %1587 = vmatpush1.msra.mxu0 %v1565
  %1588 = vmatprep.subr.mxu0 0.0
  %1589 = vmatpush1.msra.mxu0 0.0
  %1590 = vmatprep.subr.mxu0 0.0
  %1591 = vmatpush1.msra.mxu0 0.0
  %1592 = vmatprep.subr.mxu0 0.0
  %1593 = vmatpush1.msra.mxu0 0.0
  %1594 = vmatprep.subr.mxu0 0.0
  %1595 = vmatpush1.msra.mxu0 0.0
  %1596 = vmatprep.subr.mxu0 0.0
  %1597 = vmatpush1.msra.mxu0 0.0
  %1598 = vmatprep.subr.mxu0 0.0
  %1599 = vmatpush1.msra.mxu0 0.0
  %1600 = vmatprep.subr.mxu0 0.0
  %1601 = vmatpush1.msra.mxu0 0.0
  %1602 = vmatprep.subr.mxu0 0.0
  %1603 = vmatpush1.msra.mxu0 0.0
  %1604 = vmatprep.subr.mxu0 0.0
  %1605 = vmatpush1.msra.mxu0 0.0
  %1606 = vmatprep.subr.mxu0 0.0
  %1607 = vmatpush1.msra.mxu0 0.0
  %1608 = vmatprep.subr.mxu0 0.0
  %1609 = vmatpush1.msra.mxu0 0.0
  %1610 = vmatprep.subr.mxu0 0.0
  %1611 = vmatpush1.msra.mxu0 0.0
  %1612 = vmatprep.subr.mxu0 0.0
  %1613 = vmatpush1.msra.mxu0 0.0
  %1614 = vmatprep.subr.mxu0 0.0
  %1615 = vmatpush1.msra.mxu0 0.0
  %1616 = vmatprep.subr.mxu0 0.0
  %1617 = vmatpush1.msra.mxu0 0.0
  %1618 = vmatprep.subr.mxu0 0.0
  %1619 = vmatpush1.msra.mxu0 0.0
  %1620 = vmatprep.subr.mxu0 0.0
  %1621 = vmatpush1.msra.mxu0 0.0
  %1622 = vmatprep.subr.mxu0 0.0
  %1623 = vmatpush1.msra.mxu0 0.0
  %1624 = vmatprep.subr.mxu0 0.0
  %1625 = vmatpush1.msra.mxu0 0.0
  %1626 = vmatprep.subr.mxu0 0.0
  %1627 = vmatpush1.msra.mxu0 0.0
  %1628 = vmatprep.subr.mxu0 0.0
  %1629 = vmatpush1.msra.mxu0 0.0
  %1630 = vmatprep.subr.mxu0 0.0
  %1631 = vmatpush1.msra.mxu0 0.0
  %1632 = vmatprep.subr.mxu0 0.0
  %1633 = vmatpush1.msra.mxu0 0.0
  %1634 = vmatprep.subr.mxu0 0.0
  %1635 = vmatpush1.msra.mxu0 0.0
  %1636 = vmatprep.mubr.f32.mxu0 0.0
  %1637 = vmatmul.mubr.f32.gmra.mrb[0].mxu0 %v1567
  %v1638 = vpop.f32.mrb[0].mxu0
  %v1639 = vadd.f32 0.0, %v1638
  %v1640 = vpop.f32.mrb[0].mxu0
  %1641 = vmatprep.mubr.f32.mxu0 0.0
  %1642 = vmatmul.mubr.f32.gmra.mrb[0].mxu0 %v1570
  %v1643 = vpop.f32.mrb[0].mxu0
  %v1644 = vadd.f32 0.0, %v1643
  %v1645 = vpop.f32.mrb[0].mxu0
  %1646 = vdwg.mxu0
  %v1647 = vld [vmem:[%s1 + $0x2ad] sm:$0x1]
  %v1648 = vlaneseq
  %v1649 = vshrl.u32 %v1648, 7
  %v1650 = vsub.s32 0, %v1649
  %v1651 = vrot.slane %v1647, %v1650
  %v1652 = vadd.f32 %v1639, %v1651
  %v1653 = vadd.f32 %v1644, %v1651
  %v1654 = vsel %vm15, %v1652, 0.0
  %v1655 = vsel %vm15, %v1653, 0.0
  %v1656 = vadd.f32 %v1654, %v1655
  %v1657 = vrot.slane %v1656, 4
  %v1658 = vadd.f32 %v1656, %v1657
  %v1659 = vrot.slane %v1658, 2
  %v1660 = vadd.f32 %v1658, %v1659
  %v1661 = vrot.slane %v1660, 1
  %v1662 = vadd.f32 %v1660, %v1661
  %v1663 = vmul.f32 %v1662, %v25
  %v1664 = vsub.f32 %v1652, %v1663
  %v1665 = vsub.f32 %v1653, %v1663
  %v1666 = vmul.f32 %v1664, %v1664
  %v1667 = vmul.f32 %v1665, %v1665
  %v1668 = vsel %vm15, %v1666, 0.0
  %v1669 = vsel %vm15, %v1667, 0.0
  %v1670 = vadd.f32 %v1668, %v1669
  %v1671 = vrot.slane %v1670, 4
  %v1672 = vadd.f32 %v1670, %v1671
  %v1673 = vrot.slane %v1672, 2
  %v1674 = vadd.f32 %v1672, %v1673
  %v1675 = vrot.slane %v1674, 1
  %v1676 = vadd.f32 %v1674, %v1675
  %v1677 = vmul.f32 %v1676, %v25
  %v1678 = vadd.f32 %v1677, 1e-05
  %v1679 = vrsqrt.pop %v1678
  %v1680 = vmul.f32 %v1664, %v1679
  %v1681 = vmul.f32 %v1665, %v1679
  %v1682 = vld [vmem:[%s1 + $0x2ae] sm:$0x1]
  %v1683 = vlaneseq
  %v1684 = vshrl.u32 %v1683, 7
  %v1685 = vsub.s32 0, %v1684
  %v1686 = vrot.slane %v1682, %v1685
  %v1687 = vmul.f32 %v1680, %v1686
  %v1688 = vmul.f32 %v1681, %v1686
  %v1689 = vld [vmem:[%s1 + $0x2af] sm:$0x1]
  %v1690 = vlaneseq
  %v1691 = vshrl.u32 %v1690, 7
  %v1692 = vsub.s32 0, %v1691
  %v1693 = vrot.slane %v1689, %v1692
  %v1694 = vadd.f32 %v1687, %v1693
  %v1695 = vadd.f32 %v1688, %v1693
  %v1696 = vmul.f32 %v1694, %v13
  %v1697 = vmul.f32 %v1695, %v14
  %v1698 = vsel %vm15, %v1696, -inf
  %1699 = vmax.xlane.f32.xlu0 %v1698
  %v1700 = vpop.xlane.xlu0 %1699
  %v1701 = vsel %vm15, %v1697, -inf
  %1702 = vmax.xlane.f32.xlu0 %v1701
  %v1703 = vpop.xlane.xlu0 %1702
  %v1704 = vsub.f32 %v1696, %v1700
  %v1705 = vsub.f32 %v1697, %v1703
  %1707 = vset.pattern.permute.xlu0 0
  %1708 = vperm.xlu0 %1707, %v1704
  %v1709 = vpop.permute.xlu0 %1708
  %1712 = vset.pattern.permute.xlu0 0
  %1713 = vperm.xlu0 %1712, %v1705
  %v1714 = vpop.permute.xlu0 %1713
  %vm1716 = vcmp.ge.f32.partialorder %v1709, %v1704
  %vm1717 = vcmp.ge.f32.partialorder %v1714, %v1705
  %v1718 = vsel %vm1716, 1, 0
  %v1719 = vsel %vm1717, 1, 0
  %v1720 = vcvt.s32.f32 %v1718
  %v1721 = vcvt.s32.f32 %v1719
  %v1722 = vadd.f32 %v1720, 0.0
  %v1723 = vadd.f32 %v1721, 0.0
  %v1724 = vmul.f32 %v1720, %v1709
  %v1725 = vmul.f32 %v1721, %v1714
  %v1726 = vadd.f32 %v1724, 0.0
  %v1727 = vadd.f32 %v1725, 0.0
  %1728 = vset.pattern.permute.xlu0 1
  %1729 = vperm.xlu0 %1728, %v1704
  %v1730 = vpop.permute.xlu0 %1729
  %1732 = vset.pattern.permute.xlu0 1
  %1733 = vperm.xlu0 %1732, %v1705
  %v1734 = vpop.permute.xlu0 %1733
  %vm1736 = vcmp.ge.f32.partialorder %v1730, %v1704
  %vm1737 = vcmp.ge.f32.partialorder %v1734, %v1705
  %v1738 = vsel %vm1736, 1, 0
  %v1739 = vsel %vm1737, 1, 0
  %v1740 = vcvt.s32.f32 %v1738
  %v1741 = vcvt.s32.f32 %v1739
  %v1742 = vadd.f32 %v1722, %v1740
  %v1743 = vadd.f32 %v1723, %v1741
  %v1744 = vmul.f32 %v1740, %v1730
  %v1745 = vmul.f32 %v1741, %v1734
  %v1746 = vadd.f32 %v1726, %v1744
  %v1747 = vadd.f32 %v1727, %v1745
  %1748 = vset.pattern.permute.xlu0 2
  %1749 = vperm.xlu0 %1748, %v1704
  %v1750 = vpop.permute.xlu0 %1749
  %1752 = vset.pattern.permute.xlu0 2
  %1753 = vperm.xlu0 %1752, %v1705
  %v1754 = vpop.permute.xlu0 %1753
  %vm1756 = vcmp.ge.f32.partialorder %v1750, %v1704
  %vm1757 = vcmp.ge.f32.partialorder %v1754, %v1705
  %v1758 = vsel %vm1756, 1, 0
  %v1759 = vsel %vm1757, 1, 0
  %v1760 = vcvt.s32.f32 %v1758
  %v1761 = vcvt.s32.f32 %v1759
  %v1762 = vadd.f32 %v1742, %v1760
  %v1763 = vadd.f32 %v1743, %v1761
  %v1764 = vmul.f32 %v1760, %v1750
  %v1765 = vmul.f32 %v1761, %v1754
  %v1766 = vadd.f32 %v1746, %v1764
  %v1767 = vadd.f32 %v1747, %v1765
  %1768 = vset.pattern.permute.xlu0 3
  %1769 = vperm.xlu0 %1768, %v1704
  %v1770 = vpop.permute.xlu0 %1769
  %1772 = vset.pattern.permute.xlu0 3
  %1773 = vperm.xlu0 %1772, %v1705
  %v1774 = vpop.permute.xlu0 %1773
  %vm1776 = vcmp.ge.f32.partialorder %v1770, %v1704
  %vm1777 = vcmp.ge.f32.partialorder %v1774, %v1705
  %v1778 = vsel %vm1776, 1, 0
  %v1779 = vsel %vm1777, 1, 0
  %v1780 = vcvt.s32.f32 %v1778
  %v1781 = vcvt.s32.f32 %v1779
  %v1782 = vadd.f32 %v1762, %v1780
  %v1783 = vadd.f32 %v1763, %v1781
  %v1784 = vmul.f32 %v1780, %v1770
  %v1785 = vmul.f32 %v1781, %v1774
  %v1786 = vadd.f32 %v1766, %v1784
  %v1787 = vadd.f32 %v1767, %v1785
  %1788 = vset.pattern.permute.xlu0 4
  %1789 = vperm.xlu0 %1788, %v1704
  %v1790 = vpop.permute.xlu0 %1789
  %1792 = vset.pattern.permute.xlu0 4
  %1793 = vperm.xlu0 %1792, %v1705
  %v1794 = vpop.permute.xlu0 %1793
  %vm1796 = vcmp.ge.f32.partialorder %v1790, %v1704
  %vm1797 = vcmp.ge.f32.partialorder %v1794, %v1705
  %v1798 = vsel %vm1796, 1, 0
  %v1799 = vsel %vm1797, 1, 0
  %v1800 = vcvt.s32.f32 %v1798
  %v1801 = vcvt.s32.f32 %v1799
  %v1802 = vadd.f32 %v1782, %v1800
  %v1803 = vadd.f32 %v1783, %v1801
  %v1804 = vmul.f32 %v1800, %v1790
  %v1805 = vmul.f32 %v1801, %v1794
  %v1806 = vadd.f32 %v1786, %v1804
  %v1807 = vadd.f32 %v1787, %v1805
  %1808 = vset.pattern.permute.xlu0 5
  %1809 = vperm.xlu0 %1808, %v1704
  %v1810 = vpop.permute.xlu0 %1809
  %1812 = vset.pattern.permute.xlu0 5
  %1813 = vperm.xlu0 %1812, %v1705
  %v1814 = vpop.permute.xlu0 %1813
  %vm1816 = vcmp.ge.f32.partialorder %v1810, %v1704
  %vm1817 = vcmp.ge.f32.partialorder %v1814, %v1705
  %v1818 = vsel %vm1816, 1, 0
  %v1819 = vsel %vm1817, 1, 0
  %v1820 = vcvt.s32.f32 %v1818
  %v1821 = vcvt.s32.f32 %v1819
  %v1822 = vadd.f32 %v1802, %v1820
  %v1823 = vadd.f32 %v1803, %v1821
  %v1824 = vmul.f32 %v1820, %v1810
  %v1825 = vmul.f32 %v1821, %v1814
  %v1826 = vadd.f32 %v1806, %v1824
  %v1827 = vadd.f32 %v1807, %v1825
  %v1828 = vmul.f32 %v1822, %v1704
  %v1829 = vmul.f32 %v1823, %v1705
  %v1830 = vsub.f32 %v1826, 1.0
  %v1831 = vsub.f32 %v1827, 1.0
  %vm1832 = vcmp.gt.f32.partialorder %v1828, %v1830
  %vm1833 = vcmp.gt.f32.partialorder %v1829, %v1831
  %v1834 = vsel %vm1832, 1, 0
  %v1835 = vsel %vm1833, 1, 0
  %v1836 = vcvt.s32.f32 %v1834
  %v1837 = vcvt.s32.f32 %v1835
  %v1838 = vsel %vm15, %v1836, 0.0
  %1839 = vadd.xlane.f32.xlu0 %v1838
  %v1840 = vpop.xlane.xlu0 %1839
  %v1841 = vsel %vm15, %v1837, 0.0
  %1842 = vadd.xlane.f32.xlu0 %v1841
  %v1843 = vpop.xlane.xlu0 %1842
  %v1844 = vmul.f32 %v1836, %v1704
  %v1845 = vmul.f32 %v1837, %v1705
  %v1846 = vsel %vm15, %v1844, 0.0
  %1847 = vadd.xlane.f32.xlu0 %v1846
  %v1848 = vpop.xlane.xlu0 %1847
  %v1849 = vsel %vm15, %v1845, 0.0
  %1850 = vadd.xlane.f32.xlu0 %v1849
  %v1851 = vpop.xlane.xlu0 %1850
  %v1852 = vsub.f32 %v1848, 1.0
  %v1853 = vsub.f32 %v1851, 1.0
  %v1854 = vrcp.pop %v1840
  %v1855 = vmul.f32 %v1852, %v1854
  %v1856 = vrcp.pop %v1843
  %v1857 = vmul.f32 %v1853, %v1856
  %v1858 = vsub.f32 %v1704, %v1855
  %v1859 = vsub.f32 %v1705, %v1857
  %v1860 = vmax.f32 %v1858, 0.0
  %v1861 = vmax.f32 %v1859, 0.0
  %v1862 = vsub.f32 0.0, %v1860
  %v1863 = vsub.f32 0.0, %v1861
  %v1864 = vadd.f32 %v1860, 1e-10
  %v1865 = vadd.f32 %v1861, 1e-10
  %v1866 = vlog2.pop %v1864
  %v1867 = vmul.f32 %v1866, 0.6931472
  %v1868 = vlog2.pop %v1865
  %v1869 = vmul.f32 %v1868, 0.6931472
  %v1870 = vmul.f32 %v1862, %v1867
  %v1871 = vmul.f32 %v1863, %v1869
  %v1872 = vsel %vm15, %v1870, 0.0
  %1873 = vadd.xlane.f32.xlu0 %v1872
  %v1874 = vpop.xlane.xlu0 %1873
  %v1875 = vsel %vm15, %v1871, 0.0
  %1876 = vadd.xlane.f32.xlu0 %v1875
  %v1877 = vpop.xlane.xlu0 %1876
  %v1878 = vadd.f32 %v1874, %v1877
  %v1879 = vrot.slane %v1878, 4
  %v1880 = vadd.f32 %v1878, %v1879
  %v1881 = vrot.slane %v1880, 2
  %v1882 = vadd.f32 %v1880, %v1881
  %v1883 = vrot.slane %v1882, 1
  %v1884 = vadd.f32 %v1882, %v1883
  %v1885 = vmul.f32 %v1884, 0.010416667
  %v1886 = vadd.f32 %v981, %v1885
  %v1887 = vmul.f32 %v57, %v1860
  %v1888 = vmul.f32 %v58, %v1861
  %v1890 = vsel %vm15, %v1887, 0
  %v1893 = vsel %vm15, %v1888, 0
  %1895 = vmatprep.subr.mxu0 0.0
  %1896 = vmatpush1.msra.mxu0 %v73
  %1897 = vmatprep.subr.mxu0 0.0
  %1898 = vmatpush1.msra.mxu0 0.0
  %1899 = vmatprep.subr.mxu0 0.0
  %1900 = vmatpush1.msra.mxu0 0.0
  %1901 = vmatprep.subr.mxu0 0.0
  %1902 = vmatpush1.msra.mxu0 0.0
  %1903 = vmatprep.subr.mxu0 0.0
  %1904 = vmatpush1.msra.mxu0 0.0
  %1905 = vmatprep.subr.mxu0 0.0
  %1906 = vmatpush1.msra.mxu0 0.0
  %1907 = vmatprep.subr.mxu0 0.0
  %1908 = vmatpush1.msra.mxu0 0.0
  %1909 = vmatprep.subr.mxu0 0.0
  %1910 = vmatpush1.msra.mxu0 0.0
  %1911 = vmatprep.subr.mxu0 0.0
  %1912 = vmatpush1.msra.mxu0 0.0
  %1913 = vmatprep.subr.mxu0 0.0
  %1914 = vmatpush1.msra.mxu0 0.0
  %1915 = vmatprep.subr.mxu0 0.0
  %1916 = vmatpush1.msra.mxu0 0.0
  %1917 = vmatprep.subr.mxu0 0.0
  %1918 = vmatpush1.msra.mxu0 0.0
  %1919 = vmatprep.subr.mxu0 0.0
  %1920 = vmatpush1.msra.mxu0 0.0
  %1921 = vmatprep.subr.mxu0 0.0
  %1922 = vmatpush1.msra.mxu0 0.0
  %1923 = vmatprep.subr.mxu0 0.0
  %1924 = vmatpush1.msra.mxu0 0.0
  %1925 = vmatprep.subr.mxu0 0.0
  %1926 = vmatpush1.msra.mxu0 0.0
  %1927 = vmatprep.subr.mxu0 0.0
  %1928 = vmatpush1.msra.mxu0 0.0
  %1929 = vmatprep.subr.mxu0 0.0
  %1930 = vmatpush1.msra.mxu0 0.0
  %1931 = vmatprep.subr.mxu0 0.0
  %1932 = vmatpush1.msra.mxu0 0.0
  %1933 = vmatprep.subr.mxu0 0.0
  %1934 = vmatpush1.msra.mxu0 0.0
  %1935 = vmatprep.subr.mxu0 0.0
  %1936 = vmatpush1.msra.mxu0 0.0
  %1937 = vmatprep.subr.mxu0 0.0
  %1938 = vmatpush1.msra.mxu0 0.0
  %1939 = vmatprep.subr.mxu0 0.0
  %1940 = vmatpush1.msra.mxu0 0.0
  %1941 = vmatprep.subr.mxu0 0.0
  %1942 = vmatpush1.msra.mxu0 0.0
  %1943 = vmatprep.subr.mxu0 0.0
  %1944 = vmatpush1.msra.mxu0 0.0
  %1945 = vmatprep.subr.mxu0 0.0
  %1946 = vmatpush1.msra.mxu0 0.0
  %1947 = vmatprep.subr.mxu0 0.0
  %1948 = vmatpush1.msra.mxu0 0.0
  %1949 = vmatprep.subr.mxu0 0.0
  %1950 = vmatpush1.msra.mxu0 0.0
  %1951 = vmatprep.subr.mxu0 0.0
  %1952 = vmatpush1.msra.mxu0 0.0
  %1953 = vmatprep.subr.mxu0 0.0
  %1954 = vmatpush1.msra.mxu0 0.0
  %1955 = vmatprep.subr.mxu0 0.0
  %1956 = vmatpush1.msra.mxu0 0.0
  %1957 = vmatprep.subr.mxu0 0.0
  %1958 = vmatpush1.msra.mxu0 0.0
  %1959 = vmatprep.mubr.f32.mxu0 0.0
  %1960 = vmatmul.mubr.f32.gmra.mrb[0].mxu0 %v1890
  %v1961 = vpop.f32.mrb[0].mxu0
  %v1962 = vadd.f32 %v64, %v1961
  %v1963 = vpop.f32.mrb[0].mxu0
  %1964 = vmatprep.mubr.f32.mxu0 0.0
  %1965 = vmatmul.mubr.f32.gmra.mrb[0].mxu0 %v1893
  %v1966 = vpop.f32.mrb[0].mxu0
  %v1967 = vadd.f32 %v64, %v1966
  %v1968 = vpop.f32.mrb[0].mxu0
  %1969 = vdwg.mxu0
  %v1970 = vadd.f32 %v1962, %v1967
  %v1971 = vrot.slane %v1970, 4
  %v1972 = vadd.f32 %v1970, %v1971
  %v1973 = vrot.slane %v1972, 2
  %v1974 = vadd.f32 %v1972, %v1973
  %v1975 = vrot.slane %v1974, 1
  %v1976 = vadd.f32 %v1974, %v1975
  %v1977 = vmul.f32 %v1976, %v25
  %v1978 = vsub.f32 %v1962, %v1977
  %v1979 = vsub.f32 %v1967, %v1977
  %v1980 = vmul.f32 %v1978, %v1978
  %v1981 = vmul.f32 %v1979, %v1979
  %v1982 = vadd.f32 %v1980, %v1981
  %v1983 = vrot.slane %v1982, 4
  %v1984 = vadd.f32 %v1982, %v1983
  %v1985 = vrot.slane %v1984, 2
  %v1986 = vadd.f32 %v1984, %v1985
  %v1987 = vrot.slane %v1986, 1
  %v1988 = vadd.f32 %v1986, %v1987
  %v1989 = vmul.f32 %v1988, %v25
  %v1990 = vadd.f32 %v1989, 1e-05
  %v1991 = vrsqrt.pop %v1990
  %v1992 = vmul.f32 %v1978, %v1991
  %v1993 = vmul.f32 %v1979, %v1991
  %v1994 = vld [vmem:[%s1 + $0x2a0] sm:$0x1]
  %v1995 = vlaneseq
  %v1996 = vshrl.u32 %v1995, 7
  %v1997 = vsub.s32 0, %v1996
  %v1998 = vrot.slane %v1994, %v1997
  %v1999 = vmul.f32 %v1992, %v1998
  %v2000 = vmul.f32 %v1993, %v1998
  %v2001 = vld [vmem:[%s1 + $0x2a1] sm:$0x1]
  %v2002 = vlaneseq
  %v2003 = vshrl.u32 %v2002, 7
  %v2004 = vsub.s32 0, %v2003
  %v2005 = vrot.slane %v2001, %v2004
  %v2006 = vadd.f32 %v1999, %v2005
  %v2007 = vadd.f32 %v2000, %v2005
  %2008 = vrot.lane.b32.xlu0 %v2006, 64
  %v2009 = vpop.permute.xlu0 %2008
  %2010 = vrot.lane.b32.xlu0 %v2007, 64
  %v2011 = vpop.permute.xlu0 %2010
  %v2012 = vmul.f32 %v2009, 0.5
  %v2013 = vmul.f32 %v2011, 0.5
  %v2014 = vtanh.pop %v2012
  %v2015 = vtanh.pop %v2013
  %v2016 = vmul.f32 %v2014, 0.5
  %v2017 = vmul.f32 %v2015, 0.5
  %v2018 = vadd.f32 %v2016, 0.5
  %v2019 = vadd.f32 %v2017, 0.5
  %v2020 = vmul.f32 %v2006, %v2018
  %v2021 = vmul.f32 %v2007, %v2019
  %v2023 = vsel %vm215, %v2020, 0
  %v2026 = vsel %vm215, %v2021, 0
  %2028 = vmatprep.subr.mxu0 0.0
  %2029 = vmatpush1.msra.mxu0 %v202
  %2030 = vmatprep.subr.mxu0 0.0
  %2031 = vmatpush1.msra.mxu0 %v203
  %2032 = vmatprep.subr.mxu0 0.0
  %2033 = vmatpush1.msra.mxu0 %v204
  %2034 = vmatprep.subr.mxu0 0.0
  %2035 = vmatpush1.msra.mxu0 %v205
  %2036 = vmatprep.subr.mxu0 0.0
  %2037 = vmatpush1.msra.mxu0 %v206
  %2038 = vmatprep.subr.mxu0 0.0
  %2039 = vmatpush1.msra.mxu0 %v207
  %2040 = vmatprep.subr.mxu0 0.0
  %2041 = vmatpush1.msra.mxu0 %v208
  %2042 = vmatprep.subr.mxu0 0.0
  %2043 = vmatpush1.msra.mxu0 %v209
  %2044 = vmatprep.subr.mxu0 0.0
  %2045 = vmatpush1.msra.mxu0 0.0
  %2046 = vmatprep.subr.mxu0 0.0
  %2047 = vmatpush1.msra.mxu0 0.0
  %2048 = vmatprep.subr.mxu0 0.0
  %2049 = vmatpush1.msra.mxu0 0.0
  %2050 = vmatprep.subr.mxu0 0.0
  %2051 = vmatpush1.msra.mxu0 0.0
  %2052 = vmatprep.subr.mxu0 0.0
  %2053 = vmatpush1.msra.mxu0 0.0
  %2054 = vmatprep.subr.mxu0 0.0
  %2055 = vmatpush1.msra.mxu0 0.0
  %2056 = vmatprep.subr.mxu0 0.0
  %2057 = vmatpush1.msra.mxu0 0.0
  %2058 = vmatprep.subr.mxu0 0.0
  %2059 = vmatpush1.msra.mxu0 0.0
  %2060 = vmatprep.subr.mxu0 0.0
  %2061 = vmatpush1.msra.mxu0 0.0
  %2062 = vmatprep.subr.mxu0 0.0
  %2063 = vmatpush1.msra.mxu0 0.0
  %2064 = vmatprep.subr.mxu0 0.0
  %2065 = vmatpush1.msra.mxu0 0.0
  %2066 = vmatprep.subr.mxu0 0.0
  %2067 = vmatpush1.msra.mxu0 0.0
  %2068 = vmatprep.subr.mxu0 0.0
  %2069 = vmatpush1.msra.mxu0 0.0
  %2070 = vmatprep.subr.mxu0 0.0
  %2071 = vmatpush1.msra.mxu0 0.0
  %2072 = vmatprep.subr.mxu0 0.0
  %2073 = vmatpush1.msra.mxu0 0.0
  %2074 = vmatprep.subr.mxu0 0.0
  %2075 = vmatpush1.msra.mxu0 0.0
  %2076 = vmatprep.subr.mxu0 0.0
  %2077 = vmatpush1.msra.mxu0 0.0
  %2078 = vmatprep.subr.mxu0 0.0
  %2079 = vmatpush1.msra.mxu0 0.0
  %2080 = vmatprep.subr.mxu0 0.0
  %2081 = vmatpush1.msra.mxu0 0.0
  %2082 = vmatprep.subr.mxu0 0.0
  %2083 = vmatpush1.msra.mxu0 0.0
  %2084 = vmatprep.subr.mxu0 0.0
  %2085 = vmatpush1.msra.mxu0 0.0
  %2086 = vmatprep.subr.mxu0 0.0
  %2087 = vmatpush1.msra.mxu0 0.0
  %2088 = vmatprep.subr.mxu0 0.0
  %2089 = vmatpush1.msra.mxu0 0.0
  %2090 = vmatprep.subr.mxu0 0.0
  %2091 = vmatpush1.msra.mxu0 0.0
  %2092 = vmatprep.mubr.f32.mxu0 0.0
  %2093 = vmatmul.mubr.f32.gmra.mrb[0].mxu0 %v2023
  %v2094 = vpop.f32.mrb[0].mxu0
  %v2095 = vadd.f32 %v214, %v2094
  %v2096 = vpop.f32.mrb[0].mxu0
  %2097 = vmatprep.mubr.f32.mxu0 0.0
  %2098 = vmatmul.mubr.f32.gmra.mrb[0].mxu0 %v2026
  %v2099 = vpop.f32.mrb[0].mxu0
  %v2100 = vadd.f32 %v214, %v2099
  %v2101 = vpop.f32.mrb[0].mxu0
  %2102 = vdwg.mxu0
  %v2103 = vadd.f32 %v2095, %v2100
  %v2104 = vrot.slane %v2103, 4
  %v2105 = vadd.f32 %v2103, %v2104
  %v2106 = vrot.slane %v2105, 2
  %v2107 = vadd.f32 %v2105, %v2106
  %v2108 = vrot.slane %v2107, 1
  %v2109 = vadd.f32 %v2107, %v2108
  %v2110 = vmul.f32 %v2109, %v25
  %v2111 = vsub.f32 %v2095, %v2110
  %v2112 = vsub.f32 %v2100, %v2110
  %v2113 = vmul.f32 %v2111, %v2111
  %v2114 = vmul.f32 %v2112, %v2112
  %v2115 = vadd.f32 %v2113, %v2114
  %v2116 = vrot.slane %v2115, 4
  %v2117 = vadd.f32 %v2115, %v2116
  %v2118 = vrot.slane %v2117, 2
  %v2119 = vadd.f32 %v2117, %v2118
  %v2120 = vrot.slane %v2119, 1
  %v2121 = vadd.f32 %v2119, %v2120
  %v2122 = vmul.f32 %v2121, %v25
  %v2123 = vadd.f32 %v2122, 1e-05
  %v2124 = vrsqrt.pop %v2123
  %v2125 = vmul.f32 %v2111, %v2124
  %v2126 = vmul.f32 %v2112, %v2124
  %v2127 = vld [vmem:[%s1 + $0x2a2] sm:$0x1]
  %v2128 = vlaneseq
  %v2129 = vshrl.u32 %v2128, 7
  %v2130 = vsub.s32 0, %v2129
  %v2131 = vrot.slane %v2127, %v2130
  %v2132 = vmul.f32 %v2125, %v2131
  %v2133 = vmul.f32 %v2126, %v2131
  %v2134 = vld [vmem:[%s1 + $0x2a3] sm:$0x1]
  %v2135 = vlaneseq
  %v2136 = vshrl.u32 %v2135, 7
  %v2137 = vsub.s32 0, %v2136
  %v2138 = vrot.slane %v2134, %v2137
  %v2139 = vadd.f32 %v2132, %v2138
  %v2140 = vadd.f32 %v2133, %v2138
  %2141 = vrot.lane.b32.xlu0 %v2139, 64
  %v2142 = vpop.permute.xlu0 %2141
  %2143 = vrot.lane.b32.xlu0 %v2140, 64
  %v2144 = vpop.permute.xlu0 %2143
  %v2145 = vmul.f32 %v2142, 0.5
  %v2146 = vmul.f32 %v2144, 0.5
  %v2147 = vtanh.pop %v2145
  %v2148 = vtanh.pop %v2146
  %v2149 = vmul.f32 %v2147, 0.5
  %v2150 = vmul.f32 %v2148, 0.5
  %v2151 = vadd.f32 %v2149, 0.5
  %v2152 = vadd.f32 %v2150, 0.5
  %v2153 = vmul.f32 %v2139, %v2151
  %v2154 = vmul.f32 %v2140, %v2152
  %v2155 = vadd.f32 %v2020, %v2153
  %v2156 = vadd.f32 %v2021, %v2154
  %v2157 = vmul.f32 %v2155, 0.70710677
  %v2158 = vmul.f32 %v2156, 0.70710677
  %v2159 = vld [vmem:[%s1 + $0x148] sm:$0xff]
  %v2160 = vld [vmem:[%s1 + $0x150] sm:$0xff]
  %v2161 = vld [vmem:[%s1 + $0x158] sm:$0xff]
  %v2162 = vld [vmem:[%s1 + $0x160] sm:$0xff]
  %v2163 = vld [vmem:[%s1 + $0x168] sm:$0xff]
  %v2164 = vld [vmem:[%s1 + $0x170] sm:$0xff]
  %v2165 = vld [vmem:[%s1 + $0x178] sm:$0xff]
  %v2166 = vld [vmem:[%s1 + $0x180] sm:$0xff]
  %v2167 = vld [vmem:[%s1 + $0x2a4] sm:$0x1]
  %v2168 = vlaneseq
  %v2169 = vshrl.u32 %v2168, 7
  %v2170 = vsub.s32 0, %v2169
  %v2171 = vrot.slane %v2167, %v2170
  %v2173 = vsel %vm215, %v2157, 0
  %v2176 = vsel %vm215, %v2158, 0
  %2178 = vmatprep.subr.mxu0 0.0
  %2179 = vmatpush1.msra.mxu0 %v2159
  %2180 = vmatprep.subr.mxu0 0.0
  %2181 = vmatpush1.msra.mxu0 %v2160
  %2182 = vmatprep.subr.mxu0 0.0
  %2183 = vmatpush1.msra.mxu0 %v2161
  %2184 = vmatprep.subr.mxu0 0.0
  %2185 = vmatpush1.msra.mxu0 %v2162
  %2186 = vmatprep.subr.mxu0 0.0
  %2187 = vmatpush1.msra.mxu0 %v2163
  %2188 = vmatprep.subr.mxu0 0.0
  %2189 = vmatpush1.msra.mxu0 %v2164
  %2190 = vmatprep.subr.mxu0 0.0
  %2191 = vmatpush1.msra.mxu0 %v2165
  %2192 = vmatprep.subr.mxu0 0.0
  %2193 = vmatpush1.msra.mxu0 %v2166
  %2194 = vmatprep.subr.mxu0 0.0
  %2195 = vmatpush1.msra.mxu0 0.0
  %2196 = vmatprep.subr.mxu0 0.0
  %2197 = vmatpush1.msra.mxu0 0.0
  %2198 = vmatprep.subr.mxu0 0.0
  %2199 = vmatpush1.msra.mxu0 0.0
  %2200 = vmatprep.subr.mxu0 0.0
  %2201 = vmatpush1.msra.mxu0 0.0
  %2202 = vmatprep.subr.mxu0 0.0
  %2203 = vmatpush1.msra.mxu0 0.0
  %2204 = vmatprep.subr.mxu0 0.0
  %2205 = vmatpush1.msra.mxu0 0.0
  %2206 = vmatprep.subr.mxu0 0.0
  %2207 = vmatpush1.msra.mxu0 0.0
  %2208 = vmatprep.subr.mxu0 0.0
  %2209 = vmatpush1.msra.mxu0 0.0
  %2210 = vmatprep.subr.mxu0 0.0
  %2211 = vmatpush1.msra.mxu0 0.0
  %2212 = vmatprep.subr.mxu0 0.0
  %2213 = vmatpush1.msra.mxu0 0.0
  %2214 = vmatprep.subr.mxu0 0.0
  %2215 = vmatpush1.msra.mxu0 0.0
  %2216 = vmatprep.subr.mxu0 0.0
  %2217 = vmatpush1.msra.mxu0 0.0
  %2218 = vmatprep.subr.mxu0 0.0
  %2219 = vmatpush1.msra.mxu0 0.0
  %2220 = vmatprep.subr.mxu0 0.0
  %2221 = vmatpush1.msra.mxu0 0.0
  %2222 = vmatprep.subr.mxu0 0.0
  %2223 = vmatpush1.msra.mxu0 0.0
  %2224 = vmatprep.subr.mxu0 0.0
  %2225 = vmatpush1.msra.mxu0 0.0
  %2226 = vmatprep.subr.mxu0 0.0
  %2227 = vmatpush1.msra.mxu0 0.0
  %2228 = vmatprep.subr.mxu0 0.0
  %2229 = vmatpush1.msra.mxu0 0.0
  %2230 = vmatprep.subr.mxu0 0.0
  %2231 = vmatpush1.msra.mxu0 0.0
  %2232 = vmatprep.subr.mxu0 0.0
  %2233 = vmatpush1.msra.mxu0 0.0
  %2234 = vmatprep.subr.mxu0 0.0
  %2235 = vmatpush1.msra.mxu0 0.0
  %2236 = vmatprep.subr.mxu0 0.0
  %2237 = vmatpush1.msra.mxu0 0.0
  %2238 = vmatprep.subr.mxu0 0.0
  %2239 = vmatpush1.msra.mxu0 0.0
  %2240 = vmatprep.subr.mxu0 0.0
  %2241 = vmatpush1.msra.mxu0 0.0
  %2242 = vmatprep.mubr.f32.mxu0 0.0
  %2243 = vmatmul.mubr.f32.gmra.mrb[0].mxu0 %v2173
  %v2244 = vpop.f32.mrb[0].mxu0
  %v2245 = vadd.f32 %v2171, %v2244
  %v2246 = vpop.f32.mrb[0].mxu0
  %2247 = vmatprep.mubr.f32.mxu0 0.0
  %2248 = vmatmul.mubr.f32.gmra.mrb[0].mxu0 %v2176
  %v2249 = vpop.f32.mrb[0].mxu0
  %v2250 = vadd.f32 %v2171, %v2249
  %v2251 = vpop.f32.mrb[0].mxu0
  %2252 = vdwg.mxu0
  %v2253 = vadd.f32 %v2245, %v2250
  %v2254 = vrot.slane %v2253, 4
  %v2255 = vadd.f32 %v2253, %v2254
  %v2256 = vrot.slane %v2255, 2
  %v2257 = vadd.f32 %v2255, %v2256
  %v2258 = vrot.slane %v2257, 1
  %v2259 = vadd.f32 %v2257, %v2258
  %v2260 = vmul.f32 %v2259, %v25
  %v2261 = vsub.f32 %v2245, %v2260
  %v2262 = vsub.f32 %v2250, %v2260
  %v2263 = vmul.f32 %v2261, %v2261
  %v2264 = vmul.f32 %v2262, %v2262
  %v2265 = vadd.f32 %v2263, %v2264
  %v2266 = vrot.slane %v2265, 4
  %v2267 = vadd.f32 %v2265, %v2266
  %v2268 = vrot.slane %v2267, 2
  %v2269 = vadd.f32 %v2267, %v2268
  %v2270 = vrot.slane %v2269, 1
  %v2271 = vadd.f32 %v2269, %v2270
  %v2272 = vmul.f32 %v2271, %v25
  %v2273 = vadd.f32 %v2272, 1e-05
  %v2274 = vrsqrt.pop %v2273
  %v2275 = vmul.f32 %v2261, %v2274
  %v2276 = vmul.f32 %v2262, %v2274
  %v2277 = vld [vmem:[%s1 + $0x2a5] sm:$0x1]
  %v2278 = vlaneseq
  %v2279 = vshrl.u32 %v2278, 7
  %v2280 = vsub.s32 0, %v2279
  %v2281 = vrot.slane %v2277, %v2280
  %v2282 = vmul.f32 %v2275, %v2281
  %v2283 = vmul.f32 %v2276, %v2281
  %v2284 = vld [vmem:[%s1 + $0x2a6] sm:$0x1]
  %v2285 = vlaneseq
  %v2286 = vshrl.u32 %v2285, 7
  %v2287 = vsub.s32 0, %v2286
  %v2288 = vrot.slane %v2284, %v2287
  %v2289 = vadd.f32 %v2282, %v2288
  %v2290 = vadd.f32 %v2283, %v2288
  %2291 = vrot.lane.b32.xlu0 %v2289, 64
  %v2292 = vpop.permute.xlu0 %2291
  %2293 = vrot.lane.b32.xlu0 %v2290, 64
  %v2294 = vpop.permute.xlu0 %2293
  %v2295 = vmul.f32 %v2292, 0.5
  %v2296 = vmul.f32 %v2294, 0.5
  %v2297 = vtanh.pop %v2295
  %v2298 = vtanh.pop %v2296
  %v2299 = vmul.f32 %v2297, 0.5
  %v2300 = vmul.f32 %v2298, 0.5
  %v2301 = vadd.f32 %v2299, 0.5
  %v2302 = vadd.f32 %v2300, 0.5
  %v2303 = vmul.f32 %v2289, %v2301
  %v2304 = vmul.f32 %v2290, %v2302
  %v2305 = vadd.f32 %v2157, %v2303
  %v2306 = vadd.f32 %v2158, %v2304
  %v2307 = vmul.f32 %v2305, 0.70710677
  %v2308 = vmul.f32 %v2306, 0.70710677
  %v2309 = vld [vmem:[%s1 + $0x188] sm:$0xff]
  %v2310 = vld [vmem:[%s1 + $0x190] sm:$0xff]
  %v2311 = vld [vmem:[%s1 + $0x198] sm:$0xff]
  %v2312 = vld [vmem:[%s1 + $0x1a0] sm:$0xff]
  %v2313 = vld [vmem:[%s1 + $0x1a8] sm:$0xff]
  %v2314 = vld [vmem:[%s1 + $0x1b0] sm:$0xff]
  %v2315 = vld [vmem:[%s1 + $0x1b8] sm:$0xff]
  %v2316 = vld [vmem:[%s1 + $0x1c0] sm:$0xff]
  %v2317 = vld [vmem:[%s1 + $0x2a7] sm:$0x1]
  %v2318 = vlaneseq
  %v2319 = vshrl.u32 %v2318, 7
  %v2320 = vsub.s32 0, %v2319
  %v2321 = vrot.slane %v2317, %v2320
  %v2323 = vsel %vm215, %v2307, 0
  %v2326 = vsel %vm215, %v2308, 0
  %2328 = vmatprep.subr.mxu0 0.0
  %2329 = vmatpush1.msra.mxu0 %v2309
  %2330 = vmatprep.subr.mxu0 0.0
  %2331 = vmatpush1.msra.mxu0 %v2310
  %2332 = vmatprep.subr.mxu0 0.0
  %2333 = vmatpush1.msra.mxu0 %v2311
  %2334 = vmatprep.subr.mxu0 0.0
  %2335 = vmatpush1.msra.mxu0 %v2312
  %2336 = vmatprep.subr.mxu0 0.0
  %2337 = vmatpush1.msra.mxu0 %v2313
  %2338 = vmatprep.subr.mxu0 0.0
  %2339 = vmatpush1.msra.mxu0 %v2314
  %2340 = vmatprep.subr.mxu0 0.0
  %2341 = vmatpush1.msra.mxu0 %v2315
  %2342 = vmatprep.subr.mxu0 0.0
  %2343 = vmatpush1.msra.mxu0 %v2316
  %2344 = vmatprep.subr.mxu0 0.0
  %2345 = vmatpush1.msra.mxu0 0.0
  %2346 = vmatprep.subr.mxu0 0.0
  %2347 = vmatpush1.msra.mxu0 0.0
  %2348 = vmatprep.subr.mxu0 0.0
  %2349 = vmatpush1.msra.mxu0 0.0
  %2350 = vmatprep.subr.mxu0 0.0
  %2351 = vmatpush1.msra.mxu0 0.0
  %2352 = vmatprep.subr.mxu0 0.0
  %2353 = vmatpush1.msra.mxu0 0.0
  %2354 = vmatprep.subr.mxu0 0.0
  %2355 = vmatpush1.msra.mxu0 0.0
  %2356 = vmatprep.subr.mxu0 0.0
  %2357 = vmatpush1.msra.mxu0 0.0
  %2358 = vmatprep.subr.mxu0 0.0
  %2359 = vmatpush1.msra.mxu0 0.0
  %2360 = vmatprep.subr.mxu0 0.0
  %2361 = vmatpush1.msra.mxu0 0.0
  %2362 = vmatprep.subr.mxu0 0.0
  %2363 = vmatpush1.msra.mxu0 0.0
  %2364 = vmatprep.subr.mxu0 0.0
  %2365 = vmatpush1.msra.mxu0 0.0
  %2366 = vmatprep.subr.mxu0 0.0
  %2367 = vmatpush1.msra.mxu0 0.0
  %2368 = vmatprep.subr.mxu0 0.0
  %2369 = vmatpush1.msra.mxu0 0.0
  %2370 = vmatprep.subr.mxu0 0.0
  %2371 = vmatpush1.msra.mxu0 0.0
  %2372 = vmatprep.subr.mxu0 0.0
  %2373 = vmatpush1.msra.mxu0 0.0
  %2374 = vmatprep.subr.mxu0 0.0
  %2375 = vmatpush1.msra.mxu0 0.0
  %2376 = vmatprep.subr.mxu0 0.0
  %2377 = vmatpush1.msra.mxu0 0.0
  %2378 = vmatprep.subr.mxu0 0.0
  %2379 = vmatpush1.msra.mxu0 0.0
  %2380 = vmatprep.subr.mxu0 0.0
  %2381 = vmatpush1.msra.mxu0 0.0
  %2382 = vmatprep.subr.mxu0 0.0
  %2383 = vmatpush1.msra.mxu0 0.0
  %2384 = vmatprep.subr.mxu0 0.0
  %2385 = vmatpush1.msra.mxu0 0.0
  %2386 = vmatprep.subr.mxu0 0.0
  %2387 = vmatpush1.msra.mxu0 0.0
  %2388 = vmatprep.subr.mxu0 0.0
  %2389 = vmatpush1.msra.mxu0 0.0
  %2390 = vmatprep.subr.mxu0 0.0
  %2391 = vmatpush1.msra.mxu0 0.0
  %2392 = vmatprep.mubr.f32.mxu0 0.0
  %2393 = vmatmul.mubr.f32.gmra.mrb[0].mxu0 %v2323
  %v2394 = vpop.f32.mrb[0].mxu0
  %v2395 = vadd.f32 %v2321, %v2394
  %v2396 = vpop.f32.mrb[0].mxu0
  %2397 = vmatprep.mubr.f32.mxu0 0.0
  %2398 = vmatmul.mubr.f32.gmra.mrb[0].mxu0 %v2326
  %v2399 = vpop.f32.mrb[0].mxu0
  %v2400 = vadd.f32 %v2321, %v2399
  %v2401 = vpop.f32.mrb[0].mxu0
  %2402 = vdwg.mxu0
  %v2403 = vadd.f32 %v2395, %v2400
  %v2404 = vrot.slane %v2403, 4
  %v2405 = vadd.f32 %v2403, %v2404
  %v2406 = vrot.slane %v2405, 2
  %v2407 = vadd.f32 %v2405, %v2406
  %v2408 = vrot.slane %v2407, 1
  %v2409 = vadd.f32 %v2407, %v2408
  %v2410 = vmul.f32 %v2409, %v25
  %v2411 = vsub.f32 %v2395, %v2410
  %v2412 = vsub.f32 %v2400, %v2410
  %v2413 = vmul.f32 %v2411, %v2411
  %v2414 = vmul.f32 %v2412, %v2412
  %v2415 = vadd.f32 %v2413, %v2414
  %v2416 = vrot.slane %v2415, 4
  %v2417 = vadd.f32 %v2415, %v2416
  %v2418 = vrot.slane %v2417, 2
  %v2419 = vadd.f32 %v2417, %v2418
  %v2420 = vrot.slane %v2419, 1
  %v2421 = vadd.f32 %v2419, %v2420
  %v2422 = vmul.f32 %v2421, %v25
  %v2423 = vadd.f32 %v2422, 1e-05
  %v2424 = vrsqrt.pop %v2423
  %v2425 = vmul.f32 %v2411, %v2424
  %v2426 = vmul.f32 %v2412, %v2424
  %v2427 = vld [vmem:[%s1 + $0x2a8] sm:$0x1]
  %v2428 = vlaneseq
  %v2429 = vshrl.u32 %v2428, 7
  %v2430 = vsub.s32 0, %v2429
  %v2431 = vrot.slane %v2427, %v2430
  %v2432 = vmul.f32 %v2425, %v2431
  %v2433 = vmul.f32 %v2426, %v2431
  %v2434 = vld [vmem:[%s1 + $0x2a9] sm:$0x1]
  %v2435 = vlaneseq
  %v2436 = vshrl.u32 %v2435, 7
  %v2437 = vsub.s32 0, %v2436
  %v2438 = vrot.slane %v2434, %v2437
  %v2439 = vadd.f32 %v2432, %v2438
  %v2440 = vadd.f32 %v2433, %v2438
  %2441 = vrot.lane.b32.xlu0 %v2439, 64
  %v2442 = vpop.permute.xlu0 %2441
  %2443 = vrot.lane.b32.xlu0 %v2440, 64
  %v2444 = vpop.permute.xlu0 %2443
  %v2445 = vmul.f32 %v2442, 0.5
  %v2446 = vmul.f32 %v2444, 0.5
  %v2447 = vtanh.pop %v2445
  %v2448 = vtanh.pop %v2446
  %v2449 = vmul.f32 %v2447, 0.5
  %v2450 = vmul.f32 %v2448, 0.5
  %v2451 = vadd.f32 %v2449, 0.5
  %v2452 = vadd.f32 %v2450, 0.5
  %v2453 = vmul.f32 %v2439, %v2451
  %v2454 = vmul.f32 %v2440, %v2452
  %v2455 = vadd.f32 %v2307, %v2453
  %v2456 = vadd.f32 %v2308, %v2454
  %v2457 = vmul.f32 %v2455, 0.70710677
  %v2458 = vmul.f32 %v2456, 0.70710677
  %v2459 = vmax.f32 %v2457, 0.0
  %v2460 = vmax.f32 %v2458, 0.0
  %v2461 = vadd.f32 %v1556, %v2459
  %v2462 = vadd.f32 %v1557, %v2460
  %v2463 = vld [vmem:[%s1 + $0x248] sm:$0xff]
  %v2464 = vld [vmem:[%s1 + $0x250] sm:$0xff]
  %v2465 = vld [vmem:[%s1 + $0x258] sm:$0xff]
  %v2466 = vld [vmem:[%s1 + $0x260] sm:$0xff]
  %v2467 = vld [vmem:[%s1 + $0x268] sm:$0xff]
  %v2468 = vld [vmem:[%s1 + $0x270] sm:$0xff]
  %v2469 = vld [vmem:[%s1 + $0x278] sm:$0xff]
  %v2470 = vld [vmem:[%s1 + $0x280] sm:$0xff]
  %v2471 = vld [vmem:[%s1 + $0x2b0] sm:$0x1]
  %v2472 = vlaneseq
  %v2473 = vshrl.u32 %v2472, 7
  %v2474 = vsub.s32 0, %v2473
  %v2475 = vrot.slane %v2471, %v2474
  %v2477 = vsel %vm215, %v2461, 0
  %v2480 = vsel %vm215, %v2462, 0
  %2482 = vmatprep.subr.mxu0 0.0
  %2483 = vmatpush1.msra.mxu0 %v2463
  %2484 = vmatprep.subr.mxu0 0.0
  %2485 = vmatpush1.msra.mxu0 %v2464
  %2486 = vmatprep.subr.mxu0 0.0
  %2487 = vmatpush1.msra.mxu0 %v2465
  %2488 = vmatprep.subr.mxu0 0.0
  %2489 = vmatpush1.msra.mxu0 %v2466
  %2490 = vmatprep.subr.mxu0 0.0
  %2491 = vmatpush1.msra.mxu0 %v2467
  %2492 = vmatprep.subr.mxu0 0.0
  %2493 = vmatpush1.msra.mxu0 %v2468
  %2494 = vmatprep.subr.mxu0 0.0
  %2495 = vmatpush1.msra.mxu0 %v2469
  %2496 = vmatprep.subr.mxu0 0.0
  %2497 = vmatpush1.msra.mxu0 %v2470
  %2498 = vmatprep.subr.mxu0 0.0
  %2499 = vmatpush1.msra.mxu0 0.0
  %2500 = vmatprep.subr.mxu0 0.0
  %2501 = vmatpush1.msra.mxu0 0.0
  %2502 = vmatprep.subr.mxu0 0.0
  %2503 = vmatpush1.msra.mxu0 0.0
  %2504 = vmatprep.subr.mxu0 0.0
  %2505 = vmatpush1.msra.mxu0 0.0
  %2506 = vmatprep.subr.mxu0 0.0
  %2507 = vmatpush1.msra.mxu0 0.0
  %2508 = vmatprep.subr.mxu0 0.0
  %2509 = vmatpush1.msra.mxu0 0.0
  %2510 = vmatprep.subr.mxu0 0.0
  %2511 = vmatpush1.msra.mxu0 0.0
  %2512 = vmatprep.subr.mxu0 0.0
  %2513 = vmatpush1.msra.mxu0 0.0
  %2514 = vmatprep.subr.mxu0 0.0
  %2515 = vmatpush1.msra.mxu0 0.0
  %2516 = vmatprep.subr.mxu0 0.0
  %2517 = vmatpush1.msra.mxu0 0.0
  %2518 = vmatprep.subr.mxu0 0.0
  %2519 = vmatpush1.msra.mxu0 0.0
  %2520 = vmatprep.subr.mxu0 0.0
  %2521 = vmatpush1.msra.mxu0 0.0
  %2522 = vmatprep.subr.mxu0 0.0
  %2523 = vmatpush1.msra.mxu0 0.0
  %2524 = vmatprep.subr.mxu0 0.0
  %2525 = vmatpush1.msra.mxu0 0.0
  %2526 = vmatprep.subr.mxu0 0.0
  %2527 = vmatpush1.msra.mxu0 0.0
  %2528 = vmatprep.subr.mxu0 0.0
  %2529 = vmatpush1.msra.mxu0 0.0
  %2530 = vmatprep.subr.mxu0 0.0
  %2531 = vmatpush1.msra.mxu0 0.0
  %2532 = vmatprep.subr.mxu0 0.0
  %2533 = vmatpush1.msra.mxu0 0.0
  %2534 = vmatprep.subr.mxu0 0.0
  %2535 = vmatpush1.msra.mxu0 0.0
  %2536 = vmatprep.subr.mxu0 0.0
  %2537 = vmatpush1.msra.mxu0 0.0
  %2538 = vmatprep.subr.mxu0 0.0
  %2539 = vmatpush1.msra.mxu0 0.0
  %2540 = vmatprep.subr.mxu0 0.0
  %2541 = vmatpush1.msra.mxu0 0.0
  %2542 = vmatprep.subr.mxu0 0.0
  %2543 = vmatpush1.msra.mxu0 0.0
  %2544 = vmatprep.subr.mxu0 0.0
  %2545 = vmatpush1.msra.mxu0 0.0
  %2546 = vmatprep.mubr.f32.mxu0 0.0
  %2547 = vmatmul.mubr.f32.gmra.mrb[0].mxu0 %v2477
  %v2548 = vpop.f32.mrb[0].mxu0
  %v2549 = vadd.f32 %v2475, %v2548
  %v2550 = vpop.f32.mrb[0].mxu0
  %2551 = vmatprep.mubr.f32.mxu0 0.0
  %2552 = vmatmul.mubr.f32.gmra.mrb[0].mxu0 %v2480
  %v2553 = vpop.f32.mrb[0].mxu0
  %v2554 = vadd.f32 %v2475, %v2553
  %v2555 = vpop.f32.mrb[0].mxu0
  %2556 = vdwg.mxu0
  %2557 = vst [vmem:[%s2] sm:$0xff] %v2549
  %2558 = vst [vmem:[%s2 + $0x8] sm:$0xff] %v2554
  %2559 = vst [vmem:[%s2 + $0x10] sm:$0xff] %v1886
  // Predicated region
  $region10: #{tabnet_pallas.1} parent=0 // pred_check
    _
  $region11: #{tabnet_pallas.1} parent=0 // pred_check_branch
    %2561 = sbr.rel (0) target = $region13
  $region12: #{tabnet_pallas.1} parent=0 // pred_region
    _
  $region13: #{tabnet_pallas.1} parent=0 // pred_fallthru
    _
  // Predicated region
  $region14: #{tabnet_pallas.1} parent=0 // pred_check
    _
  $region15: #{tabnet_pallas.1} parent=0 // pred_check_branch
    %2563 = sbr.rel (0) target = $region17
  $region16: #{tabnet_pallas.1} parent=0 // pred_region
    _
  $region17: #{tabnet_pallas.1} parent=0 // pred_fallthru
    _

</llo_original>
